<compile_context>
chip_gen: v6e
topology: v6e:2x2x1
jax: 0.10.0
libtpu: 0.0.40
codegen_flags: <defaults>
</compile_context>

<pallas_src>
import functools

import jax
import jax.numpy as jnp
from jax.experimental import pallas as pl
from jax.experimental.pallas import tpu as pltpu


def _round_up(x, m):
    return ((x + m - 1) // m) * m


# ---------------------------------------------------------------------------
# Plain-JAX setup (mirrors TPSGridGen.__init__; runs once, not in the hot path)
# ---------------------------------------------------------------------------
def compute_partial_repr(input_points, control_points):
    """U(r) = 0.5 * r^2 * log(r^2), with NaN (r==0) filled with 0."""
    diff = input_points[:, None, :] - control_points[None, :, :]          # (N, M, 3)
    dist = jnp.sum(diff * diff, axis=-1)                                  # (N, M)
    safe = jnp.where(dist == 0.0, 1.0, dist)
    rep = 0.5 * dist * jnp.log(safe)
    return jnp.where(dist == 0.0, 0.0, rep).astype(jnp.float32)


def build_tps_buffers(target_depth, target_height, target_width,
                      target_control_points, a_dtype=jnp.float32):
    """Returns (A_T (N_pad, HW_pad), HW, inverse_kernel, target_repr).

    A_T is the transposed, fully padded fused matrix:
        A = target_coordinate_repr @ inverse_kernel[:, :N]      (HW, N)
    The column slice [:, :N] is valid ONLY because the forward pass pads Y with
    4 rows of exact zeros (padding_matrix), so the last 4 columns of the inverse
    kernel never contribute.  Do not change Y's padding without revisiting this.
    Contraction dim is padded to a multiple of 8, HW to a multiple of 128.
    """
    N = target_control_points.shape[0]
    cp = target_control_points.astype(jnp.float32)

    # forward kernel (N+4, N+4) and its inverse (one-time, plain JAX / XLA).
    ctl_repr = compute_partial_repr(cp, cp)                               # (N, N)
    fk = jnp.zeros((N + 4, N + 4), dtype=jnp.float32)
    fk = fk.at[:N, :N].set(ctl_repr)
    fk = fk.at[:N, N].set(1.0)          # column -4
    fk = fk.at[N, :N].set(1.0)          # row -4
    fk = fk.at[:N, N + 1:].set(cp)      # last 3 columns
    fk = fk.at[N + 1:, :N].set(cp.T)    # last 3 rows
    inverse_kernel = jnp.linalg.inv(fk)                                   # (N+4, N+4)

    # target coordinates, row order = itertools.product(range(D), range(H), range(W))
    D, H, W = target_depth, target_height, target_width
    HW = D * H * W
    # Guard degenerate size-1 dims (the original module divides by zero -> NaN).
    dd, dh, dw = max(D - 1, 1), max(H - 1, 1), max(W - 1, 1)
    z = jnp.arange(D, dtype=jnp.float32)
    y = jnp.arange(H, dtype=jnp.float32)
    x = jnp.arange(W, dtype=jnp.float32)
    Z = jnp.broadcast_to(z[:, None, None], (D, H, W)).reshape(-1)
    Y = jnp.broadcast_to(y[None, :, None], (D, H, W)).reshape(-1)
    X = jnp.broadcast_to(x[None, None, :], (D, H, W)).reshape(-1)
    Z = Z * 2.0 / dd - 1.0
    Y = Y * 2.0 / dh - 1.0
    X = X * 2.0 / dw - 1.0
    target_coordinate = jnp.stack([X, Y, Z], axis=1)                      # (HW, 3)

    tgt_partial = compute_partial_repr(target_coordinate, cp)             # (HW, N)
    target_repr = jnp.concatenate(
        [tgt_partial, jnp.ones((HW, 1), jnp.float32), target_coordinate],
        axis=1)                                                           # (HW, N+4)

    # Fuse the constant chain offline:  A = target_repr @ inverse_kernel[:, :N]
    A = jnp.matmul(target_repr, inverse_kernel[:, :N],
                   precision=jax.lax.Precision.HIGHEST)                   # (HW, N)

    # Transpose so HW is the lane axis; pad contraction dim to a multiple of 8
    # and HW to a multiple of 128 (lane-dense, always-pipelined kernel).
    N_pad = _round_up(max(N, 8), 8)                                       # 27 -> 32
    HW_pad = _round_up(HW, 128)
    A_T = jnp.zeros((N_pad, HW_pad), dtype=jnp.float32)
    A_T = A_T.at[:N, :HW].set(A.T).astype(a_dtype)                        # (N_pad, HW_pad)
    return A_T, HW, inverse_kernel, target_repr


# ---------------------------------------------------------------------------
# Pallas kernel: one constant-weight matmul with HW on the lane axis.
#   scp_ref : (rows_pad, N_pad)     resident across all grid steps
#   a_ref   : (N_pad, TILE_HW)      streamed per HW tile (the only big stream)
#   out_ref : (rows_pad, TILE_HW)
# ---------------------------------------------------------------------------
def _tps_kernel(scp_ref, a_ref, out_ref):
    a = a_ref[...]
    out_ref[...] = jnp.dot(
        scp_ref[...].astype(a.dtype), a,
        preferred_element_type=jnp.float32,
        precision=jax.lax.Precision.HIGHEST)


def _pick_hw_tile(hw_pad, n_pad, rows_pad, a_bytes,
                  vmem_budget_bytes=44 << 20, max_tile=65536):
    """VMEM-budgeted, lane-aligned tile that evenly divides hw_pad.

    Per lane column the pipeline keeps ~3 A buffers + 2 output buffers resident;
    the 44 MiB budget fits comfortably inside v7x's 64 MiB VMEM and leaves large
    headroom on v5e/v6e.  The tile is additionally capped at hw_pad // 2 (when
    possible) so the grid always has >= 2 tiles and v7x's second TensorCore
    gets work.
    """
    per_lane = 3 * n_pad * a_bytes + 2 * rows_pad * 4
    budget_tile = max(128, (vmem_budget_bytes // per_lane) // 128 * 128)
    cap = min(budget_tile, max_tile, hw_pad)
    if hw_pad >= 256:
        cap = min(cap, max(128, (hw_pad // 2) // 128 * 128))
    t = max(128, cap)
    # largest multiple of 128 <= cap that evenly divides hw_pad
    while t > 128 and hw_pad % t != 0:
        t -= 128
    return t


@functools.partial(jax.jit, static_argnames=("hw", "channel_major"))
def tps_grid_gen_forward(source_control_points, a_t, hw, channel_major=False):
    """source_control_points: (B, N, 3), a_t: (N_pad, HW_pad), hw: true HW.

    Returns (B, HW, 3) by default (matches the PyTorch module); with
    channel_major=True returns (B, 3, HW) and skips the lane-sparse transpose.
    """
    B, N, _ = source_control_points.shape
    n_pad, hw_pad = a_t.shape
    a_bytes = jnp.dtype(a_t.dtype).itemsize

    # (B, N, 3) -> (rows_pad, N_pad): batch folded into the matmul free dim,
    # both dims zero-padded to sublane-aligned sizes (unmasked stores/loads).
    rows = 3 * B
    rows_pad = _round_up(rows, 8)
    scp_t = jnp.transpose(source_control_points, (0, 2, 1)).reshape(rows, N)
    scp_t = jnp.pad(scp_t.astype(jnp.float32),
                    ((0, rows_pad - rows), (0, n_pad - N)))

    tile_hw = _pick_hw_tile(hw_pad, n_pad, rows_pad, a_bytes)
    num_tiles = hw_pad // tile_hw

    # Streamed constant A^T spec; deepen the pipeline when the grid is long.
    a_index_map = lambda h: (0, h)
    if num_tiles >= 3:
        try:
            a_spec = pl.BlockSpec((n_pad, tile_hw), a_index_map,
                                  pipeline_mode=pl.Buffered(3))
        except TypeError:  # older jax without pipeline_mode on BlockSpec
            a_spec = pl.BlockSpec((n_pad, tile_hw), a_index_map)
    else:
        a_spec = pl.BlockSpec((n_pad, tile_hw), a_index_map)

    # VMEM limit from the actual tile bytes (floor 32 MiB, ceiling 60 MiB to
    # stay under v7x's 64 MiB physical VMEM).
    a_tile_bytes = n_pad * tile_hw * a_bytes
    out_tile_bytes = rows_pad * tile_hw * 4
    needed = (3 * a_tile_bytes + 2 * out_tile_bytes
              + 2 * rows_pad * n_pad * 4 + (1 << 20))
    vmem_limit = int(min(max(needed, 32 << 20), 60 << 20))

    out_t = pl.pallas_call(
        _tps_kernel,
        out_shape=jax.ShapeDtypeStruct((rows_pad, hw_pad), jnp.float32),
        grid_spec=pltpu.PrefetchScalarGridSpec(
            num_scalar_prefetch=0,
            grid=(num_tiles,),
            in_specs=[
                pl.BlockSpec((rows_pad, n_pad), lambda h: (0, 0)),  # resident pts
                a_spec,                                             # streamed A^T
            ],
            out_specs=pl.BlockSpec((rows_pad, tile_hw), lambda h: (0, h)),
        ),
        compiler_params=pltpu.CompilerParams(
            dimension_semantics=("parallel",),   # HW tiles shard across TCs (v7x)
            vmem_limit_bytes=vmem_limit,
        ),
    )(scp_t, a_t)

    out_t = out_t[:rows, :hw]             # drop sublane / lane padding
    out_cm = out_t.reshape(B, 3, hw)      # (B, 3, HW) channel-major (lane-dense)
    if channel_major:
        return out_cm
    # (B, HW, 3) to match the original module; skip via channel_major=True if
    # the consumer (e.g. grid_sample) can take channel-major directly.
    return jnp.transpose(out_cm, (0, 2, 1))


# ---------------------------------------------------------------------------
# Main
# ---------------------------------------------------------------------------
if __name__ == "__main__":
    # Small, deterministic problem: 16x16x16 target volume, 3x3x3 control grid.
    target_depth, target_height, target_width = 16, 16, 16
    grid_1d = jnp.linspace(-1.0, 1.0, 3)
    zz, yy, xx = jnp.meshgrid(grid_1d, grid_1d, grid_1d, indexing="ij")
    target_control_points = jnp.stack(
        [xx.reshape(-1), yy.reshape(-1), zz.reshape(-1)], axis=1
    ).astype(jnp.float32)                                                 # (27, 3)
    N = target_control_points.shape[0]

    a_t, HW, inverse_kernel, target_repr = build_tps_buffers(
        target_depth, target_height, target_width, target_control_points)

    # Deterministic "source" control points: target grid + small perturbation.
    key = jax.random.PRNGKey(0)
    batch_size = 2
    noise = 0.05 * jax.random.normal(key, (batch_size, N, 3), dtype=jnp.float32)
    source_control_points = target_control_points[None, :, :] + noise     # (2, 27, 3)

    out = tps_grid_gen_forward(source_control_points, a_t, hw=HW)
    out = jax.block_until_ready(out)

    # Pure-JAX reference of the ORIGINAL forward pass (two matmuls, zero-padded Y).
    Y = jnp.concatenate(
        [source_control_points, jnp.zeros((batch_size, 4, 3), jnp.float32)], axis=1)
    mapping_ref = jnp.einsum("pq,bqc->bpc", inverse_kernel, Y,
                             precision=jax.lax.Precision.HIGHEST)
    ref = jnp.einsum("hp,bpc->bhc", target_repr, mapping_ref,
                     precision=jax.lax.Precision.HIGHEST)

    assert out.shape == (batch_size, HW, 3)
    assert jnp.allclose(out, ref, atol=1e-4, rtol=1e-4)

    print("KERNEL_OK")
</pallas_src>

<mosaic_0001>
module attributes {stable_mosaic.version = 11 : i64} {
  func.func @_tps_kernel(%arg0: i32, %arg1: memref<8x32xf32, #tpu.memory_space<vmem>>, %arg2: memref<32x2048xf32, #tpu.memory_space<vmem>>, %arg3: memref<8x2048xf32, #tpu.memory_space<vmem>>) attributes {dimension_semantics = [#tpu.dimension_semantics<parallel>], iteration_bounds = array<i64: 2>, scalar_prefetch = 0 : i64, scratch_operands = 0 : i64, tpu.core_type = #tpu.core_type<tc>, window_params = [{pipeline_mode = #tpu.pipeline_mode<synchronous>, transform_indices = @transform_0, window_bounds = array<i64: 8, 32>}, {transform_indices = @transform_1, window_bounds = array<i64: 32, 2048>}, {transform_indices = @transform_2, window_bounds = array<i64: 8, 2048>}]} {
    %c0 = arith.constant 0 : index
    %c0_0 = arith.constant 0 : index
    %0 = vector.load %arg2[%c0, %c0_0] : memref<32x2048xf32, #tpu.memory_space<vmem>>, vector<32x2048xf32>
    %c0_1 = arith.constant 0 : index
    %c0_2 = arith.constant 0 : index
    %1 = vector.load %arg1[%c0_1, %c0_2] : memref<8x32xf32, #tpu.memory_space<vmem>>, vector<8x32xf32>
    %cst = arith.constant dense<0.000000e+00> : vector<8x2048xf32>
    %2 = tpu.matmul %1, %0, %cst {dimension_numbers = #tpu.dot_dimension_numbers<[1], [0], [0], [1], [0, 0, 1, 1], [], []>, precision = #tpu.contract_precision<fp32>} : vector<8x32xf32>, vector<32x2048xf32>, vector<8x2048xf32> -> vector<8x2048xf32>
    %c0_3 = arith.constant 0 : index
    %c0_4 = arith.constant 0 : index
    %3 = vector.load %arg3[%c0_3, %c0_4] : memref<8x2048xf32, #tpu.memory_space<vmem>>, vector<8x2048xf32>
    tpu.vector_store %arg3[%c0_3, %c0_4], %2 {strides = array<i32>} : memref<8x2048xf32, #tpu.memory_space<vmem>>, vector<8x2048xf32>,
    return
  }
  func.func @transform_0(%arg0: i32) -> (i32, i32) {
    %c0_i32 = arith.constant 0 : i32
    %c0_i32_0 = arith.constant 0 : i32
    %c0_i32_1 = arith.constant 0 : i32
    return %c0_i32, %c0_i32_0 : i32, i32
  }
  func.func @transform_1(%arg0: i32) -> (i32, i32) {
    %c0_i32 = arith.constant 0 : i32
    %c0_i32_0 = arith.constant 0 : i32
    return %c0_i32, %arg0 : i32, i32
  }
  func.func @transform_2(%arg0: i32) -> (i32, i32) {
    %c0_i32 = arith.constant 0 : i32
    %c0_i32_0 = arith.constant 0 : i32
    return %c0_i32, %arg0 : i32, i32
  }
}

</mosaic_0001>

<llo_original>
// kernel: tps_grid_gen_forward.1
$region0: #{tps_grid_gen_forward.1}
  #allocation0 [shape = 'u32[]', space=smem, size = 0x4, offset = 0x4, fixed_abs, tag = 'smem constant byte address 0x4 - core index']
  #allocation1 [shape = 'u32[144,128]{1,0:T(1,128)}', space=vmem, size = 0x12000, scoped, tag = 'internal scratch']
  %s0 = inlined_call_operand.vmem [shape: f32[8,32], index: 0, kind: input, shape index: {}]
  %s1 = inlined_call_operand.hbm [shape: f32[32,4096], index: 1, kind: input, shape index: {}]
  %s2 = inlined_call_operand.vmem [shape: f32[8,4096], index: 2, kind: output, shape index: {}]
  %s3 = sld [smem:[#allocation0]]
  $region45: #{tps_grid_gen_forward.1} parent=0
    _
  %s5 = ssub.s32 1, %s3
  %s6 = scalar_select 0, %s5, %s3
  $region1: #{tps_grid_gen_forward.1} parent=0
    #allocation2 [shape = 'u8[524288]{0}', space=vmem, size = 0x80000, scoped, tag = 'input window, operand 1']
    #allocation3 [shape = 's32[2]{0}', space=sflag, size = 0x8, scoped, tag = 'scoped memory for tps_grid_gen_forward.1']
    %7 = vsyncpa [#allocation3], 0
    %s8 = scalar_lea.sflag [#allocation3], 1
    %9 = vsyncpa %s8, 0
    loop: start=0, step=1, limit=4
    $region2: #{tps_grid_gen_forward.1} parent=1 // loop_pre_header
      _
    $region3: #{tps_grid_gen_forward.1} parent=1 // loop_header
      %s11 = sphi 0, %s15
      %p12 = scmp.ge.s32.totalorder %s11, 4
      %s19 = sphi 0, %s19
      %s21 = sphi 0, %s19
      %s22 = sphi 0, %s21
      %s36 = sphi 0, %s22
      %s42 = sphi 0, %s44
      %s45 = sphi 0, %s42
      %s46 = sphi 0, %s45
      %s62 = sphi 0, %s46
      %s68 = sphi 0, %s70
      %s71 = sphi 0, %s68
      %s72 = sphi 0, %s71
      %s88 = sphi 0, %s72
    $region4: #{tps_grid_gen_forward.1} parent=1 // loop_header_branch
      %14 = sbr.rel (%p12) target = $region8
    $region5: #{tps_grid_gen_forward.1} parent=1 // loop_body
      %s16 = ssub.s32 %s11, 1
      %s17 = ssub.s32 %s11, 2
      %s18 = sadd.s32 %s11, 1
      %s20 = sadd.s32 %s19, 1
      %p23 = scmp.eq.s32.totalorder %s11, 1
      %p24 = scmp.ne.s32.totalorder %s19, %s21
      %p25 = scmp.eq.s32.totalorder %s11, 0
      %p26 = por %p24, %p25
      %p27 = scmp.ne.s32.totalorder %s19, %s21
      %p28 = scmp.eq.s32.totalorder %s16, 1
      %p29 = por %p27, %p28
      %p30 = scmp.ne.s32.totalorder %s21, %s22
      %p31 = scmp.eq.s32.totalorder %s16, 0
      %p32 = por %p30, %p31
      %p33 = scmp.ne.s32.totalorder %s21, %s22
      %p34 = scmp.eq.s32.totalorder %s17, 1
      %p35 = por %p33, %p34
      %p37 = scmp.ne.s32.totalorder %s22, %s36
      %p38 = scmp.eq.s32.totalorder %s17, 0
      %p39 = por %p37, %p38
      %s40 = ssub.s32 %s11, %s18
      %p41 = scmp.eq.s32.totalorder %s40, 0
      %s43 = sadd.s32 %s42, 1
      %s44 = scalar_select %p41, %s42, %s43
      %p47 = pneg %p41
      %p48 = scmp.eq.s32.totalorder %s11, 1
      %p49 = por %p47, %p48
      %p50 = scmp.ne.s32.totalorder %s42, %s45
      %p51 = scmp.eq.s32.totalorder %s11, 0
      %p52 = por %p50, %p51
      %p53 = scmp.ne.s32.totalorder %s42, %s45
      %p54 = scmp.eq.s32.totalorder %s16, 1
      %p55 = por %p53, %p54
      %p56 = scmp.ne.s32.totalorder %s45, %s46
      %p57 = scmp.eq.s32.totalorder %s16, 0
      %p58 = por %p56, %p57
      %p59 = scmp.ne.s32.totalorder %s45, %s46
      %p60 = scmp.eq.s32.totalorder %s17, 1
      %p61 = por %p59, %p60
      %p63 = scmp.ne.s32.totalorder %s46, %s62
      %p64 = scmp.eq.s32.totalorder %s17, 0
      %p65 = por %p63, %p64
      %s66 = ssub.s32 %s11, %s18
      %p67 = scmp.eq.s32.totalorder %s66, 0
      %s69 = sadd.s32 %s68, 1
      %s70 = scalar_select %p67, %s68, %s69
      %p73 = pneg %p67
      %p74 = scmp.eq.s32.totalorder %s11, 1
      %p75 = por %p73, %p74
      %p76 = scmp.ne.s32.totalorder %s68, %s71
      %p77 = scmp.eq.s32.totalorder %s11, 0
      %p78 = por %p76, %p77
      %p79 = scmp.ne.s32.totalorder %s68, %s71
      %p80 = scmp.eq.s32.totalorder %s16, 1
      %p81 = por %p79, %p80
      %p82 = scmp.ne.s32.totalorder %s71, %s72
      %p83 = scmp.eq.s32.totalorder %s16, 0
      %p84 = por %p82, %p83
      %p85 = scmp.ne.s32.totalorder %s71, %s72
      %p86 = scmp.eq.s32.totalorder %s17, 1
      %p87 = por %p85, %p86
      %p89 = scmp.ne.s32.totalorder %s72, %s88
      %p90 = scmp.eq.s32.totalorder %s17, 0
      %p91 = por %p89, %p90
      %p92 = scmp.le.s32.totalorder 1, %s11
      %p93 = scmp.lt.s32.totalorder %s11, 3
      %p94 = pnand %p92, %p93
      %p95 = pneg %p94
      // Predicated region
      $region9: #{tps_grid_gen_forward.1} parent=5 // pred_check
        _
      $region10: #{tps_grid_gen_forward.1} parent=5 // pred_check_branch
        %97 = sbr.rel (%p94) target = $region12
      $region11: #{tps_grid_gen_forward.1} parent=5 // pred_region
        %s98 = ssub.s32 %s11, 1
        // Predicated region
        $region13: #{tps_grid_gen_forward.1} parent=11 // pred_check
          %p99 = pneg %p32
        $region14: #{tps_grid_gen_forward.1} parent=11 // pred_check_branch
          %101 = sbr.rel (%p99) target = $region16
        $region15: #{tps_grid_gen_forward.1} parent=11 // pred_region
          _
        $region16: #{tps_grid_gen_forward.1} parent=11 // pred_fallthru
          _
      $region12: #{tps_grid_gen_forward.1} parent=5 // pred_fallthru
        _
      %p102 = scmp.lt.s32.totalorder %s11, 2
      // Predicated region
      $region17: #{tps_grid_gen_forward.1} parent=5 // pred_check
        %p103 = pneg %p102
      $region18: #{tps_grid_gen_forward.1} parent=5 // pred_check_branch
        %105 = sbr.rel (%p103) target = $region20
      $region19: #{tps_grid_gen_forward.1} parent=5 // pred_region
        // Predicated region
        $region21: #{tps_grid_gen_forward.1} parent=19 // pred_check
          %p106 = pneg %p52
        $region22: #{tps_grid_gen_forward.1} parent=19 // pred_check_branch
          %108 = sbr.rel (%p106) target = $region24
        $region23: #{tps_grid_gen_forward.1} parent=19 // pred_region
          %s109 = sand.u32 %s42, 1
          %s110 = scalar_lea.sflag [#allocation3], %s109
          %s111 = sand.u32 %s42, 1
          %s112 = smul.addr %s111, 512
          %s113 = scalar_lea.vmem [#allocation2], %s112
          %s114 = smul.u32 16, %s11
          %s116 = ssub.s32 8192, 8192
          %117 = vsyncadd %s110, %s116
          %s118 = smul.addr %s114, 128
          %s119 = scalar_lea.hbm %s1, %s118
          %s120 = sshll.u32 %s113, 4
          %s121 = int_to_ptr.vmem [resolvable:$true] %s120
          %126 = dma.hbm_to_vmem [thread:$0]  %s119, 8192, %s121, %s110, 4096, 2048, 128
        $region24: #{tps_grid_gen_forward.1} parent=19 // pred_fallthru
          _
      $region20: #{tps_grid_gen_forward.1} parent=5 // pred_fallthru
        _
      %p127 = scmp.le.s32.totalorder 1, %s11
      %p128 = scmp.lt.s32.totalorder %s11, 3
      %p129 = pnand %p127, %p128
      %p130 = pneg %p129
      // Predicated region
      $region25: #{tps_grid_gen_forward.1} parent=5 // pred_check
        _
      $region26: #{tps_grid_gen_forward.1} parent=5 // pred_check_branch
        %132 = sbr.rel (%p129) target = $region28
      $region27: #{tps_grid_gen_forward.1} parent=5 // pred_region
        %s133 = ssub.s32 %s11, 1
        %s134 = sand.u32 %s45, 1
        %s135 = scalar_lea.sflag [#allocation3], %s134
        %s136 = sand.u32 %s45, 1
        %s137 = smul.addr %s136, 512
        %s138 = scalar_lea.vmem [#allocation2], %s137
        // Predicated region
        $region29: #{tps_grid_gen_forward.1} parent=27 // pred_check
          %p139 = pneg %p58
        $region30: #{tps_grid_gen_forward.1} parent=27 // pred_check_branch
          %141 = sbr.rel (%p139) target = $region32
        $region31: #{tps_grid_gen_forward.1} parent=27 // pred_region
          %142 = dma.done %s135, 8192
        $region32: #{tps_grid_gen_forward.1} parent=27 // pred_fallthru
          _
        %p143 = pneg %p32
        %p144 = pneg %p29
        %s145 = sand.u32 %s45, 1
        %s146 = scalar_lea.sflag [#allocation3], %s145
        %s147 = sand.u32 %s45, 1
        %s148 = smul.addr %s147, 512
        %s149 = scalar_lea.vmem [#allocation2], %s148
        %p150 = pneg %p58
        %p151 = pneg %p55
        %p152 = pneg %p84
        %p153 = pneg %p81
        %s154 = smul.u32 16, %s16
        %p155 = scmp.lt.s32.totalorder %s154, 31
        %s156 = scalar_select %p155, %s154, 31
        %s157 = smul.addr %s156, 8
        %s158 = scalar_lea.vmem %s2, %s157
        %s159 = smul.u32 16, %s16
        %s160 = smul.u32 16, %s16
        %p161 = scmp.lt.s32.totalorder %s160, 31
        %s162 = scalar_select %p161, %s160, 31
        %s163 = smul.addr %s162, 8
        %s164 = scalar_lea.vmem %s2, %s163
        %s165 = smul.u32 16, %s16
        %v166 = vld [vmem:[%s138] sm:$0xff]
        %v167 = vld [vmem:[%s138 + $0x8] sm:$0xff]
        %v168 = vld [vmem:[%s138 + $0x10] sm:$0xff]
        %v169 = vld [vmem:[%s138 + $0x18] sm:$0xff]
        %v170 = vld [vmem:[%s138 + $0x20] sm:$0xff]
        %v171 = vld [vmem:[%s138 + $0x28] sm:$0xff]
        %v172 = vld [vmem:[%s138 + $0x30] sm:$0xff]
        %v173 = vld [vmem:[%s138 + $0x38] sm:$0xff]
        %v174 = vld [vmem:[%s138 + $0x40] sm:$0xff]
        %v175 = vld [vmem:[%s138 + $0x48] sm:$0xff]
        %v176 = vld [vmem:[%s138 + $0x50] sm:$0xff]
        %v177 = vld [vmem:[%s138 + $0x58] sm:$0xff]
        %v178 = vld [vmem:[%s138 + $0x60] sm:$0xff]
        %v179 = vld [vmem:[%s138 + $0x68] sm:$0xff]
        %v180 = vld [vmem:[%s138 + $0x70] sm:$0xff]
        %v181 = vld [vmem:[%s138 + $0x78] sm:$0xff]
        %v182 = vld [vmem:[%s138 + $0x80] sm:$0xff]
        %v183 = vld [vmem:[%s138 + $0x88] sm:$0xff]
        %v184 = vld [vmem:[%s138 + $0x90] sm:$0xff]
        %v185 = vld [vmem:[%s138 + $0x98] sm:$0xff]
        %v186 = vld [vmem:[%s138 + $0xa0] sm:$0xff]
        %v187 = vld [vmem:[%s138 + $0xa8] sm:$0xff]
        %v188 = vld [vmem:[%s138 + $0xb0] sm:$0xff]
        %v189 = vld [vmem:[%s138 + $0xb8] sm:$0xff]
        %v190 = vld [vmem:[%s138 + $0xc0] sm:$0xff]
        %v191 = vld [vmem:[%s138 + $0xc8] sm:$0xff]
        %v192 = vld [vmem:[%s138 + $0xd0] sm:$0xff]
        %v193 = vld [vmem:[%s138 + $0xd8] sm:$0xff]
        %v194 = vld [vmem:[%s138 + $0xe0] sm:$0xff]
        %v195 = vld [vmem:[%s138 + $0xe8] sm:$0xff]
        %v196 = vld [vmem:[%s138 + $0xf0] sm:$0xff]
        %v197 = vld [vmem:[%s138 + $0xf8] sm:$0xff]
        %v198 = vld [vmem:[%s138 + $0x100] sm:$0xff]
        %v199 = vld [vmem:[%s138 + $0x108] sm:$0xff]
        %v200 = vld [vmem:[%s138 + $0x110] sm:$0xff]
        %v201 = vld [vmem:[%s138 + $0x118] sm:$0xff]
        %v202 = vld [vmem:[%s138 + $0x120] sm:$0xff]
        %v203 = vld [vmem:[%s138 + $0x128] sm:$0xff]
        %v204 = vld [vmem:[%s138 + $0x130] sm:$0xff]
        %v205 = vld [vmem:[%s138 + $0x138] sm:$0xff]
        %v206 = vld [vmem:[%s138 + $0x140] sm:$0xff]
        %v207 = vld [vmem:[%s138 + $0x148] sm:$0xff]
        %v208 = vld [vmem:[%s138 + $0x150] sm:$0xff]
        %v209 = vld [vmem:[%s138 + $0x158] sm:$0xff]
        %v210 = vld [vmem:[%s138 + $0x160] sm:$0xff]
        %v211 = vld [vmem:[%s138 + $0x168] sm:$0xff]
        %v212 = vld [vmem:[%s138 + $0x170] sm:$0xff]
        %v213 = vld [vmem:[%s138 + $0x178] sm:$0xff]
        %v214 = vld [vmem:[%s138 + $0x180] sm:$0xff]
        %v215 = vld [vmem:[%s138 + $0x188] sm:$0xff]
        %v216 = vld [vmem:[%s138 + $0x190] sm:$0xff]
        %v217 = vld [vmem:[%s138 + $0x198] sm:$0xff]
        %v218 = vld [vmem:[%s138 + $0x1a0] sm:$0xff]
        %v219 = vld [vmem:[%s138 + $0x1a8] sm:$0xff]
        %v220 = vld [vmem:[%s138 + $0x1b0] sm:$0xff]
        %v221 = vld [vmem:[%s138 + $0x1b8] sm:$0xff]
        %v222 = vld [vmem:[%s138 + $0x1c0] sm:$0xff]
        %v223 = vld [vmem:[%s138 + $0x1c8] sm:$0xff]
        %v224 = vld [vmem:[%s138 + $0x1d0] sm:$0xff]
        %v225 = vld [vmem:[%s138 + $0x1d8] sm:$0xff]
        %v226 = vld [vmem:[%s138 + $0x1e0] sm:$0xff]
        %v227 = vld [vmem:[%s138 + $0x1e8] sm:$0xff]
        %v228 = vld [vmem:[%s138 + $0x1f0] sm:$0xff]
        %v229 = vld [vmem:[%s138 + $0x1f8] sm:$0xff]
        %v230 = vld [vmem:[%s0] sm:$0xff]
        %vm231 = vcmask 261120
        %v233 = vsel %vm231, %v230, 0
        %235 = vmatprep.subr.mxu0 0.0
        %236 = vmatpush1.msra.mxu0 0.0
        %237 = vmatprep.subr.mxu0 0.0
        %238 = vmatpush1.msra.mxu0 0.0
        %239 = vmatprep.subr.mxu0 0.0
        %240 = vmatpush1.msra.mxu0 0.0
        %241 = vmatprep.subr.mxu0 0.0
        %242 = vmatpush1.msra.mxu0 0.0
        %243 = vmatprep.subr.mxu0 0.0
        %244 = vmatpush1.msra.mxu0 0.0
        %245 = vmatprep.subr.mxu0 0.0
        %246 = vmatpush1.msra.mxu0 0.0
        %247 = vmatprep.subr.mxu0 0.0
        %248 = vmatpush1.msra.mxu0 0.0
        %249 = vmatprep.subr.mxu0 0.0
        %250 = vmatpush1.msra.mxu0 0.0
        %251 = vmatprep.subr.mxu0 0.0
        %252 = vmatpush1.msra.mxu0 0.0
        %253 = vmatprep.subr.mxu0 0.0
        %254 = vmatpush1.msra.mxu0 0.0
        %255 = vmatprep.subr.mxu0 0.0
        %256 = vmatpush1.msra.mxu0 0.0
        %257 = vmatprep.subr.mxu0 0.0
        %258 = vmatpush1.msra.mxu0 0.0
        %v259 = vand.u32 %v215, 4294901760
        %260 = vmatprep.subr.mxu0 %v259
        %v261 = vand.u32 %v214, 4294901760
        %262 = vmatpush1.msra.mxu0 %v261
        %v263 = vand.u32 %v199, 4294901760
        %264 = vmatprep.subr.mxu0 %v263
        %v265 = vand.u32 %v198, 4294901760
        %266 = vmatpush1.msra.mxu0 %v265
        %v267 = vand.u32 %v183, 4294901760
        %268 = vmatprep.subr.mxu0 %v267
        %v269 = vand.u32 %v182, 4294901760
        %270 = vmatpush1.msra.mxu0 %v269
        %v271 = vand.u32 %v167, 4294901760
        %272 = vmatprep.subr.mxu0 %v271
        %v273 = vand.u32 %v166, 4294901760
        %274 = vmatpush1.msra.mxu0 %v273
        %275 = vmatprep.subr.mxu0 0.0
        %276 = vmatpush2.msra.mxu0 0.0
        %277 = vmatprep.subr.mxu0 0.0
        %278 = vmatpush2.msra.mxu0 0.0
        %279 = vmatprep.subr.mxu0 0.0
        %280 = vmatpush2.msra.mxu0 0.0
        %281 = vmatprep.subr.mxu0 0.0
        %282 = vmatpush2.msra.mxu0 0.0
        %283 = vmatprep.subr.mxu0 0.0
        %284 = vmatpush2.msra.mxu0 0.0
        %285 = vmatprep.subr.mxu0 0.0
        %286 = vmatpush2.msra.mxu0 0.0
        %287 = vmatprep.subr.mxu0 0.0
        %288 = vmatpush2.msra.mxu0 0.0
        %289 = vmatprep.subr.mxu0 0.0
        %290 = vmatpush2.msra.mxu0 0.0
        %291 = vmatprep.subr.mxu0 0.0
        %292 = vmatpush2.msra.mxu0 0.0
        %293 = vmatprep.subr.mxu0 0.0
        %294 = vmatpush2.msra.mxu0 0.0
        %295 = vmatprep.subr.mxu0 0.0
        %296 = vmatpush2.msra.mxu0 0.0
        %297 = vmatprep.subr.mxu0 0.0
        %298 = vmatpush2.msra.mxu0 0.0
        %299 = vmatprep.subr.mxu0 0.0
        %300 = vmatpush2.msra.mxu0 0.0
        %301 = vmatprep.subr.mxu0 0.0
        %302 = vmatpush2.msra.mxu0 0.0
        %303 = vmatprep.subr.mxu0 0.0
        %304 = vmatpush2.msra.mxu0 0.0
        %305 = vmatprep.subr.mxu0 0.0
        %306 = vmatpush2.msra.mxu0 0.0
        %307 = vmatprep.mubr.f32.mxu0 0.0
        %v308 = vand.u32 %v233, 4294901760
        %v309 = vsub.f32 %v233, %v308
        %v310 = vand.u32 %v309, 4294901760
        %v311 = vsub.f32 %v309, %v310
        %v312 = vand.u32 %v311, 4294901760
        %313 = vmatmul.mubr.f32.gmra.mxu0 %v312
        %v314 = vpop.f32.mrf.mxu0
        %v315 = vadd.f32 0.0, %v314
        %v316 = vpop.f32.mrf.mxu0
        %v317 = vadd.f32 0.0, %v316
        %318 = vdwg.mxu0
        %319 = vmatprep.subr.mxu0 0.0
        %320 = vmatpush1.msra.mxu0 0.0
        %321 = vmatprep.subr.mxu0 0.0
        %322 = vmatpush1.msra.mxu0 0.0
        %323 = vmatprep.subr.mxu0 0.0
        %324 = vmatpush1.msra.mxu0 0.0
        %325 = vmatprep.subr.mxu0 0.0
        %326 = vmatpush1.msra.mxu0 0.0
        %327 = vmatprep.subr.mxu0 0.0
        %328 = vmatpush1.msra.mxu0 0.0
        %329 = vmatprep.subr.mxu0 0.0
        %330 = vmatpush1.msra.mxu0 0.0
        %331 = vmatprep.subr.mxu0 0.0
        %332 = vmatpush1.msra.mxu0 0.0
        %333 = vmatprep.subr.mxu0 0.0
        %334 = vmatpush1.msra.mxu0 0.0
        %335 = vmatprep.subr.mxu0 0.0
        %336 = vmatpush1.msra.mxu0 0.0
        %337 = vmatprep.subr.mxu0 0.0
        %338 = vmatpush1.msra.mxu0 0.0
        %339 = vmatprep.subr.mxu0 0.0
        %340 = vmatpush1.msra.mxu0 0.0
        %341 = vmatprep.subr.mxu0 0.0
        %342 = vmatpush1.msra.mxu0 0.0
        %v343 = vand.u32 %v215, 4294901760
        %v344 = vsub.f32 %v215, %v343
        %v345 = vand.u32 %v344, 4294901760
        %v346 = vsub.f32 %v344, %v345
        %v347 = vand.u32 %v346, 4294901760
        %348 = vmatprep.subr.mxu0 %v347
        %v349 = vand.u32 %v214, 4294901760
        %v350 = vsub.f32 %v214, %v349
        %v351 = vand.u32 %v350, 4294901760
        %v352 = vsub.f32 %v350, %v351
        %v353 = vand.u32 %v352, 4294901760
        %354 = vmatpush1.msra.mxu0 %v353
        %v355 = vand.u32 %v199, 4294901760
        %v356 = vsub.f32 %v199, %v355
        %v357 = vand.u32 %v356, 4294901760
        %v358 = vsub.f32 %v356, %v357
        %v359 = vand.u32 %v358, 4294901760
        %360 = vmatprep.subr.mxu0 %v359
        %v361 = vand.u32 %v198, 4294901760
        %v362 = vsub.f32 %v198, %v361
        %v363 = vand.u32 %v362, 4294901760
        %v364 = vsub.f32 %v362, %v363
        %v365 = vand.u32 %v364, 4294901760
        %366 = vmatpush1.msra.mxu0 %v365
        %v367 = vand.u32 %v183, 4294901760
        %v368 = vsub.f32 %v183, %v367
        %v369 = vand.u32 %v368, 4294901760
        %v370 = vsub.f32 %v368, %v369
        %v371 = vand.u32 %v370, 4294901760
        %372 = vmatprep.subr.mxu0 %v371
        %v373 = vand.u32 %v182, 4294901760
        %v374 = vsub.f32 %v182, %v373
        %v375 = vand.u32 %v374, 4294901760
        %v376 = vsub.f32 %v374, %v375
        %v377 = vand.u32 %v376, 4294901760
        %378 = vmatpush1.msra.mxu0 %v377
        %v379 = vand.u32 %v167, 4294901760
        %v380 = vsub.f32 %v167, %v379
        %v381 = vand.u32 %v380, 4294901760
        %v382 = vsub.f32 %v380, %v381
        %v383 = vand.u32 %v382, 4294901760
        %384 = vmatprep.subr.mxu0 %v383
        %v385 = vand.u32 %v166, 4294901760
        %v386 = vsub.f32 %v166, %v385
        %v387 = vand.u32 %v386, 4294901760
        %v388 = vsub.f32 %v386, %v387
        %v389 = vand.u32 %v388, 4294901760
        %390 = vmatpush1.msra.mxu0 %v389
        %391 = vmatprep.subr.mxu0 0.0
        %392 = vmatpush2.msra.mxu0 0.0
        %393 = vmatprep.subr.mxu0 0.0
        %394 = vmatpush2.msra.mxu0 0.0
        %395 = vmatprep.subr.mxu0 0.0
        %396 = vmatpush2.msra.mxu0 0.0
        %397 = vmatprep.subr.mxu0 0.0
        %398 = vmatpush2.msra.mxu0 0.0
        %399 = vmatprep.subr.mxu0 0.0
        %400 = vmatpush2.msra.mxu0 0.0
        %401 = vmatprep.subr.mxu0 0.0
        %402 = vmatpush2.msra.mxu0 0.0
        %403 = vmatprep.subr.mxu0 0.0
        %404 = vmatpush2.msra.mxu0 0.0
        %405 = vmatprep.subr.mxu0 0.0
        %406 = vmatpush2.msra.mxu0 0.0
        %407 = vmatprep.subr.mxu0 0.0
        %408 = vmatpush2.msra.mxu0 0.0
        %409 = vmatprep.subr.mxu0 0.0
        %410 = vmatpush2.msra.mxu0 0.0
        %411 = vmatprep.subr.mxu0 0.0
        %412 = vmatpush2.msra.mxu0 0.0
        %413 = vmatprep.subr.mxu0 0.0
        %414 = vmatpush2.msra.mxu0 0.0
        %415 = vmatprep.subr.mxu0 0.0
        %416 = vmatpush2.msra.mxu0 0.0
        %417 = vmatprep.subr.mxu0 0.0
        %418 = vmatpush2.msra.mxu0 0.0
        %419 = vmatprep.subr.mxu0 0.0
        %420 = vmatpush2.msra.mxu0 0.0
        %421 = vmatprep.subr.mxu0 0.0
        %422 = vmatpush2.msra.mxu0 0.0
        %423 = vmatprep.mubr.f32.mxu0 0.0
        %v424 = vand.u32 %v233, 4294901760
        %425 = vmatmul.mubr.f32.gmra.mxu0 %v424
        %v426 = vpop.f32.mrf.mxu0
        %v427 = vadd.f32 %v315, %v426
        %v428 = vpop.f32.mrf.mxu0
        %v429 = vadd.f32 %v317, %v428
        %430 = vdwg.mxu0
        %431 = vmatprep.subr.mxu0 0.0
        %432 = vmatpush1.msra.mxu0 0.0
        %433 = vmatprep.subr.mxu0 0.0
        %434 = vmatpush1.msra.mxu0 0.0
        %435 = vmatprep.subr.mxu0 0.0
        %436 = vmatpush1.msra.mxu0 0.0
        %437 = vmatprep.subr.mxu0 0.0
        %438 = vmatpush1.msra.mxu0 0.0
        %439 = vmatprep.subr.mxu0 0.0
        %440 = vmatpush1.msra.mxu0 0.0
        %441 = vmatprep.subr.mxu0 0.0
        %442 = vmatpush1.msra.mxu0 0.0
        %443 = vmatprep.subr.mxu0 0.0
        %444 = vmatpush1.msra.mxu0 0.0
        %445 = vmatprep.subr.mxu0 0.0
        %446 = vmatpush1.msra.mxu0 0.0
        %447 = vmatprep.subr.mxu0 0.0
        %448 = vmatpush1.msra.mxu0 0.0
        %449 = vmatprep.subr.mxu0 0.0
        %450 = vmatpush1.msra.mxu0 0.0
        %451 = vmatprep.subr.mxu0 0.0
        %452 = vmatpush1.msra.mxu0 0.0
        %453 = vmatprep.subr.mxu0 0.0
        %454 = vmatpush1.msra.mxu0 0.0
        %v455 = vand.u32 %v215, 4294901760
        %v456 = vsub.f32 %v215, %v455
        %457 = vmatprep.subr.mxu0 %v456
        %v458 = vand.u32 %v214, 4294901760
        %v459 = vsub.f32 %v214, %v458
        %460 = vmatpush1.msra.mxu0 %v459
        %v461 = vand.u32 %v199, 4294901760
        %v462 = vsub.f32 %v199, %v461
        %463 = vmatprep.subr.mxu0 %v462
        %v464 = vand.u32 %v198, 4294901760
        %v465 = vsub.f32 %v198, %v464
        %466 = vmatpush1.msra.mxu0 %v465
        %v467 = vand.u32 %v183, 4294901760
        %v468 = vsub.f32 %v183, %v467
        %469 = vmatprep.subr.mxu0 %v468
        %v470 = vand.u32 %v182, 4294901760
        %v471 = vsub.f32 %v182, %v470
        %472 = vmatpush1.msra.mxu0 %v471
        %v473 = vand.u32 %v167, 4294901760
        %v474 = vsub.f32 %v167, %v473
        %475 = vmatprep.subr.mxu0 %v474
        %v476 = vand.u32 %v166, 4294901760
        %v477 = vsub.f32 %v166, %v476
        %478 = vmatpush1.msra.mxu0 %v477
        %479 = vmatprep.subr.mxu0 0.0
        %480 = vmatpush2.msra.mxu0 0.0
        %481 = vmatprep.subr.mxu0 0.0
        %482 = vmatpush2.msra.mxu0 0.0
        %483 = vmatprep.subr.mxu0 0.0
        %484 = vmatpush2.msra.mxu0 0.0
        %485 = vmatprep.subr.mxu0 0.0
        %486 = vmatpush2.msra.mxu0 0.0
        %487 = vmatprep.subr.mxu0 0.0
        %488 = vmatpush2.msra.mxu0 0.0
        %489 = vmatprep.subr.mxu0 0.0
        %490 = vmatpush2.msra.mxu0 0.0
        %491 = vmatprep.subr.mxu0 0.0
        %492 = vmatpush2.msra.mxu0 0.0
        %493 = vmatprep.subr.mxu0 0.0
        %494 = vmatpush2.msra.mxu0 0.0
        %495 = vmatprep.subr.mxu0 0.0
        %496 = vmatpush2.msra.mxu0 0.0
        %497 = vmatprep.subr.mxu0 0.0
        %498 = vmatpush2.msra.mxu0 0.0
        %499 = vmatprep.subr.mxu0 0.0
        %500 = vmatpush2.msra.mxu0 0.0
        %501 = vmatprep.subr.mxu0 0.0
        %502 = vmatpush2.msra.mxu0 0.0
        %503 = vmatprep.subr.mxu0 0.0
        %504 = vmatpush2.msra.mxu0 0.0
        %505 = vmatprep.subr.mxu0 0.0
        %506 = vmatpush2.msra.mxu0 0.0
        %507 = vmatprep.subr.mxu0 0.0
        %508 = vmatpush2.msra.mxu0 0.0
        %509 = vmatprep.subr.mxu0 0.0
        %510 = vmatpush2.msra.mxu0 0.0
        %511 = vmatprep.mubr.f32.mxu0 0.0
        %v512 = vand.u32 %v233, 4294901760
        %v513 = vsub.f32 %v233, %v512
        %514 = vmatmul.mubr.f32.gmra.mxu0 %v513
        %v515 = vpop.f32.mrf.mxu0
        %v516 = vadd.f32 %v427, %v515
        %v517 = vpop.f32.mrf.mxu0
        %v518 = vadd.f32 %v429, %v517
        %519 = vdwg.mxu0
        %520 = vmatprep.subr.mxu0 0.0
        %521 = vmatpush1.msra.mxu0 0.0
        %522 = vmatprep.subr.mxu0 0.0
        %523 = vmatpush1.msra.mxu0 0.0
        %524 = vmatprep.subr.mxu0 0.0
        %525 = vmatpush1.msra.mxu0 0.0
        %526 = vmatprep.subr.mxu0 0.0
        %527 = vmatpush1.msra.mxu0 0.0
        %528 = vmatprep.subr.mxu0 0.0
        %529 = vmatpush1.msra.mxu0 0.0
        %530 = vmatprep.subr.mxu0 0.0
        %531 = vmatpush1.msra.mxu0 0.0
        %532 = vmatprep.subr.mxu0 0.0
        %533 = vmatpush1.msra.mxu0 0.0
        %534 = vmatprep.subr.mxu0 0.0
        %535 = vmatpush1.msra.mxu0 0.0
        %536 = vmatprep.subr.mxu0 0.0
        %537 = vmatpush1.msra.mxu0 0.0
        %538 = vmatprep.subr.mxu0 0.0
        %539 = vmatpush1.msra.mxu0 0.0
        %540 = vmatprep.subr.mxu0 0.0
        %541 = vmatpush1.msra.mxu0 0.0
        %542 = vmatprep.subr.mxu0 0.0
        %543 = vmatpush1.msra.mxu0 0.0
        %v544 = vand.u32 %v215, 4294901760
        %545 = vmatprep.subr.mxu0 %v544
        %v546 = vand.u32 %v214, 4294901760
        %547 = vmatpush1.msra.mxu0 %v546
        %v548 = vand.u32 %v199, 4294901760
        %549 = vmatprep.subr.mxu0 %v548
        %v550 = vand.u32 %v198, 4294901760
        %551 = vmatpush1.msra.mxu0 %v550
        %v552 = vand.u32 %v183, 4294901760
        %553 = vmatprep.subr.mxu0 %v552
        %v554 = vand.u32 %v182, 4294901760
        %555 = vmatpush1.msra.mxu0 %v554
        %v556 = vand.u32 %v167, 4294901760
        %557 = vmatprep.subr.mxu0 %v556
        %v558 = vand.u32 %v166, 4294901760
        %559 = vmatpush1.msra.mxu0 %v558
        %560 = vmatprep.subr.mxu0 0.0
        %561 = vmatpush2.msra.mxu0 0.0
        %562 = vmatprep.subr.mxu0 0.0
        %563 = vmatpush2.msra.mxu0 0.0
        %564 = vmatprep.subr.mxu0 0.0
        %565 = vmatpush2.msra.mxu0 0.0
        %566 = vmatprep.subr.mxu0 0.0
        %567 = vmatpush2.msra.mxu0 0.0
        %568 = vmatprep.subr.mxu0 0.0
        %569 = vmatpush2.msra.mxu0 0.0
        %570 = vmatprep.subr.mxu0 0.0
        %571 = vmatpush2.msra.mxu0 0.0
        %572 = vmatprep.subr.mxu0 0.0
        %573 = vmatpush2.msra.mxu0 0.0
        %574 = vmatprep.subr.mxu0 0.0
        %575 = vmatpush2.msra.mxu0 0.0
        %576 = vmatprep.subr.mxu0 0.0
        %577 = vmatpush2.msra.mxu0 0.0
        %578 = vmatprep.subr.mxu0 0.0
        %579 = vmatpush2.msra.mxu0 0.0
        %580 = vmatprep.subr.mxu0 0.0
        %581 = vmatpush2.msra.mxu0 0.0
        %582 = vmatprep.subr.mxu0 0.0
        %583 = vmatpush2.msra.mxu0 0.0
        %584 = vmatprep.subr.mxu0 0.0
        %585 = vmatpush2.msra.mxu0 0.0
        %586 = vmatprep.subr.mxu0 0.0
        %587 = vmatpush2.msra.mxu0 0.0
        %588 = vmatprep.subr.mxu0 0.0
        %589 = vmatpush2.msra.mxu0 0.0
        %590 = vmatprep.subr.mxu0 0.0
        %591 = vmatpush2.msra.mxu0 0.0
        %592 = vmatprep.mubr.f32.mxu0 0.0
        %v593 = vand.u32 %v233, 4294901760
        %v594 = vsub.f32 %v233, %v593
        %v595 = vand.u32 %v594, 4294901760
        %596 = vmatmul.mubr.f32.gmra.mxu0 %v595
        %v597 = vpop.f32.mrf.mxu0
        %v598 = vadd.f32 %v516, %v597
        %v599 = vpop.f32.mrf.mxu0
        %v600 = vadd.f32 %v518, %v599
        %601 = vdwg.mxu0
        %602 = vmatprep.subr.mxu0 0.0
        %603 = vmatpush1.msra.mxu0 0.0
        %604 = vmatprep.subr.mxu0 0.0
        %605 = vmatpush1.msra.mxu0 0.0
        %606 = vmatprep.subr.mxu0 0.0
        %607 = vmatpush1.msra.mxu0 0.0
        %608 = vmatprep.subr.mxu0 0.0
        %609 = vmatpush1.msra.mxu0 0.0
        %610 = vmatprep.subr.mxu0 0.0
        %611 = vmatpush1.msra.mxu0 0.0
        %612 = vmatprep.subr.mxu0 0.0
        %613 = vmatpush1.msra.mxu0 0.0
        %614 = vmatprep.subr.mxu0 0.0
        %615 = vmatpush1.msra.mxu0 0.0
        %616 = vmatprep.subr.mxu0 0.0
        %617 = vmatpush1.msra.mxu0 0.0
        %618 = vmatprep.subr.mxu0 0.0
        %619 = vmatpush1.msra.mxu0 0.0
        %620 = vmatprep.subr.mxu0 0.0
        %621 = vmatpush1.msra.mxu0 0.0
        %622 = vmatprep.subr.mxu0 0.0
        %623 = vmatpush1.msra.mxu0 0.0
        %624 = vmatprep.subr.mxu0 0.0
        %625 = vmatpush1.msra.mxu0 0.0
        %v626 = vand.u32 %v215, 4294901760
        %v627 = vsub.f32 %v215, %v626
        %v628 = vand.u32 %v627, 4294901760
        %629 = vmatprep.subr.mxu0 %v628
        %v630 = vand.u32 %v214, 4294901760
        %v631 = vsub.f32 %v214, %v630
        %v632 = vand.u32 %v631, 4294901760
        %633 = vmatpush1.msra.mxu0 %v632
        %v634 = vand.u32 %v199, 4294901760
        %v635 = vsub.f32 %v199, %v634
        %v636 = vand.u32 %v635, 4294901760
        %637 = vmatprep.subr.mxu0 %v636
        %v638 = vand.u32 %v198, 4294901760
        %v639 = vsub.f32 %v198, %v638
        %v640 = vand.u32 %v639, 4294901760
        %641 = vmatpush1.msra.mxu0 %v640
        %v642 = vand.u32 %v183, 4294901760
        %v643 = vsub.f32 %v183, %v642
        %v644 = vand.u32 %v643, 4294901760
        %645 = vmatprep.subr.mxu0 %v644
        %v646 = vand.u32 %v182, 4294901760
        %v647 = vsub.f32 %v182, %v646
        %v648 = vand.u32 %v647, 4294901760
        %649 = vmatpush1.msra.mxu0 %v648
        %v650 = vand.u32 %v167, 4294901760
        %v651 = vsub.f32 %v167, %v650
        %v652 = vand.u32 %v651, 4294901760
        %653 = vmatprep.subr.mxu0 %v652
        %v654 = vand.u32 %v166, 4294901760
        %v655 = vsub.f32 %v166, %v654
        %v656 = vand.u32 %v655, 4294901760
        %657 = vmatpush1.msra.mxu0 %v656
        %658 = vmatprep.subr.mxu0 0.0
        %659 = vmatpush2.msra.mxu0 0.0
        %660 = vmatprep.subr.mxu0 0.0
        %661 = vmatpush2.msra.mxu0 0.0
        %662 = vmatprep.subr.mxu0 0.0
        %663 = vmatpush2.msra.mxu0 0.0
        %664 = vmatprep.subr.mxu0 0.0
        %665 = vmatpush2.msra.mxu0 0.0
        %666 = vmatprep.subr.mxu0 0.0
        %667 = vmatpush2.msra.mxu0 0.0
        %668 = vmatprep.subr.mxu0 0.0
        %669 = vmatpush2.msra.mxu0 0.0
        %670 = vmatprep.subr.mxu0 0.0
        %671 = vmatpush2.msra.mxu0 0.0
        %672 = vmatprep.subr.mxu0 0.0
        %673 = vmatpush2.msra.mxu0 0.0
        %674 = vmatprep.subr.mxu0 0.0
        %675 = vmatpush2.msra.mxu0 0.0
        %676 = vmatprep.subr.mxu0 0.0
        %677 = vmatpush2.msra.mxu0 0.0
        %678 = vmatprep.subr.mxu0 0.0
        %679 = vmatpush2.msra.mxu0 0.0
        %680 = vmatprep.subr.mxu0 0.0
        %681 = vmatpush2.msra.mxu0 0.0
        %682 = vmatprep.subr.mxu0 0.0
        %683 = vmatpush2.msra.mxu0 0.0
        %684 = vmatprep.subr.mxu0 0.0
        %685 = vmatpush2.msra.mxu0 0.0
        %686 = vmatprep.subr.mxu0 0.0
        %687 = vmatpush2.msra.mxu0 0.0
        %688 = vmatprep.subr.mxu0 0.0
        %689 = vmatpush2.msra.mxu0 0.0
        %690 = vmatprep.mubr.f32.mxu0 0.0
        %v691 = vand.u32 %v233, 4294901760
        %692 = vmatmul.mubr.f32.gmra.mxu0 %v691
        %v693 = vpop.f32.mrf.mxu0
        %v694 = vadd.f32 %v598, %v693
        %v695 = vpop.f32.mrf.mxu0
        %v696 = vadd.f32 %v600, %v695
        %697 = vdwg.mxu0
        %698 = vmatprep.subr.mxu0 0.0
        %699 = vmatpush1.msra.mxu0 0.0
        %700 = vmatprep.subr.mxu0 0.0
        %701 = vmatpush1.msra.mxu0 0.0
        %702 = vmatprep.subr.mxu0 0.0
        %703 = vmatpush1.msra.mxu0 0.0
        %704 = vmatprep.subr.mxu0 0.0
        %705 = vmatpush1.msra.mxu0 0.0
        %706 = vmatprep.subr.mxu0 0.0
        %707 = vmatpush1.msra.mxu0 0.0
        %708 = vmatprep.subr.mxu0 0.0
        %709 = vmatpush1.msra.mxu0 0.0
        %710 = vmatprep.subr.mxu0 0.0
        %711 = vmatpush1.msra.mxu0 0.0
        %712 = vmatprep.subr.mxu0 0.0
        %713 = vmatpush1.msra.mxu0 0.0
        %714 = vmatprep.subr.mxu0 0.0
        %715 = vmatpush1.msra.mxu0 0.0
        %716 = vmatprep.subr.mxu0 0.0
        %717 = vmatpush1.msra.mxu0 0.0
        %718 = vmatprep.subr.mxu0 0.0
        %719 = vmatpush1.msra.mxu0 0.0
        %720 = vmatprep.subr.mxu0 0.0
        %721 = vmatpush1.msra.mxu0 0.0
        %v722 = vand.u32 %v215, 4294901760
        %723 = vmatprep.subr.mxu0 %v722
        %v724 = vand.u32 %v214, 4294901760
        %725 = vmatpush1.msra.mxu0 %v724
        %v726 = vand.u32 %v199, 4294901760
        %727 = vmatprep.subr.mxu0 %v726
        %v728 = vand.u32 %v198, 4294901760
        %729 = vmatpush1.msra.mxu0 %v728
        %v730 = vand.u32 %v183, 4294901760
        %731 = vmatprep.subr.mxu0 %v730
        %v732 = vand.u32 %v182, 4294901760
        %733 = vmatpush1.msra.mxu0 %v732
        %v734 = vand.u32 %v167, 4294901760
        %735 = vmatprep.subr.mxu0 %v734
        %v736 = vand.u32 %v166, 4294901760
        %737 = vmatpush1.msra.mxu0 %v736
        %738 = vmatprep.subr.mxu0 0.0
        %739 = vmatpush2.msra.mxu0 0.0
        %740 = vmatprep.subr.mxu0 0.0
        %741 = vmatpush2.msra.mxu0 0.0
        %742 = vmatprep.subr.mxu0 0.0
        %743 = vmatpush2.msra.mxu0 0.0
        %744 = vmatprep.subr.mxu0 0.0
        %745 = vmatpush2.msra.mxu0 0.0
        %746 = vmatprep.subr.mxu0 0.0
        %747 = vmatpush2.msra.mxu0 0.0
        %748 = vmatprep.subr.mxu0 0.0
        %749 = vmatpush2.msra.mxu0 0.0
        %750 = vmatprep.subr.mxu0 0.0
        %751 = vmatpush2.msra.mxu0 0.0
        %752 = vmatprep.subr.mxu0 0.0
        %753 = vmatpush2.msra.mxu0 0.0
        %754 = vmatprep.subr.mxu0 0.0
        %755 = vmatpush2.msra.mxu0 0.0
        %756 = vmatprep.subr.mxu0 0.0
        %757 = vmatpush2.msra.mxu0 0.0
        %758 = vmatprep.subr.mxu0 0.0
        %759 = vmatpush2.msra.mxu0 0.0
        %760 = vmatprep.subr.mxu0 0.0
        %761 = vmatpush2.msra.mxu0 0.0
        %762 = vmatprep.subr.mxu0 0.0
        %763 = vmatpush2.msra.mxu0 0.0
        %764 = vmatprep.subr.mxu0 0.0
        %765 = vmatpush2.msra.mxu0 0.0
        %766 = vmatprep.subr.mxu0 0.0
        %767 = vmatpush2.msra.mxu0 0.0
        %768 = vmatprep.subr.mxu0 0.0
        %769 = vmatpush2.msra.mxu0 0.0
        %770 = vmatprep.mubr.f32.mxu0 0.0
        %v771 = vand.u32 %v233, 4294901760
        %772 = vmatmul.mubr.f32.gmra.mxu0 %v771
        %v773 = vpop.f32.mrf.mxu0
        %v774 = vadd.f32 %v694, %v773
        %v775 = vpop.f32.mrf.mxu0
        %v776 = vadd.f32 %v696, %v775
        %777 = vdwg.mxu0
        %778 = vmatprep.subr.mxu0 0.0
        %779 = vmatpush1.msra.mxu0 0.0
        %780 = vmatprep.subr.mxu0 0.0
        %781 = vmatpush1.msra.mxu0 0.0
        %782 = vmatprep.subr.mxu0 0.0
        %783 = vmatpush1.msra.mxu0 0.0
        %784 = vmatprep.subr.mxu0 0.0
        %785 = vmatpush1.msra.mxu0 0.0
        %786 = vmatprep.subr.mxu0 0.0
        %787 = vmatpush1.msra.mxu0 0.0
        %788 = vmatprep.subr.mxu0 0.0
        %789 = vmatpush1.msra.mxu0 0.0
        %790 = vmatprep.subr.mxu0 0.0
        %791 = vmatpush1.msra.mxu0 0.0
        %792 = vmatprep.subr.mxu0 0.0
        %793 = vmatpush1.msra.mxu0 0.0
        %794 = vmatprep.subr.mxu0 0.0
        %795 = vmatpush1.msra.mxu0 0.0
        %796 = vmatprep.subr.mxu0 0.0
        %797 = vmatpush1.msra.mxu0 0.0
        %798 = vmatprep.subr.mxu0 0.0
        %799 = vmatpush1.msra.mxu0 0.0
        %800 = vmatprep.subr.mxu0 0.0
        %801 = vmatpush1.msra.mxu0 0.0
        %v802 = vand.u32 %v217, 4294901760
        %803 = vmatprep.subr.mxu0 %v802
        %v804 = vand.u32 %v216, 4294901760
        %805 = vmatpush1.msra.mxu0 %v804
        %v806 = vand.u32 %v201, 4294901760
        %807 = vmatprep.subr.mxu0 %v806
        %v808 = vand.u32 %v200, 4294901760
        %809 = vmatpush1.msra.mxu0 %v808
        %v810 = vand.u32 %v185, 4294901760
        %811 = vmatprep.subr.mxu0 %v810
        %v812 = vand.u32 %v184, 4294901760
        %813 = vmatpush1.msra.mxu0 %v812
        %v814 = vand.u32 %v169, 4294901760
        %815 = vmatprep.subr.mxu0 %v814
        %v816 = vand.u32 %v168, 4294901760
        %817 = vmatpush1.msra.mxu0 %v816
        %818 = vmatprep.subr.mxu0 0.0
        %819 = vmatpush2.msra.mxu0 0.0
        %820 = vmatprep.subr.mxu0 0.0
        %821 = vmatpush2.msra.mxu0 0.0
        %822 = vmatprep.subr.mxu0 0.0
        %823 = vmatpush2.msra.mxu0 0.0
        %824 = vmatprep.subr.mxu0 0.0
        %825 = vmatpush2.msra.mxu0 0.0
        %826 = vmatprep.subr.mxu0 0.0
        %827 = vmatpush2.msra.mxu0 0.0
        %828 = vmatprep.subr.mxu0 0.0
        %829 = vmatpush2.msra.mxu0 0.0
        %830 = vmatprep.subr.mxu0 0.0
        %831 = vmatpush2.msra.mxu0 0.0
        %832 = vmatprep.subr.mxu0 0.0
        %833 = vmatpush2.msra.mxu0 0.0
        %834 = vmatprep.subr.mxu0 0.0
        %835 = vmatpush2.msra.mxu0 0.0
        %836 = vmatprep.subr.mxu0 0.0
        %837 = vmatpush2.msra.mxu0 0.0
        %838 = vmatprep.subr.mxu0 0.0
        %839 = vmatpush2.msra.mxu0 0.0
        %840 = vmatprep.subr.mxu0 0.0
        %841 = vmatpush2.msra.mxu0 0.0
        %842 = vmatprep.subr.mxu0 0.0
        %843 = vmatpush2.msra.mxu0 0.0
        %844 = vmatprep.subr.mxu0 0.0
        %845 = vmatpush2.msra.mxu0 0.0
        %846 = vmatprep.subr.mxu0 0.0
        %847 = vmatpush2.msra.mxu0 0.0
        %848 = vmatprep.subr.mxu0 0.0
        %849 = vmatpush2.msra.mxu0 0.0
        %850 = vmatprep.mubr.f32.mxu0 0.0
        %v851 = vand.u32 %v233, 4294901760
        %v852 = vsub.f32 %v233, %v851
        %v853 = vand.u32 %v852, 4294901760
        %v854 = vsub.f32 %v852, %v853
        %v855 = vand.u32 %v854, 4294901760
        %856 = vmatmul.mubr.f32.gmra.mxu0 %v855
        %v857 = vpop.f32.mrf.mxu0
        %v858 = vadd.f32 0.0, %v857
        %v859 = vpop.f32.mrf.mxu0
        %v860 = vadd.f32 0.0, %v859
        %861 = vdwg.mxu0
        %862 = vmatprep.subr.mxu0 0.0
        %863 = vmatpush1.msra.mxu0 0.0
        %864 = vmatprep.subr.mxu0 0.0
        %865 = vmatpush1.msra.mxu0 0.0
        %866 = vmatprep.subr.mxu0 0.0
        %867 = vmatpush1.msra.mxu0 0.0
        %868 = vmatprep.subr.mxu0 0.0
        %869 = vmatpush1.msra.mxu0 0.0
        %870 = vmatprep.subr.mxu0 0.0
        %871 = vmatpush1.msra.mxu0 0.0
        %872 = vmatprep.subr.mxu0 0.0
        %873 = vmatpush1.msra.mxu0 0.0
        %874 = vmatprep.subr.mxu0 0.0
        %875 = vmatpush1.msra.mxu0 0.0
        %876 = vmatprep.subr.mxu0 0.0
        %877 = vmatpush1.msra.mxu0 0.0
        %878 = vmatprep.subr.mxu0 0.0
        %879 = vmatpush1.msra.mxu0 0.0
        %880 = vmatprep.subr.mxu0 0.0
        %881 = vmatpush1.msra.mxu0 0.0
        %882 = vmatprep.subr.mxu0 0.0
        %883 = vmatpush1.msra.mxu0 0.0
        %884 = vmatprep.subr.mxu0 0.0
        %885 = vmatpush1.msra.mxu0 0.0
        %v886 = vand.u32 %v217, 4294901760
        %v887 = vsub.f32 %v217, %v886
        %v888 = vand.u32 %v887, 4294901760
        %v889 = vsub.f32 %v887, %v888
        %v890 = vand.u32 %v889, 4294901760
        %891 = vmatprep.subr.mxu0 %v890
        %v892 = vand.u32 %v216, 4294901760
        %v893 = vsub.f32 %v216, %v892
        %v894 = vand.u32 %v893, 4294901760
        %v895 = vsub.f32 %v893, %v894
        %v896 = vand.u32 %v895, 4294901760
        %897 = vmatpush1.msra.mxu0 %v896
        %v898 = vand.u32 %v201, 4294901760
        %v899 = vsub.f32 %v201, %v898
        %v900 = vand.u32 %v899, 4294901760
        %v901 = vsub.f32 %v899, %v900
        %v902 = vand.u32 %v901, 4294901760
        %903 = vmatprep.subr.mxu0 %v902
        %v904 = vand.u32 %v200, 4294901760
        %v905 = vsub.f32 %v200, %v904
        %v906 = vand.u32 %v905, 4294901760
        %v907 = vsub.f32 %v905, %v906
        %v908 = vand.u32 %v907, 4294901760
        %909 = vmatpush1.msra.mxu0 %v908
        %v910 = vand.u32 %v185, 4294901760
        %v911 = vsub.f32 %v185, %v910
        %v912 = vand.u32 %v911, 4294901760
        %v913 = vsub.f32 %v911, %v912
        %v914 = vand.u32 %v913, 4294901760
        %915 = vmatprep.subr.mxu0 %v914
        %v916 = vand.u32 %v184, 4294901760
        %v917 = vsub.f32 %v184, %v916
        %v918 = vand.u32 %v917, 4294901760
        %v919 = vsub.f32 %v917, %v918
        %v920 = vand.u32 %v919, 4294901760
        %921 = vmatpush1.msra.mxu0 %v920
        %v922 = vand.u32 %v169, 4294901760
        %v923 = vsub.f32 %v169, %v922
        %v924 = vand.u32 %v923, 4294901760
        %v925 = vsub.f32 %v923, %v924
        %v926 = vand.u32 %v925, 4294901760
        %927 = vmatprep.subr.mxu0 %v926
        %v928 = vand.u32 %v168, 4294901760
        %v929 = vsub.f32 %v168, %v928
        %v930 = vand.u32 %v929, 4294901760
        %v931 = vsub.f32 %v929, %v930
        %v932 = vand.u32 %v931, 4294901760
        %933 = vmatpush1.msra.mxu0 %v932
        %934 = vmatprep.subr.mxu0 0.0
        %935 = vmatpush2.msra.mxu0 0.0
        %936 = vmatprep.subr.mxu0 0.0
        %937 = vmatpush2.msra.mxu0 0.0
        %938 = vmatprep.subr.mxu0 0.0
        %939 = vmatpush2.msra.mxu0 0.0
        %940 = vmatprep.subr.mxu0 0.0
        %941 = vmatpush2.msra.mxu0 0.0
        %942 = vmatprep.subr.mxu0 0.0
        %943 = vmatpush2.msra.mxu0 0.0
        %944 = vmatprep.subr.mxu0 0.0
        %945 = vmatpush2.msra.mxu0 0.0
        %946 = vmatprep.subr.mxu0 0.0
        %947 = vmatpush2.msra.mxu0 0.0
        %948 = vmatprep.subr.mxu0 0.0
        %949 = vmatpush2.msra.mxu0 0.0
        %950 = vmatprep.subr.mxu0 0.0
        %951 = vmatpush2.msra.mxu0 0.0
        %952 = vmatprep.subr.mxu0 0.0
        %953 = vmatpush2.msra.mxu0 0.0
        %954 = vmatprep.subr.mxu0 0.0
        %955 = vmatpush2.msra.mxu0 0.0
        %956 = vmatprep.subr.mxu0 0.0
        %957 = vmatpush2.msra.mxu0 0.0
        %958 = vmatprep.subr.mxu0 0.0
        %959 = vmatpush2.msra.mxu0 0.0
        %960 = vmatprep.subr.mxu0 0.0
        %961 = vmatpush2.msra.mxu0 0.0
        %962 = vmatprep.subr.mxu0 0.0
        %963 = vmatpush2.msra.mxu0 0.0
        %964 = vmatprep.subr.mxu0 0.0
        %965 = vmatpush2.msra.mxu0 0.0
        %966 = vmatprep.mubr.f32.mxu0 0.0
        %v967 = vand.u32 %v233, 4294901760
        %968 = vmatmul.mubr.f32.gmra.mxu0 %v967
        %v969 = vpop.f32.mrf.mxu0
        %v970 = vadd.f32 %v858, %v969
        %v971 = vpop.f32.mrf.mxu0
        %v972 = vadd.f32 %v860, %v971
        %973 = vdwg.mxu0
        %974 = vmatprep.subr.mxu0 0.0
        %975 = vmatpush1.msra.mxu0 0.0
        %976 = vmatprep.subr.mxu0 0.0
        %977 = vmatpush1.msra.mxu0 0.0
        %978 = vmatprep.subr.mxu0 0.0
        %979 = vmatpush1.msra.mxu0 0.0
        %980 = vmatprep.subr.mxu0 0.0
        %981 = vmatpush1.msra.mxu0 0.0
        %982 = vmatprep.subr.mxu0 0.0
        %983 = vmatpush1.msra.mxu0 0.0
        %984 = vmatprep.subr.mxu0 0.0
        %985 = vmatpush1.msra.mxu0 0.0
        %986 = vmatprep.subr.mxu0 0.0
        %987 = vmatpush1.msra.mxu0 0.0
        %988 = vmatprep.subr.mxu0 0.0
        %989 = vmatpush1.msra.mxu0 0.0
        %990 = vmatprep.subr.mxu0 0.0
        %991 = vmatpush1.msra.mxu0 0.0
        %992 = vmatprep.subr.mxu0 0.0
        %993 = vmatpush1.msra.mxu0 0.0
        %994 = vmatprep.subr.mxu0 0.0
        %995 = vmatpush1.msra.mxu0 0.0
        %996 = vmatprep.subr.mxu0 0.0
        %997 = vmatpush1.msra.mxu0 0.0
        %v998 = vand.u32 %v217, 4294901760
        %v999 = vsub.f32 %v217, %v998
        %1000 = vmatprep.subr.mxu0 %v999
        %v1001 = vand.u32 %v216, 4294901760
        %v1002 = vsub.f32 %v216, %v1001
        %1003 = vmatpush1.msra.mxu0 %v1002
        %v1004 = vand.u32 %v201, 4294901760
        %v1005 = vsub.f32 %v201, %v1004
        %1006 = vmatprep.subr.mxu0 %v1005
        %v1007 = vand.u32 %v200, 4294901760
        %v1008 = vsub.f32 %v200, %v1007
        %1009 = vmatpush1.msra.mxu0 %v1008
        %v1010 = vand.u32 %v185, 4294901760
        %v1011 = vsub.f32 %v185, %v1010
        %1012 = vmatprep.subr.mxu0 %v1011
        %v1013 = vand.u32 %v184, 4294901760
        %v1014 = vsub.f32 %v184, %v1013
        %1015 = vmatpush1.msra.mxu0 %v1014
        %v1016 = vand.u32 %v169, 4294901760
        %v1017 = vsub.f32 %v169, %v1016
        %1018 = vmatprep.subr.mxu0 %v1017
        %v1019 = vand.u32 %v168, 4294901760
        %v1020 = vsub.f32 %v168, %v1019
        %1021 = vmatpush1.msra.mxu0 %v1020
        %1022 = vmatprep.subr.mxu0 0.0
        %1023 = vmatpush2.msra.mxu0 0.0
        %1024 = vmatprep.subr.mxu0 0.0
        %1025 = vmatpush2.msra.mxu0 0.0
        %1026 = vmatprep.subr.mxu0 0.0
        %1027 = vmatpush2.msra.mxu0 0.0
        %1028 = vmatprep.subr.mxu0 0.0
        %1029 = vmatpush2.msra.mxu0 0.0
        %1030 = vmatprep.subr.mxu0 0.0
        %1031 = vmatpush2.msra.mxu0 0.0
        %1032 = vmatprep.subr.mxu0 0.0
        %1033 = vmatpush2.msra.mxu0 0.0
        %1034 = vmatprep.subr.mxu0 0.0
        %1035 = vmatpush2.msra.mxu0 0.0
        %1036 = vmatprep.subr.mxu0 0.0
        %1037 = vmatpush2.msra.mxu0 0.0
        %1038 = vmatprep.subr.mxu0 0.0
        %1039 = vmatpush2.msra.mxu0 0.0
        %1040 = vmatprep.subr.mxu0 0.0
        %1041 = vmatpush2.msra.mxu0 0.0
        %1042 = vmatprep.subr.mxu0 0.0
        %1043 = vmatpush2.msra.mxu0 0.0
        %1044 = vmatprep.subr.mxu0 0.0
        %1045 = vmatpush2.msra.mxu0 0.0
        %1046 = vmatprep.subr.mxu0 0.0
        %1047 = vmatpush2.msra.mxu0 0.0
        %1048 = vmatprep.subr.mxu0 0.0
        %1049 = vmatpush2.msra.mxu0 0.0
        %1050 = vmatprep.subr.mxu0 0.0
        %1051 = vmatpush2.msra.mxu0 0.0
        %1052 = vmatprep.subr.mxu0 0.0
        %1053 = vmatpush2.msra.mxu0 0.0
        %1054 = vmatprep.mubr.f32.mxu0 0.0
        %v1055 = vand.u32 %v233, 4294901760
        %v1056 = vsub.f32 %v233, %v1055
        %1057 = vmatmul.mubr.f32.gmra.mxu0 %v1056
        %v1058 = vpop.f32.mrf.mxu0
        %v1059 = vadd.f32 %v970, %v1058
        %v1060 = vpop.f32.mrf.mxu0
        %v1061 = vadd.f32 %v972, %v1060
        %1062 = vdwg.mxu0
        %1063 = vmatprep.subr.mxu0 0.0
        %1064 = vmatpush1.msra.mxu0 0.0
        %1065 = vmatprep.subr.mxu0 0.0
        %1066 = vmatpush1.msra.mxu0 0.0
        %1067 = vmatprep.subr.mxu0 0.0
        %1068 = vmatpush1.msra.mxu0 0.0
        %1069 = vmatprep.subr.mxu0 0.0
        %1070 = vmatpush1.msra.mxu0 0.0
        %1071 = vmatprep.subr.mxu0 0.0
        %1072 = vmatpush1.msra.mxu0 0.0
        %1073 = vmatprep.subr.mxu0 0.0
        %1074 = vmatpush1.msra.mxu0 0.0
        %1075 = vmatprep.subr.mxu0 0.0
        %1076 = vmatpush1.msra.mxu0 0.0
        %1077 = vmatprep.subr.mxu0 0.0
        %1078 = vmatpush1.msra.mxu0 0.0
        %1079 = vmatprep.subr.mxu0 0.0
        %1080 = vmatpush1.msra.mxu0 0.0
        %1081 = vmatprep.subr.mxu0 0.0
        %1082 = vmatpush1.msra.mxu0 0.0
        %1083 = vmatprep.subr.mxu0 0.0
        %1084 = vmatpush1.msra.mxu0 0.0
        %1085 = vmatprep.subr.mxu0 0.0
        %1086 = vmatpush1.msra.mxu0 0.0
        %v1087 = vand.u32 %v217, 4294901760
        %1088 = vmatprep.subr.mxu0 %v1087
        %v1089 = vand.u32 %v216, 4294901760
        %1090 = vmatpush1.msra.mxu0 %v1089
        %v1091 = vand.u32 %v201, 4294901760
        %1092 = vmatprep.subr.mxu0 %v1091
        %v1093 = vand.u32 %v200, 4294901760
        %1094 = vmatpush1.msra.mxu0 %v1093
        %v1095 = vand.u32 %v185, 4294901760
        %1096 = vmatprep.subr.mxu0 %v1095
        %v1097 = vand.u32 %v184, 4294901760
        %1098 = vmatpush1.msra.mxu0 %v1097
        %v1099 = vand.u32 %v169, 4294901760
        %1100 = vmatprep.subr.mxu0 %v1099
        %v1101 = vand.u32 %v168, 4294901760
        %1102 = vmatpush1.msra.mxu0 %v1101
        %1103 = vmatprep.subr.mxu0 0.0
        %1104 = vmatpush2.msra.mxu0 0.0
        %1105 = vmatprep.subr.mxu0 0.0
        %1106 = vmatpush2.msra.mxu0 0.0
        %1107 = vmatprep.subr.mxu0 0.0
        %1108 = vmatpush2.msra.mxu0 0.0
        %1109 = vmatprep.subr.mxu0 0.0
        %1110 = vmatpush2.msra.mxu0 0.0
        %1111 = vmatprep.subr.mxu0 0.0
        %1112 = vmatpush2.msra.mxu0 0.0
        %1113 = vmatprep.subr.mxu0 0.0
        %1114 = vmatpush2.msra.mxu0 0.0
        %1115 = vmatprep.subr.mxu0 0.0
        %1116 = vmatpush2.msra.mxu0 0.0
        %1117 = vmatprep.subr.mxu0 0.0
        %1118 = vmatpush2.msra.mxu0 0.0
        %1119 = vmatprep.subr.mxu0 0.0
        %1120 = vmatpush2.msra.mxu0 0.0
        %1121 = vmatprep.subr.mxu0 0.0
        %1122 = vmatpush2.msra.mxu0 0.0
        %1123 = vmatprep.subr.mxu0 0.0
        %1124 = vmatpush2.msra.mxu0 0.0
        %1125 = vmatprep.subr.mxu0 0.0
        %1126 = vmatpush2.msra.mxu0 0.0
        %1127 = vmatprep.subr.mxu0 0.0
        %1128 = vmatpush2.msra.mxu0 0.0
        %1129 = vmatprep.subr.mxu0 0.0
        %1130 = vmatpush2.msra.mxu0 0.0
        %1131 = vmatprep.subr.mxu0 0.0
        %1132 = vmatpush2.msra.mxu0 0.0
        %1133 = vmatprep.subr.mxu0 0.0
        %1134 = vmatpush2.msra.mxu0 0.0
        %1135 = vmatprep.mubr.f32.mxu0 0.0
        %v1136 = vand.u32 %v233, 4294901760
        %v1137 = vsub.f32 %v233, %v1136
        %v1138 = vand.u32 %v1137, 4294901760
        %1139 = vmatmul.mubr.f32.gmra.mxu0 %v1138
        %v1140 = vpop.f32.mrf.mxu0
        %v1141 = vadd.f32 %v1059, %v1140
        %v1142 = vpop.f32.mrf.mxu0
        %v1143 = vadd.f32 %v1061, %v1142
        %1144 = vdwg.mxu0
        %1145 = vmatprep.subr.mxu0 0.0
        %1146 = vmatpush1.msra.mxu0 0.0
        %1147 = vmatprep.subr.mxu0 0.0
        %1148 = vmatpush1.msra.mxu0 0.0
        %1149 = vmatprep.subr.mxu0 0.0
        %1150 = vmatpush1.msra.mxu0 0.0
        %1151 = vmatprep.subr.mxu0 0.0
        %1152 = vmatpush1.msra.mxu0 0.0
        %1153 = vmatprep.subr.mxu0 0.0
        %1154 = vmatpush1.msra.mxu0 0.0
        %1155 = vmatprep.subr.mxu0 0.0
        %1156 = vmatpush1.msra.mxu0 0.0
        %1157 = vmatprep.subr.mxu0 0.0
        %1158 = vmatpush1.msra.mxu0 0.0
        %1159 = vmatprep.subr.mxu0 0.0
        %1160 = vmatpush1.msra.mxu0 0.0
        %1161 = vmatprep.subr.mxu0 0.0
        %1162 = vmatpush1.msra.mxu0 0.0
        %1163 = vmatprep.subr.mxu0 0.0
        %1164 = vmatpush1.msra.mxu0 0.0
        %1165 = vmatprep.subr.mxu0 0.0
        %1166 = vmatpush1.msra.mxu0 0.0
        %1167 = vmatprep.subr.mxu0 0.0
        %1168 = vmatpush1.msra.mxu0 0.0
        %v1169 = vand.u32 %v217, 4294901760
        %v1170 = vsub.f32 %v217, %v1169
        %v1171 = vand.u32 %v1170, 4294901760
        %1172 = vmatprep.subr.mxu0 %v1171
        %v1173 = vand.u32 %v216, 4294901760
        %v1174 = vsub.f32 %v216, %v1173
        %v1175 = vand.u32 %v1174, 4294901760
        %1176 = vmatpush1.msra.mxu0 %v1175
        %v1177 = vand.u32 %v201, 4294901760
        %v1178 = vsub.f32 %v201, %v1177
        %v1179 = vand.u32 %v1178, 4294901760
        %1180 = vmatprep.subr.mxu0 %v1179
        %v1181 = vand.u32 %v200, 4294901760
        %v1182 = vsub.f32 %v200, %v1181
        %v1183 = vand.u32 %v1182, 4294901760
        %1184 = vmatpush1.msra.mxu0 %v1183
        %v1185 = vand.u32 %v185, 4294901760
        %v1186 = vsub.f32 %v185, %v1185
        %v1187 = vand.u32 %v1186, 4294901760
        %1188 = vmatprep.subr.mxu0 %v1187
        %v1189 = vand.u32 %v184, 4294901760
        %v1190 = vsub.f32 %v184, %v1189
        %v1191 = vand.u32 %v1190, 4294901760
        %1192 = vmatpush1.msra.mxu0 %v1191
        %v1193 = vand.u32 %v169, 4294901760
        %v1194 = vsub.f32 %v169, %v1193
        %v1195 = vand.u32 %v1194, 4294901760
        %1196 = vmatprep.subr.mxu0 %v1195
        %v1197 = vand.u32 %v168, 4294901760
        %v1198 = vsub.f32 %v168, %v1197
        %v1199 = vand.u32 %v1198, 4294901760
        %1200 = vmatpush1.msra.mxu0 %v1199
        %1201 = vmatprep.subr.mxu0 0.0
        %1202 = vmatpush2.msra.mxu0 0.0
        %1203 = vmatprep.subr.mxu0 0.0
        %1204 = vmatpush2.msra.mxu0 0.0
        %1205 = vmatprep.subr.mxu0 0.0
        %1206 = vmatpush2.msra.mxu0 0.0
        %1207 = vmatprep.subr.mxu0 0.0
        %1208 = vmatpush2.msra.mxu0 0.0
        %1209 = vmatprep.subr.mxu0 0.0
        %1210 = vmatpush2.msra.mxu0 0.0
        %1211 = vmatprep.subr.mxu0 0.0
        %1212 = vmatpush2.msra.mxu0 0.0
        %1213 = vmatprep.subr.mxu0 0.0
        %1214 = vmatpush2.msra.mxu0 0.0
        %1215 = vmatprep.subr.mxu0 0.0
        %1216 = vmatpush2.msra.mxu0 0.0
        %1217 = vmatprep.subr.mxu0 0.0
        %1218 = vmatpush2.msra.mxu0 0.0
        %1219 = vmatprep.subr.mxu0 0.0
        %1220 = vmatpush2.msra.mxu0 0.0
        %1221 = vmatprep.subr.mxu0 0.0
        %1222 = vmatpush2.msra.mxu0 0.0
        %1223 = vmatprep.subr.mxu0 0.0
        %1224 = vmatpush2.msra.mxu0 0.0
        %1225 = vmatprep.subr.mxu0 0.0
        %1226 = vmatpush2.msra.mxu0 0.0
        %1227 = vmatprep.subr.mxu0 0.0
        %1228 = vmatpush2.msra.mxu0 0.0
        %1229 = vmatprep.subr.mxu0 0.0
        %1230 = vmatpush2.msra.mxu0 0.0
        %1231 = vmatprep.subr.mxu0 0.0
        %1232 = vmatpush2.msra.mxu0 0.0
        %1233 = vmatprep.mubr.f32.mxu0 0.0
        %v1234 = vand.u32 %v233, 4294901760
        %1235 = vmatmul.mubr.f32.gmra.mxu0 %v1234
        %v1236 = vpop.f32.mrf.mxu0
        %v1237 = vadd.f32 %v1141, %v1236
        %v1238 = vpop.f32.mrf.mxu0
        %v1239 = vadd.f32 %v1143, %v1238
        %1240 = vdwg.mxu0
        %1241 = vmatprep.subr.mxu0 0.0
        %1242 = vmatpush1.msra.mxu0 0.0
        %1243 = vmatprep.subr.mxu0 0.0
        %1244 = vmatpush1.msra.mxu0 0.0
        %1245 = vmatprep.subr.mxu0 0.0
        %1246 = vmatpush1.msra.mxu0 0.0
        %1247 = vmatprep.subr.mxu0 0.0
        %1248 = vmatpush1.msra.mxu0 0.0
        %1249 = vmatprep.subr.mxu0 0.0
        %1250 = vmatpush1.msra.mxu0 0.0
        %1251 = vmatprep.subr.mxu0 0.0
        %1252 = vmatpush1.msra.mxu0 0.0
        %1253 = vmatprep.subr.mxu0 0.0
        %1254 = vmatpush1.msra.mxu0 0.0
        %1255 = vmatprep.subr.mxu0 0.0
        %1256 = vmatpush1.msra.mxu0 0.0
        %1257 = vmatprep.subr.mxu0 0.0
        %1258 = vmatpush1.msra.mxu0 0.0
        %1259 = vmatprep.subr.mxu0 0.0
        %1260 = vmatpush1.msra.mxu0 0.0
        %1261 = vmatprep.subr.mxu0 0.0
        %1262 = vmatpush1.msra.mxu0 0.0
        %1263 = vmatprep.subr.mxu0 0.0
        %1264 = vmatpush1.msra.mxu0 0.0
        %v1265 = vand.u32 %v217, 4294901760
        %1266 = vmatprep.subr.mxu0 %v1265
        %v1267 = vand.u32 %v216, 4294901760
        %1268 = vmatpush1.msra.mxu0 %v1267
        %v1269 = vand.u32 %v201, 4294901760
        %1270 = vmatprep.subr.mxu0 %v1269
        %v1271 = vand.u32 %v200, 4294901760
        %1272 = vmatpush1.msra.mxu0 %v1271
        %v1273 = vand.u32 %v185, 4294901760
        %1274 = vmatprep.subr.mxu0 %v1273
        %v1275 = vand.u32 %v184, 4294901760
        %1276 = vmatpush1.msra.mxu0 %v1275
        %v1277 = vand.u32 %v169, 4294901760
        %1278 = vmatprep.subr.mxu0 %v1277
        %v1279 = vand.u32 %v168, 4294901760
        %1280 = vmatpush1.msra.mxu0 %v1279
        %1281 = vmatprep.subr.mxu0 0.0
        %1282 = vmatpush2.msra.mxu0 0.0
        %1283 = vmatprep.subr.mxu0 0.0
        %1284 = vmatpush2.msra.mxu0 0.0
        %1285 = vmatprep.subr.mxu0 0.0
        %1286 = vmatpush2.msra.mxu0 0.0
        %1287 = vmatprep.subr.mxu0 0.0
        %1288 = vmatpush2.msra.mxu0 0.0
        %1289 = vmatprep.subr.mxu0 0.0
        %1290 = vmatpush2.msra.mxu0 0.0
        %1291 = vmatprep.subr.mxu0 0.0
        %1292 = vmatpush2.msra.mxu0 0.0
        %1293 = vmatprep.subr.mxu0 0.0
        %1294 = vmatpush2.msra.mxu0 0.0
        %1295 = vmatprep.subr.mxu0 0.0
        %1296 = vmatpush2.msra.mxu0 0.0
        %1297 = vmatprep.subr.mxu0 0.0
        %1298 = vmatpush2.msra.mxu0 0.0
        %1299 = vmatprep.subr.mxu0 0.0
        %1300 = vmatpush2.msra.mxu0 0.0
        %1301 = vmatprep.subr.mxu0 0.0
        %1302 = vmatpush2.msra.mxu0 0.0
        %1303 = vmatprep.subr.mxu0 0.0
        %1304 = vmatpush2.msra.mxu0 0.0
        %1305 = vmatprep.subr.mxu0 0.0
        %1306 = vmatpush2.msra.mxu0 0.0
        %1307 = vmatprep.subr.mxu0 0.0
        %1308 = vmatpush2.msra.mxu0 0.0
        %1309 = vmatprep.subr.mxu0 0.0
        %1310 = vmatpush2.msra.mxu0 0.0
        %1311 = vmatprep.subr.mxu0 0.0
        %1312 = vmatpush2.msra.mxu0 0.0
        %1313 = vmatprep.mubr.f32.mxu0 0.0
        %v1314 = vand.u32 %v233, 4294901760
        %1315 = vmatmul.mubr.f32.gmra.mxu0 %v1314
        %v1316 = vpop.f32.mrf.mxu0
        %v1317 = vadd.f32 %v1237, %v1316
        %v1318 = vpop.f32.mrf.mxu0
        %v1319 = vadd.f32 %v1239, %v1318
        %1320 = vdwg.mxu0
        %1321 = vmatprep.subr.mxu0 0.0
        %1322 = vmatpush1.msra.mxu0 0.0
        %1323 = vmatprep.subr.mxu0 0.0
        %1324 = vmatpush1.msra.mxu0 0.0
        %1325 = vmatprep.subr.mxu0 0.0
        %1326 = vmatpush1.msra.mxu0 0.0
        %1327 = vmatprep.subr.mxu0 0.0
        %1328 = vmatpush1.msra.mxu0 0.0
        %1329 = vmatprep.subr.mxu0 0.0
        %1330 = vmatpush1.msra.mxu0 0.0
        %1331 = vmatprep.subr.mxu0 0.0
        %1332 = vmatpush1.msra.mxu0 0.0
        %1333 = vmatprep.subr.mxu0 0.0
        %1334 = vmatpush1.msra.mxu0 0.0
        %1335 = vmatprep.subr.mxu0 0.0
        %1336 = vmatpush1.msra.mxu0 0.0
        %1337 = vmatprep.subr.mxu0 0.0
        %1338 = vmatpush1.msra.mxu0 0.0
        %1339 = vmatprep.subr.mxu0 0.0
        %1340 = vmatpush1.msra.mxu0 0.0
        %1341 = vmatprep.subr.mxu0 0.0
        %1342 = vmatpush1.msra.mxu0 0.0
        %1343 = vmatprep.subr.mxu0 0.0
        %1344 = vmatpush1.msra.mxu0 0.0
        %v1345 = vand.u32 %v219, 4294901760
        %1346 = vmatprep.subr.mxu0 %v1345
        %v1347 = vand.u32 %v218, 4294901760
        %1348 = vmatpush1.msra.mxu0 %v1347
        %v1349 = vand.u32 %v203, 4294901760
        %1350 = vmatprep.subr.mxu0 %v1349
        %v1351 = vand.u32 %v202, 4294901760
        %1352 = vmatpush1.msra.mxu0 %v1351
        %v1353 = vand.u32 %v187, 4294901760
        %1354 = vmatprep.subr.mxu0 %v1353
        %v1355 = vand.u32 %v186, 4294901760
        %1356 = vmatpush1.msra.mxu0 %v1355
        %v1357 = vand.u32 %v171, 4294901760
        %1358 = vmatprep.subr.mxu0 %v1357
        %v1359 = vand.u32 %v170, 4294901760
        %1360 = vmatpush1.msra.mxu0 %v1359
        %1361 = vmatprep.subr.mxu0 0.0
        %1362 = vmatpush2.msra.mxu0 0.0
        %1363 = vmatprep.subr.mxu0 0.0
        %1364 = vmatpush2.msra.mxu0 0.0
        %1365 = vmatprep.subr.mxu0 0.0
        %1366 = vmatpush2.msra.mxu0 0.0
        %1367 = vmatprep.subr.mxu0 0.0
        %1368 = vmatpush2.msra.mxu0 0.0
        %1369 = vmatprep.subr.mxu0 0.0
        %1370 = vmatpush2.msra.mxu0 0.0
        %1371 = vmatprep.subr.mxu0 0.0
        %1372 = vmatpush2.msra.mxu0 0.0
        %1373 = vmatprep.subr.mxu0 0.0
        %1374 = vmatpush2.msra.mxu0 0.0
        %1375 = vmatprep.subr.mxu0 0.0
        %1376 = vmatpush2.msra.mxu0 0.0
        %1377 = vmatprep.subr.mxu0 0.0
        %1378 = vmatpush2.msra.mxu0 0.0
        %1379 = vmatprep.subr.mxu0 0.0
        %1380 = vmatpush2.msra.mxu0 0.0
        %1381 = vmatprep.subr.mxu0 0.0
        %1382 = vmatpush2.msra.mxu0 0.0
        %1383 = vmatprep.subr.mxu0 0.0
        %1384 = vmatpush2.msra.mxu0 0.0
        %1385 = vmatprep.subr.mxu0 0.0
        %1386 = vmatpush2.msra.mxu0 0.0
        %1387 = vmatprep.subr.mxu0 0.0
        %1388 = vmatpush2.msra.mxu0 0.0
        %1389 = vmatprep.subr.mxu0 0.0
        %1390 = vmatpush2.msra.mxu0 0.0
        %1391 = vmatprep.subr.mxu0 0.0
        %1392 = vmatpush2.msra.mxu0 0.0
        %1393 = vmatprep.mubr.f32.mxu0 0.0
        %v1394 = vand.u32 %v233, 4294901760
        %v1395 = vsub.f32 %v233, %v1394
        %v1396 = vand.u32 %v1395, 4294901760
        %v1397 = vsub.f32 %v1395, %v1396
        %v1398 = vand.u32 %v1397, 4294901760
        %1399 = vmatmul.mubr.f32.gmra.mxu0 %v1398
        %v1400 = vpop.f32.mrf.mxu0
        %v1401 = vadd.f32 0.0, %v1400
        %v1402 = vpop.f32.mrf.mxu0
        %v1403 = vadd.f32 0.0, %v1402
        %1404 = vdwg.mxu0
        %1405 = vmatprep.subr.mxu0 0.0
        %1406 = vmatpush1.msra.mxu0 0.0
        %1407 = vmatprep.subr.mxu0 0.0
        %1408 = vmatpush1.msra.mxu0 0.0
        %1409 = vmatprep.subr.mxu0 0.0
        %1410 = vmatpush1.msra.mxu0 0.0
        %1411 = vmatprep.subr.mxu0 0.0
        %1412 = vmatpush1.msra.mxu0 0.0
        %1413 = vmatprep.subr.mxu0 0.0
        %1414 = vmatpush1.msra.mxu0 0.0
        %1415 = vmatprep.subr.mxu0 0.0
        %1416 = vmatpush1.msra.mxu0 0.0
        %1417 = vmatprep.subr.mxu0 0.0
        %1418 = vmatpush1.msra.mxu0 0.0
        %1419 = vmatprep.subr.mxu0 0.0
        %1420 = vmatpush1.msra.mxu0 0.0
        %1421 = vmatprep.subr.mxu0 0.0
        %1422 = vmatpush1.msra.mxu0 0.0
        %1423 = vmatprep.subr.mxu0 0.0
        %1424 = vmatpush1.msra.mxu0 0.0
        %1425 = vmatprep.subr.mxu0 0.0
        %1426 = vmatpush1.msra.mxu0 0.0
        %1427 = vmatprep.subr.mxu0 0.0
        %1428 = vmatpush1.msra.mxu0 0.0
        %v1429 = vand.u32 %v219, 4294901760
        %v1430 = vsub.f32 %v219, %v1429
        %v1431 = vand.u32 %v1430, 4294901760
        %v1432 = vsub.f32 %v1430, %v1431
        %v1433 = vand.u32 %v1432, 4294901760
        %1434 = vmatprep.subr.mxu0 %v1433
        %v1435 = vand.u32 %v218, 4294901760
        %v1436 = vsub.f32 %v218, %v1435
        %v1437 = vand.u32 %v1436, 4294901760
        %v1438 = vsub.f32 %v1436, %v1437
        %v1439 = vand.u32 %v1438, 4294901760
        %1440 = vmatpush1.msra.mxu0 %v1439
        %v1441 = vand.u32 %v203, 4294901760
        %v1442 = vsub.f32 %v203, %v1441
        %v1443 = vand.u32 %v1442, 4294901760
        %v1444 = vsub.f32 %v1442, %v1443
        %v1445 = vand.u32 %v1444, 4294901760
        %1446 = vmatprep.subr.mxu0 %v1445
        %v1447 = vand.u32 %v202, 4294901760
        %v1448 = vsub.f32 %v202, %v1447
        %v1449 = vand.u32 %v1448, 4294901760
        %v1450 = vsub.f32 %v1448, %v1449
        %v1451 = vand.u32 %v1450, 4294901760
        %1452 = vmatpush1.msra.mxu0 %v1451
        %v1453 = vand.u32 %v187, 4294901760
        %v1454 = vsub.f32 %v187, %v1453
        %v1455 = vand.u32 %v1454, 4294901760
        %v1456 = vsub.f32 %v1454, %v1455
        %v1457 = vand.u32 %v1456, 4294901760
        %1458 = vmatprep.subr.mxu0 %v1457
        %v1459 = vand.u32 %v186, 4294901760
        %v1460 = vsub.f32 %v186, %v1459
        %v1461 = vand.u32 %v1460, 4294901760
        %v1462 = vsub.f32 %v1460, %v1461
        %v1463 = vand.u32 %v1462, 4294901760
        %1464 = vmatpush1.msra.mxu0 %v1463
        %v1465 = vand.u32 %v171, 4294901760
        %v1466 = vsub.f32 %v171, %v1465
        %v1467 = vand.u32 %v1466, 4294901760
        %v1468 = vsub.f32 %v1466, %v1467
        %v1469 = vand.u32 %v1468, 4294901760
        %1470 = vmatprep.subr.mxu0 %v1469
        %v1471 = vand.u32 %v170, 4294901760
        %v1472 = vsub.f32 %v170, %v1471
        %v1473 = vand.u32 %v1472, 4294901760
        %v1474 = vsub.f32 %v1472, %v1473
        %v1475 = vand.u32 %v1474, 4294901760
        %1476 = vmatpush1.msra.mxu0 %v1475
        %1477 = vmatprep.subr.mxu0 0.0
        %1478 = vmatpush2.msra.mxu0 0.0
        %1479 = vmatprep.subr.mxu0 0.0
        %1480 = vmatpush2.msra.mxu0 0.0
        %1481 = vmatprep.subr.mxu0 0.0
        %1482 = vmatpush2.msra.mxu0 0.0
        %1483 = vmatprep.subr.mxu0 0.0
        %1484 = vmatpush2.msra.mxu0 0.0
        %1485 = vmatprep.subr.mxu0 0.0
        %1486 = vmatpush2.msra.mxu0 0.0
        %1487 = vmatprep.subr.mxu0 0.0
        %1488 = vmatpush2.msra.mxu0 0.0
        %1489 = vmatprep.subr.mxu0 0.0
        %1490 = vmatpush2.msra.mxu0 0.0
        %1491 = vmatprep.subr.mxu0 0.0
        %1492 = vmatpush2.msra.mxu0 0.0
        %1493 = vmatprep.subr.mxu0 0.0
        %1494 = vmatpush2.msra.mxu0 0.0
        %1495 = vmatprep.subr.mxu0 0.0
        %1496 = vmatpush2.msra.mxu0 0.0
        %1497 = vmatprep.subr.mxu0 0.0
        %1498 = vmatpush2.msra.mxu0 0.0
        %1499 = vmatprep.subr.mxu0 0.0
        %1500 = vmatpush2.msra.mxu0 0.0
        %1501 = vmatprep.subr.mxu0 0.0
        %1502 = vmatpush2.msra.mxu0 0.0
        %1503 = vmatprep.subr.mxu0 0.0
        %1504 = vmatpush2.msra.mxu0 0.0
        %1505 = vmatprep.subr.mxu0 0.0
        %1506 = vmatpush2.msra.mxu0 0.0
        %1507 = vmatprep.subr.mxu0 0.0
        %1508 = vmatpush2.msra.mxu0 0.0
        %1509 = vmatprep.mubr.f32.mxu0 0.0
        %v1510 = vand.u32 %v233, 4294901760
        %1511 = vmatmul.mubr.f32.gmra.mxu0 %v1510
        %v1512 = vpop.f32.mrf.mxu0
        %v1513 = vadd.f32 %v1401, %v1512
        %v1514 = vpop.f32.mrf.mxu0
        %v1515 = vadd.f32 %v1403, %v1514
        %1516 = vdwg.mxu0
        %1517 = vmatprep.subr.mxu0 0.0
        %1518 = vmatpush1.msra.mxu0 0.0
        %1519 = vmatprep.subr.mxu0 0.0
        %1520 = vmatpush1.msra.mxu0 0.0
        %1521 = vmatprep.subr.mxu0 0.0
        %1522 = vmatpush1.msra.mxu0 0.0
        %1523 = vmatprep.subr.mxu0 0.0
        %1524 = vmatpush1.msra.mxu0 0.0
        %1525 = vmatprep.subr.mxu0 0.0
        %1526 = vmatpush1.msra.mxu0 0.0
        %1527 = vmatprep.subr.mxu0 0.0
        %1528 = vmatpush1.msra.mxu0 0.0
        %1529 = vmatprep.subr.mxu0 0.0
        %1530 = vmatpush1.msra.mxu0 0.0
        %1531 = vmatprep.subr.mxu0 0.0
        %1532 = vmatpush1.msra.mxu0 0.0
        %1533 = vmatprep.subr.mxu0 0.0
        %1534 = vmatpush1.msra.mxu0 0.0
        %1535 = vmatprep.subr.mxu0 0.0
        %1536 = vmatpush1.msra.mxu0 0.0
        %1537 = vmatprep.subr.mxu0 0.0
        %1538 = vmatpush1.msra.mxu0 0.0
        %1539 = vmatprep.subr.mxu0 0.0
        %1540 = vmatpush1.msra.mxu0 0.0
        %v1541 = vand.u32 %v219, 4294901760
        %v1542 = vsub.f32 %v219, %v1541
        %1543 = vmatprep.subr.mxu0 %v1542
        %v1544 = vand.u32 %v218, 4294901760
        %v1545 = vsub.f32 %v218, %v1544
        %1546 = vmatpush1.msra.mxu0 %v1545
        %v1547 = vand.u32 %v203, 4294901760
        %v1548 = vsub.f32 %v203, %v1547
        %1549 = vmatprep.subr.mxu0 %v1548
        %v1550 = vand.u32 %v202, 4294901760
        %v1551 = vsub.f32 %v202, %v1550
        %1552 = vmatpush1.msra.mxu0 %v1551
        %v1553 = vand.u32 %v187, 4294901760
        %v1554 = vsub.f32 %v187, %v1553
        %1555 = vmatprep.subr.mxu0 %v1554
        %v1556 = vand.u32 %v186, 4294901760
        %v1557 = vsub.f32 %v186, %v1556
        %1558 = vmatpush1.msra.mxu0 %v1557
        %v1559 = vand.u32 %v171, 4294901760
        %v1560 = vsub.f32 %v171, %v1559
        %1561 = vmatprep.subr.mxu0 %v1560
        %v1562 = vand.u32 %v170, 4294901760
        %v1563 = vsub.f32 %v170, %v1562
        %1564 = vmatpush1.msra.mxu0 %v1563
        %1565 = vmatprep.subr.mxu0 0.0
        %1566 = vmatpush2.msra.mxu0 0.0
        %1567 = vmatprep.subr.mxu0 0.0
        %1568 = vmatpush2.msra.mxu0 0.0
        %1569 = vmatprep.subr.mxu0 0.0
        %1570 = vmatpush2.msra.mxu0 0.0
        %1571 = vmatprep.subr.mxu0 0.0
        %1572 = vmatpush2.msra.mxu0 0.0
        %1573 = vmatprep.subr.mxu0 0.0
        %1574 = vmatpush2.msra.mxu0 0.0
        %1575 = vmatprep.subr.mxu0 0.0
        %1576 = vmatpush2.msra.mxu0 0.0
        %1577 = vmatprep.subr.mxu0 0.0
        %1578 = vmatpush2.msra.mxu0 0.0
        %1579 = vmatprep.subr.mxu0 0.0
        %1580 = vmatpush2.msra.mxu0 0.0
        %1581 = vmatprep.subr.mxu0 0.0
        %1582 = vmatpush2.msra.mxu0 0.0
        %1583 = vmatprep.subr.mxu0 0.0
        %1584 = vmatpush2.msra.mxu0 0.0
        %1585 = vmatprep.subr.mxu0 0.0
        %1586 = vmatpush2.msra.mxu0 0.0
        %1587 = vmatprep.subr.mxu0 0.0
        %1588 = vmatpush2.msra.mxu0 0.0
        %1589 = vmatprep.subr.mxu0 0.0
        %1590 = vmatpush2.msra.mxu0 0.0
        %1591 = vmatprep.subr.mxu0 0.0
        %1592 = vmatpush2.msra.mxu0 0.0
        %1593 = vmatprep.subr.mxu0 0.0
        %1594 = vmatpush2.msra.mxu0 0.0
        %1595 = vmatprep.subr.mxu0 0.0
        %1596 = vmatpush2.msra.mxu0 0.0
        %1597 = vmatprep.mubr.f32.mxu0 0.0
        %v1598 = vand.u32 %v233, 4294901760
        %v1599 = vsub.f32 %v233, %v1598
        %1600 = vmatmul.mubr.f32.gmra.mxu0 %v1599
        %v1601 = vpop.f32.mrf.mxu0
        %v1602 = vadd.f32 %v1513, %v1601
        %v1603 = vpop.f32.mrf.mxu0
        %v1604 = vadd.f32 %v1515, %v1603
        %1605 = vdwg.mxu0
        %1606 = vmatprep.subr.mxu0 0.0
        %1607 = vmatpush1.msra.mxu0 0.0
        %1608 = vmatprep.subr.mxu0 0.0
        %1609 = vmatpush1.msra.mxu0 0.0
        %1610 = vmatprep.subr.mxu0 0.0
        %1611 = vmatpush1.msra.mxu0 0.0
        %1612 = vmatprep.subr.mxu0 0.0
        %1613 = vmatpush1.msra.mxu0 0.0
        %1614 = vmatprep.subr.mxu0 0.0
        %1615 = vmatpush1.msra.mxu0 0.0
        %1616 = vmatprep.subr.mxu0 0.0
        %1617 = vmatpush1.msra.mxu0 0.0
        %1618 = vmatprep.subr.mxu0 0.0
        %1619 = vmatpush1.msra.mxu0 0.0
        %1620 = vmatprep.subr.mxu0 0.0
        %1621 = vmatpush1.msra.mxu0 0.0
        %1622 = vmatprep.subr.mxu0 0.0
        %1623 = vmatpush1.msra.mxu0 0.0
        %1624 = vmatprep.subr.mxu0 0.0
        %1625 = vmatpush1.msra.mxu0 0.0
        %1626 = vmatprep.subr.mxu0 0.0
        %1627 = vmatpush1.msra.mxu0 0.0
        %1628 = vmatprep.subr.mxu0 0.0
        %1629 = vmatpush1.msra.mxu0 0.0
        %v1630 = vand.u32 %v219, 4294901760
        %1631 = vmatprep.subr.mxu0 %v1630
        %v1632 = vand.u32 %v218, 4294901760
        %1633 = vmatpush1.msra.mxu0 %v1632
        %v1634 = vand.u32 %v203, 4294901760
        %1635 = vmatprep.subr.mxu0 %v1634
        %v1636 = vand.u32 %v202, 4294901760
        %1637 = vmatpush1.msra.mxu0 %v1636
        %v1638 = vand.u32 %v187, 4294901760
        %1639 = vmatprep.subr.mxu0 %v1638
        %v1640 = vand.u32 %v186, 4294901760
        %1641 = vmatpush1.msra.mxu0 %v1640
        %v1642 = vand.u32 %v171, 4294901760
        %1643 = vmatprep.subr.mxu0 %v1642
        %v1644 = vand.u32 %v170, 4294901760
        %1645 = vmatpush1.msra.mxu0 %v1644
        %1646 = vmatprep.subr.mxu0 0.0
        %1647 = vmatpush2.msra.mxu0 0.0
        %1648 = vmatprep.subr.mxu0 0.0
        %1649 = vmatpush2.msra.mxu0 0.0
        %1650 = vmatprep.subr.mxu0 0.0
        %1651 = vmatpush2.msra.mxu0 0.0
        %1652 = vmatprep.subr.mxu0 0.0
        %1653 = vmatpush2.msra.mxu0 0.0
        %1654 = vmatprep.subr.mxu0 0.0
        %1655 = vmatpush2.msra.mxu0 0.0
        %1656 = vmatprep.subr.mxu0 0.0
        %1657 = vmatpush2.msra.mxu0 0.0
        %1658 = vmatprep.subr.mxu0 0.0
        %1659 = vmatpush2.msra.mxu0 0.0
        %1660 = vmatprep.subr.mxu0 0.0
        %1661 = vmatpush2.msra.mxu0 0.0
        %1662 = vmatprep.subr.mxu0 0.0
        %1663 = vmatpush2.msra.mxu0 0.0
        %1664 = vmatprep.subr.mxu0 0.0
        %1665 = vmatpush2.msra.mxu0 0.0
        %1666 = vmatprep.subr.mxu0 0.0
        %1667 = vmatpush2.msra.mxu0 0.0
        %1668 = vmatprep.subr.mxu0 0.0
        %1669 = vmatpush2.msra.mxu0 0.0
        %1670 = vmatprep.subr.mxu0 0.0
        %1671 = vmatpush2.msra.mxu0 0.0
        %1672 = vmatprep.subr.mxu0 0.0
        %1673 = vmatpush2.msra.mxu0 0.0
        %1674 = vmatprep.subr.mxu0 0.0
        %1675 = vmatpush2.msra.mxu0 0.0
        %1676 = vmatprep.subr.mxu0 0.0
        %1677 = vmatpush2.msra.mxu0 0.0
        %1678 = vmatprep.mubr.f32.mxu0 0.0
        %v1679 = vand.u32 %v233, 4294901760
        %v1680 = vsub.f32 %v233, %v1679
        %v1681 = vand.u32 %v1680, 4294901760
        %1682 = vmatmul.mubr.f32.gmra.mxu0 %v1681
        %v1683 = vpop.f32.mrf.mxu0
        %v1684 = vadd.f32 %v1602, %v1683
        %v1685 = vpop.f32.mrf.mxu0
        %v1686 = vadd.f32 %v1604, %v1685
        %1687 = vdwg.mxu0
        %1688 = vmatprep.subr.mxu0 0.0
        %1689 = vmatpush1.msra.mxu0 0.0
        %1690 = vmatprep.subr.mxu0 0.0
        %1691 = vmatpush1.msra.mxu0 0.0
        %1692 = vmatprep.subr.mxu0 0.0
        %1693 = vmatpush1.msra.mxu0 0.0
        %1694 = vmatprep.subr.mxu0 0.0
        %1695 = vmatpush1.msra.mxu0 0.0
        %1696 = vmatprep.subr.mxu0 0.0
        %1697 = vmatpush1.msra.mxu0 0.0
        %1698 = vmatprep.subr.mxu0 0.0
        %1699 = vmatpush1.msra.mxu0 0.0
        %1700 = vmatprep.subr.mxu0 0.0
        %1701 = vmatpush1.msra.mxu0 0.0
        %1702 = vmatprep.subr.mxu0 0.0
        %1703 = vmatpush1.msra.mxu0 0.0
        %1704 = vmatprep.subr.mxu0 0.0
        %1705 = vmatpush1.msra.mxu0 0.0
        %1706 = vmatprep.subr.mxu0 0.0
        %1707 = vmatpush1.msra.mxu0 0.0
        %1708 = vmatprep.subr.mxu0 0.0
        %1709 = vmatpush1.msra.mxu0 0.0
        %1710 = vmatprep.subr.mxu0 0.0
        %1711 = vmatpush1.msra.mxu0 0.0
        %v1712 = vand.u32 %v219, 4294901760
        %v1713 = vsub.f32 %v219, %v1712
        %v1714 = vand.u32 %v1713, 4294901760
        %1715 = vmatprep.subr.mxu0 %v1714
        %v1716 = vand.u32 %v218, 4294901760
        %v1717 = vsub.f32 %v218, %v1716
        %v1718 = vand.u32 %v1717, 4294901760
        %1719 = vmatpush1.msra.mxu0 %v1718
        %v1720 = vand.u32 %v203, 4294901760
        %v1721 = vsub.f32 %v203, %v1720
        %v1722 = vand.u32 %v1721, 4294901760
        %1723 = vmatprep.subr.mxu0 %v1722
        %v1724 = vand.u32 %v202, 4294901760
        %v1725 = vsub.f32 %v202, %v1724
        %v1726 = vand.u32 %v1725, 4294901760
        %1727 = vmatpush1.msra.mxu0 %v1726
        %v1728 = vand.u32 %v187, 4294901760
        %v1729 = vsub.f32 %v187, %v1728
        %v1730 = vand.u32 %v1729, 4294901760
        %1731 = vmatprep.subr.mxu0 %v1730
        %v1732 = vand.u32 %v186, 4294901760
        %v1733 = vsub.f32 %v186, %v1732
        %v1734 = vand.u32 %v1733, 4294901760
        %1735 = vmatpush1.msra.mxu0 %v1734
        %v1736 = vand.u32 %v171, 4294901760
        %v1737 = vsub.f32 %v171, %v1736
        %v1738 = vand.u32 %v1737, 4294901760
        %1739 = vmatprep.subr.mxu0 %v1738
        %v1740 = vand.u32 %v170, 4294901760
        %v1741 = vsub.f32 %v170, %v1740
        %v1742 = vand.u32 %v1741, 4294901760
        %1743 = vmatpush1.msra.mxu0 %v1742
        %1744 = vmatprep.subr.mxu0 0.0
        %1745 = vmatpush2.msra.mxu0 0.0
        %1746 = vmatprep.subr.mxu0 0.0
        %1747 = vmatpush2.msra.mxu0 0.0
        %1748 = vmatprep.subr.mxu0 0.0
        %1749 = vmatpush2.msra.mxu0 0.0
        %1750 = vmatprep.subr.mxu0 0.0
        %1751 = vmatpush2.msra.mxu0 0.0
        %1752 = vmatprep.subr.mxu0 0.0
        %1753 = vmatpush2.msra.mxu0 0.0
        %1754 = vmatprep.subr.mxu0 0.0
        %1755 = vmatpush2.msra.mxu0 0.0
        %1756 = vmatprep.subr.mxu0 0.0
        %1757 = vmatpush2.msra.mxu0 0.0
        %1758 = vmatprep.subr.mxu0 0.0
        %1759 = vmatpush2.msra.mxu0 0.0
        %1760 = vmatprep.subr.mxu0 0.0
        %1761 = vmatpush2.msra.mxu0 0.0
        %1762 = vmatprep.subr.mxu0 0.0
        %1763 = vmatpush2.msra.mxu0 0.0
        %1764 = vmatprep.subr.mxu0 0.0
        %1765 = vmatpush2.msra.mxu0 0.0
        %1766 = vmatprep.subr.mxu0 0.0
        %1767 = vmatpush2.msra.mxu0 0.0
        %1768 = vmatprep.subr.mxu0 0.0
        %1769 = vmatpush2.msra.mxu0 0.0
        %1770 = vmatprep.subr.mxu0 0.0
        %1771 = vmatpush2.msra.mxu0 0.0
        %1772 = vmatprep.subr.mxu0 0.0
        %1773 = vmatpush2.msra.mxu0 0.0
        %1774 = vmatprep.subr.mxu0 0.0
        %1775 = vmatpush2.msra.mxu0 0.0
        %1776 = vmatprep.mubr.f32.mxu0 0.0
        %v1777 = vand.u32 %v233, 4294901760
        %1778 = vmatmul.mubr.f32.gmra.mxu0 %v1777
        %v1779 = vpop.f32.mrf.mxu0
        %v1780 = vadd.f32 %v1684, %v1779
        %v1781 = vpop.f32.mrf.mxu0
        %v1782 = vadd.f32 %v1686, %v1781
        %1783 = vdwg.mxu0
        %1784 = vmatprep.subr.mxu0 0.0
        %1785 = vmatpush1.msra.mxu0 0.0
        %1786 = vmatprep.subr.mxu0 0.0
        %1787 = vmatpush1.msra.mxu0 0.0
        %1788 = vmatprep.subr.mxu0 0.0
        %1789 = vmatpush1.msra.mxu0 0.0
        %1790 = vmatprep.subr.mxu0 0.0
        %1791 = vmatpush1.msra.mxu0 0.0
        %1792 = vmatprep.subr.mxu0 0.0
        %1793 = vmatpush1.msra.mxu0 0.0
        %1794 = vmatprep.subr.mxu0 0.0
        %1795 = vmatpush1.msra.mxu0 0.0
        %1796 = vmatprep.subr.mxu0 0.0
        %1797 = vmatpush1.msra.mxu0 0.0
        %1798 = vmatprep.subr.mxu0 0.0
        %1799 = vmatpush1.msra.mxu0 0.0
        %1800 = vmatprep.subr.mxu0 0.0
        %1801 = vmatpush1.msra.mxu0 0.0
        %1802 = vmatprep.subr.mxu0 0.0
        %1803 = vmatpush1.msra.mxu0 0.0
        %1804 = vmatprep.subr.mxu0 0.0
        %1805 = vmatpush1.msra.mxu0 0.0
        %1806 = vmatprep.subr.mxu0 0.0
        %1807 = vmatpush1.msra.mxu0 0.0
        %v1808 = vand.u32 %v219, 4294901760
        %1809 = vmatprep.subr.mxu0 %v1808
        %v1810 = vand.u32 %v218, 4294901760
        %1811 = vmatpush1.msra.mxu0 %v1810
        %v1812 = vand.u32 %v203, 4294901760
        %1813 = vmatprep.subr.mxu0 %v1812
        %v1814 = vand.u32 %v202, 4294901760
        %1815 = vmatpush1.msra.mxu0 %v1814
        %v1816 = vand.u32 %v187, 4294901760
        %1817 = vmatprep.subr.mxu0 %v1816
        %v1818 = vand.u32 %v186, 4294901760
        %1819 = vmatpush1.msra.mxu0 %v1818
        %v1820 = vand.u32 %v171, 4294901760
        %1821 = vmatprep.subr.mxu0 %v1820
        %v1822 = vand.u32 %v170, 4294901760
        %1823 = vmatpush1.msra.mxu0 %v1822
        %1824 = vmatprep.subr.mxu0 0.0
        %1825 = vmatpush2.msra.mxu0 0.0
        %1826 = vmatprep.subr.mxu0 0.0
        %1827 = vmatpush2.msra.mxu0 0.0
        %1828 = vmatprep.subr.mxu0 0.0
        %1829 = vmatpush2.msra.mxu0 0.0
        %1830 = vmatprep.subr.mxu0 0.0
        %1831 = vmatpush2.msra.mxu0 0.0
        %1832 = vmatprep.subr.mxu0 0.0
        %1833 = vmatpush2.msra.mxu0 0.0
        %1834 = vmatprep.subr.mxu0 0.0
        %1835 = vmatpush2.msra.mxu0 0.0
        %1836 = vmatprep.subr.mxu0 0.0
        %1837 = vmatpush2.msra.mxu0 0.0
        %1838 = vmatprep.subr.mxu0 0.0
        %1839 = vmatpush2.msra.mxu0 0.0
        %1840 = vmatprep.subr.mxu0 0.0
        %1841 = vmatpush2.msra.mxu0 0.0
        %1842 = vmatprep.subr.mxu0 0.0
        %1843 = vmatpush2.msra.mxu0 0.0
        %1844 = vmatprep.subr.mxu0 0.0
        %1845 = vmatpush2.msra.mxu0 0.0
        %1846 = vmatprep.subr.mxu0 0.0
        %1847 = vmatpush2.msra.mxu0 0.0
        %1848 = vmatprep.subr.mxu0 0.0
        %1849 = vmatpush2.msra.mxu0 0.0
        %1850 = vmatprep.subr.mxu0 0.0
        %1851 = vmatpush2.msra.mxu0 0.0
        %1852 = vmatprep.subr.mxu0 0.0
        %1853 = vmatpush2.msra.mxu0 0.0
        %1854 = vmatprep.subr.mxu0 0.0
        %1855 = vmatpush2.msra.mxu0 0.0
        %1856 = vmatprep.mubr.f32.mxu0 0.0
        %v1857 = vand.u32 %v233, 4294901760
        %1858 = vmatmul.mubr.f32.gmra.mxu0 %v1857
        %v1859 = vpop.f32.mrf.mxu0
        %v1860 = vadd.f32 %v1780, %v1859
        %v1861 = vpop.f32.mrf.mxu0
        %v1862 = vadd.f32 %v1782, %v1861
        %1863 = vdwg.mxu0
        %1864 = vmatprep.subr.mxu0 0.0
        %1865 = vmatpush1.msra.mxu0 0.0
        %1866 = vmatprep.subr.mxu0 0.0
        %1867 = vmatpush1.msra.mxu0 0.0
        %1868 = vmatprep.subr.mxu0 0.0
        %1869 = vmatpush1.msra.mxu0 0.0
        %1870 = vmatprep.subr.mxu0 0.0
        %1871 = vmatpush1.msra.mxu0 0.0
        %1872 = vmatprep.subr.mxu0 0.0
        %1873 = vmatpush1.msra.mxu0 0.0
        %1874 = vmatprep.subr.mxu0 0.0
        %1875 = vmatpush1.msra.mxu0 0.0
        %1876 = vmatprep.subr.mxu0 0.0
        %1877 = vmatpush1.msra.mxu0 0.0
        %1878 = vmatprep.subr.mxu0 0.0
        %1879 = vmatpush1.msra.mxu0 0.0
        %1880 = vmatprep.subr.mxu0 0.0
        %1881 = vmatpush1.msra.mxu0 0.0
        %1882 = vmatprep.subr.mxu0 0.0
        %1883 = vmatpush1.msra.mxu0 0.0
        %1884 = vmatprep.subr.mxu0 0.0
        %1885 = vmatpush1.msra.mxu0 0.0
        %1886 = vmatprep.subr.mxu0 0.0
        %1887 = vmatpush1.msra.mxu0 0.0
        %v1888 = vand.u32 %v221, 4294901760
        %1889 = vmatprep.subr.mxu0 %v1888
        %v1890 = vand.u32 %v220, 4294901760
        %1891 = vmatpush1.msra.mxu0 %v1890
        %v1892 = vand.u32 %v205, 4294901760
        %1893 = vmatprep.subr.mxu0 %v1892
        %v1894 = vand.u32 %v204, 4294901760
        %1895 = vmatpush1.msra.mxu0 %v1894
        %v1896 = vand.u32 %v189, 4294901760
        %1897 = vmatprep.subr.mxu0 %v1896
        %v1898 = vand.u32 %v188, 4294901760
        %1899 = vmatpush1.msra.mxu0 %v1898
        %v1900 = vand.u32 %v173, 4294901760
        %1901 = vmatprep.subr.mxu0 %v1900
        %v1902 = vand.u32 %v172, 4294901760
        %1903 = vmatpush1.msra.mxu0 %v1902
        %1904 = vmatprep.subr.mxu0 0.0
        %1905 = vmatpush2.msra.mxu0 0.0
        %1906 = vmatprep.subr.mxu0 0.0
        %1907 = vmatpush2.msra.mxu0 0.0
        %1908 = vmatprep.subr.mxu0 0.0
        %1909 = vmatpush2.msra.mxu0 0.0
        %1910 = vmatprep.subr.mxu0 0.0
        %1911 = vmatpush2.msra.mxu0 0.0
        %1912 = vmatprep.subr.mxu0 0.0
        %1913 = vmatpush2.msra.mxu0 0.0
        %1914 = vmatprep.subr.mxu0 0.0
        %1915 = vmatpush2.msra.mxu0 0.0
        %1916 = vmatprep.subr.mxu0 0.0
        %1917 = vmatpush2.msra.mxu0 0.0
        %1918 = vmatprep.subr.mxu0 0.0
        %1919 = vmatpush2.msra.mxu0 0.0
        %1920 = vmatprep.subr.mxu0 0.0
        %1921 = vmatpush2.msra.mxu0 0.0
        %1922 = vmatprep.subr.mxu0 0.0
        %1923 = vmatpush2.msra.mxu0 0.0
        %1924 = vmatprep.subr.mxu0 0.0
        %1925 = vmatpush2.msra.mxu0 0.0
        %1926 = vmatprep.subr.mxu0 0.0
        %1927 = vmatpush2.msra.mxu0 0.0
        %1928 = vmatprep.subr.mxu0 0.0
        %1929 = vmatpush2.msra.mxu0 0.0
        %1930 = vmatprep.subr.mxu0 0.0
        %1931 = vmatpush2.msra.mxu0 0.0
        %1932 = vmatprep.subr.mxu0 0.0
        %1933 = vmatpush2.msra.mxu0 0.0
        %1934 = vmatprep.subr.mxu0 0.0
        %1935 = vmatpush2.msra.mxu0 0.0
        %1936 = vmatprep.mubr.f32.mxu0 0.0
        %v1937 = vand.u32 %v233, 4294901760
        %v1938 = vsub.f32 %v233, %v1937
        %v1939 = vand.u32 %v1938, 4294901760
        %v1940 = vsub.f32 %v1938, %v1939
        %v1941 = vand.u32 %v1940, 4294901760
        %1942 = vmatmul.mubr.f32.gmra.mxu0 %v1941
        %v1943 = vpop.f32.mrf.mxu0
        %v1944 = vadd.f32 0.0, %v1943
        %v1945 = vpop.f32.mrf.mxu0
        %v1946 = vadd.f32 0.0, %v1945
        %1947 = vdwg.mxu0
        %1948 = vmatprep.subr.mxu0 0.0
        %1949 = vmatpush1.msra.mxu0 0.0
        %1950 = vmatprep.subr.mxu0 0.0
        %1951 = vmatpush1.msra.mxu0 0.0
        %1952 = vmatprep.subr.mxu0 0.0
        %1953 = vmatpush1.msra.mxu0 0.0
        %1954 = vmatprep.subr.mxu0 0.0
        %1955 = vmatpush1.msra.mxu0 0.0
        %1956 = vmatprep.subr.mxu0 0.0
        %1957 = vmatpush1.msra.mxu0 0.0
        %1958 = vmatprep.subr.mxu0 0.0
        %1959 = vmatpush1.msra.mxu0 0.0
        %1960 = vmatprep.subr.mxu0 0.0
        %1961 = vmatpush1.msra.mxu0 0.0
        %1962 = vmatprep.subr.mxu0 0.0
        %1963 = vmatpush1.msra.mxu0 0.0
        %1964 = vmatprep.subr.mxu0 0.0
        %1965 = vmatpush1.msra.mxu0 0.0
        %1966 = vmatprep.subr.mxu0 0.0
        %1967 = vmatpush1.msra.mxu0 0.0
        %1968 = vmatprep.subr.mxu0 0.0
        %1969 = vmatpush1.msra.mxu0 0.0
        %1970 = vmatprep.subr.mxu0 0.0
        %1971 = vmatpush1.msra.mxu0 0.0
        %v1972 = vand.u32 %v221, 4294901760
        %v1973 = vsub.f32 %v221, %v1972
        %v1974 = vand.u32 %v1973, 4294901760
        %v1975 = vsub.f32 %v1973, %v1974
        %v1976 = vand.u32 %v1975, 4294901760
        %1977 = vmatprep.subr.mxu0 %v1976
        %v1978 = vand.u32 %v220, 4294901760
        %v1979 = vsub.f32 %v220, %v1978
        %v1980 = vand.u32 %v1979, 4294901760
        %v1981 = vsub.f32 %v1979, %v1980
        %v1982 = vand.u32 %v1981, 4294901760
        %1983 = vmatpush1.msra.mxu0 %v1982
        %v1984 = vand.u32 %v205, 4294901760
        %v1985 = vsub.f32 %v205, %v1984
        %v1986 = vand.u32 %v1985, 4294901760
        %v1987 = vsub.f32 %v1985, %v1986
        %v1988 = vand.u32 %v1987, 4294901760
        %1989 = vmatprep.subr.mxu0 %v1988
        %v1990 = vand.u32 %v204, 4294901760
        %v1991 = vsub.f32 %v204, %v1990
        %v1992 = vand.u32 %v1991, 4294901760
        %v1993 = vsub.f32 %v1991, %v1992
        %v1994 = vand.u32 %v1993, 4294901760
        %1995 = vmatpush1.msra.mxu0 %v1994
        %v1996 = vand.u32 %v189, 4294901760
        %v1997 = vsub.f32 %v189, %v1996
        %v1998 = vand.u32 %v1997, 4294901760
        %v1999 = vsub.f32 %v1997, %v1998
        %v2000 = vand.u32 %v1999, 4294901760
        %2001 = vmatprep.subr.mxu0 %v2000
        %v2002 = vand.u32 %v188, 4294901760
        %v2003 = vsub.f32 %v188, %v2002
        %v2004 = vand.u32 %v2003, 4294901760
        %v2005 = vsub.f32 %v2003, %v2004
        %v2006 = vand.u32 %v2005, 4294901760
        %2007 = vmatpush1.msra.mxu0 %v2006
        %v2008 = vand.u32 %v173, 4294901760
        %v2009 = vsub.f32 %v173, %v2008
        %v2010 = vand.u32 %v2009, 4294901760
        %v2011 = vsub.f32 %v2009, %v2010
        %v2012 = vand.u32 %v2011, 4294901760
        %2013 = vmatprep.subr.mxu0 %v2012
        %v2014 = vand.u32 %v172, 4294901760
        %v2015 = vsub.f32 %v172, %v2014
        %v2016 = vand.u32 %v2015, 4294901760
        %v2017 = vsub.f32 %v2015, %v2016
        %v2018 = vand.u32 %v2017, 4294901760
        %2019 = vmatpush1.msra.mxu0 %v2018
        %2020 = vmatprep.subr.mxu0 0.0
        %2021 = vmatpush2.msra.mxu0 0.0
        %2022 = vmatprep.subr.mxu0 0.0
        %2023 = vmatpush2.msra.mxu0 0.0
        %2024 = vmatprep.subr.mxu0 0.0
        %2025 = vmatpush2.msra.mxu0 0.0
        %2026 = vmatprep.subr.mxu0 0.0
        %2027 = vmatpush2.msra.mxu0 0.0
        %2028 = vmatprep.subr.mxu0 0.0
        %2029 = vmatpush2.msra.mxu0 0.0
        %2030 = vmatprep.subr.mxu0 0.0
        %2031 = vmatpush2.msra.mxu0 0.0
        %2032 = vmatprep.subr.mxu0 0.0
        %2033 = vmatpush2.msra.mxu0 0.0
        %2034 = vmatprep.subr.mxu0 0.0
        %2035 = vmatpush2.msra.mxu0 0.0
        %2036 = vmatprep.subr.mxu0 0.0
        %2037 = vmatpush2.msra.mxu0 0.0
        %2038 = vmatprep.subr.mxu0 0.0
        %2039 = vmatpush2.msra.mxu0 0.0
        %2040 = vmatprep.subr.mxu0 0.0
        %2041 = vmatpush2.msra.mxu0 0.0
        %2042 = vmatprep.subr.mxu0 0.0
        %2043 = vmatpush2.msra.mxu0 0.0
        %2044 = vmatprep.subr.mxu0 0.0
        %2045 = vmatpush2.msra.mxu0 0.0
        %2046 = vmatprep.subr.mxu0 0.0
        %2047 = vmatpush2.msra.mxu0 0.0
        %2048 = vmatprep.subr.mxu0 0.0
        %2049 = vmatpush2.msra.mxu0 0.0
        %2050 = vmatprep.subr.mxu0 0.0
        %2051 = vmatpush2.msra.mxu0 0.0
        %2052 = vmatprep.mubr.f32.mxu0 0.0
        %v2053 = vand.u32 %v233, 4294901760
        %2054 = vmatmul.mubr.f32.gmra.mxu0 %v2053
        %v2055 = vpop.f32.mrf.mxu0
        %v2056 = vadd.f32 %v1944, %v2055
        %v2057 = vpop.f32.mrf.mxu0
        %v2058 = vadd.f32 %v1946, %v2057
        %2059 = vdwg.mxu0
        %2060 = vmatprep.subr.mxu0 0.0
        %2061 = vmatpush1.msra.mxu0 0.0
        %2062 = vmatprep.subr.mxu0 0.0
        %2063 = vmatpush1.msra.mxu0 0.0
        %2064 = vmatprep.subr.mxu0 0.0
        %2065 = vmatpush1.msra.mxu0 0.0
        %2066 = vmatprep.subr.mxu0 0.0
        %2067 = vmatpush1.msra.mxu0 0.0
        %2068 = vmatprep.subr.mxu0 0.0
        %2069 = vmatpush1.msra.mxu0 0.0
        %2070 = vmatprep.subr.mxu0 0.0
        %2071 = vmatpush1.msra.mxu0 0.0
        %2072 = vmatprep.subr.mxu0 0.0
        %2073 = vmatpush1.msra.mxu0 0.0
        %2074 = vmatprep.subr.mxu0 0.0
        %2075 = vmatpush1.msra.mxu0 0.0
        %2076 = vmatprep.subr.mxu0 0.0
        %2077 = vmatpush1.msra.mxu0 0.0
        %2078 = vmatprep.subr.mxu0 0.0
        %2079 = vmatpush1.msra.mxu0 0.0
        %2080 = vmatprep.subr.mxu0 0.0
        %2081 = vmatpush1.msra.mxu0 0.0
        %2082 = vmatprep.subr.mxu0 0.0
        %2083 = vmatpush1.msra.mxu0 0.0
        %v2084 = vand.u32 %v221, 4294901760
        %v2085 = vsub.f32 %v221, %v2084
        %2086 = vmatprep.subr.mxu0 %v2085
        %v2087 = vand.u32 %v220, 4294901760
        %v2088 = vsub.f32 %v220, %v2087
        %2089 = vmatpush1.msra.mxu0 %v2088
        %v2090 = vand.u32 %v205, 4294901760
        %v2091 = vsub.f32 %v205, %v2090
        %2092 = vmatprep.subr.mxu0 %v2091
        %v2093 = vand.u32 %v204, 4294901760
        %v2094 = vsub.f32 %v204, %v2093
        %2095 = vmatpush1.msra.mxu0 %v2094
        %v2096 = vand.u32 %v189, 4294901760
        %v2097 = vsub.f32 %v189, %v2096
        %2098 = vmatprep.subr.mxu0 %v2097
        %v2099 = vand.u32 %v188, 4294901760
        %v2100 = vsub.f32 %v188, %v2099
        %2101 = vmatpush1.msra.mxu0 %v2100
        %v2102 = vand.u32 %v173, 4294901760
        %v2103 = vsub.f32 %v173, %v2102
        %2104 = vmatprep.subr.mxu0 %v2103
        %v2105 = vand.u32 %v172, 4294901760
        %v2106 = vsub.f32 %v172, %v2105
        %2107 = vmatpush1.msra.mxu0 %v2106
        %2108 = vmatprep.subr.mxu0 0.0
        %2109 = vmatpush2.msra.mxu0 0.0
        %2110 = vmatprep.subr.mxu0 0.0
        %2111 = vmatpush2.msra.mxu0 0.0
        %2112 = vmatprep.subr.mxu0 0.0
        %2113 = vmatpush2.msra.mxu0 0.0
        %2114 = vmatprep.subr.mxu0 0.0
        %2115 = vmatpush2.msra.mxu0 0.0
        %2116 = vmatprep.subr.mxu0 0.0
        %2117 = vmatpush2.msra.mxu0 0.0
        %2118 = vmatprep.subr.mxu0 0.0
        %2119 = vmatpush2.msra.mxu0 0.0
        %2120 = vmatprep.subr.mxu0 0.0
        %2121 = vmatpush2.msra.mxu0 0.0
        %2122 = vmatprep.subr.mxu0 0.0
        %2123 = vmatpush2.msra.mxu0 0.0
        %2124 = vmatprep.subr.mxu0 0.0
        %2125 = vmatpush2.msra.mxu0 0.0
        %2126 = vmatprep.subr.mxu0 0.0
        %2127 = vmatpush2.msra.mxu0 0.0
        %2128 = vmatprep.subr.mxu0 0.0
        %2129 = vmatpush2.msra.mxu0 0.0
        %2130 = vmatprep.subr.mxu0 0.0
        %2131 = vmatpush2.msra.mxu0 0.0
        %2132 = vmatprep.subr.mxu0 0.0
        %2133 = vmatpush2.msra.mxu0 0.0
        %2134 = vmatprep.subr.mxu0 0.0
        %2135 = vmatpush2.msra.mxu0 0.0
        %2136 = vmatprep.subr.mxu0 0.0
        %2137 = vmatpush2.msra.mxu0 0.0
        %2138 = vmatprep.subr.mxu0 0.0
        %2139 = vmatpush2.msra.mxu0 0.0
        %2140 = vmatprep.mubr.f32.mxu0 0.0
        %v2141 = vand.u32 %v233, 4294901760
        %v2142 = vsub.f32 %v233, %v2141
        %2143 = vmatmul.mubr.f32.gmra.mxu0 %v2142
        %v2144 = vpop.f32.mrf.mxu0
        %v2145 = vadd.f32 %v2056, %v2144
        %v2146 = vpop.f32.mrf.mxu0
        %v2147 = vadd.f32 %v2058, %v2146
        %2148 = vdwg.mxu0
        %2149 = vmatprep.subr.mxu0 0.0
        %2150 = vmatpush1.msra.mxu0 0.0
        %2151 = vmatprep.subr.mxu0 0.0
        %2152 = vmatpush1.msra.mxu0 0.0
        %2153 = vmatprep.subr.mxu0 0.0
        %2154 = vmatpush1.msra.mxu0 0.0
        %2155 = vmatprep.subr.mxu0 0.0
        %2156 = vmatpush1.msra.mxu0 0.0
        %2157 = vmatprep.subr.mxu0 0.0
        %2158 = vmatpush1.msra.mxu0 0.0
        %2159 = vmatprep.subr.mxu0 0.0
        %2160 = vmatpush1.msra.mxu0 0.0
        %2161 = vmatprep.subr.mxu0 0.0
        %2162 = vmatpush1.msra.mxu0 0.0
        %2163 = vmatprep.subr.mxu0 0.0
        %2164 = vmatpush1.msra.mxu0 0.0
        %2165 = vmatprep.subr.mxu0 0.0
        %2166 = vmatpush1.msra.mxu0 0.0
        %2167 = vmatprep.subr.mxu0 0.0
        %2168 = vmatpush1.msra.mxu0 0.0
        %2169 = vmatprep.subr.mxu0 0.0
        %2170 = vmatpush1.msra.mxu0 0.0
        %2171 = vmatprep.subr.mxu0 0.0
        %2172 = vmatpush1.msra.mxu0 0.0
        %v2173 = vand.u32 %v221, 4294901760
        %2174 = vmatprep.subr.mxu0 %v2173
        %v2175 = vand.u32 %v220, 4294901760
        %2176 = vmatpush1.msra.mxu0 %v2175
        %v2177 = vand.u32 %v205, 4294901760
        %2178 = vmatprep.subr.mxu0 %v2177
        %v2179 = vand.u32 %v204, 4294901760
        %2180 = vmatpush1.msra.mxu0 %v2179
        %v2181 = vand.u32 %v189, 4294901760
        %2182 = vmatprep.subr.mxu0 %v2181
        %v2183 = vand.u32 %v188, 4294901760
        %2184 = vmatpush1.msra.mxu0 %v2183
        %v2185 = vand.u32 %v173, 4294901760
        %2186 = vmatprep.subr.mxu0 %v2185
        %v2187 = vand.u32 %v172, 4294901760
        %2188 = vmatpush1.msra.mxu0 %v2187
        %2189 = vmatprep.subr.mxu0 0.0
        %2190 = vmatpush2.msra.mxu0 0.0
        %2191 = vmatprep.subr.mxu0 0.0
        %2192 = vmatpush2.msra.mxu0 0.0
        %2193 = vmatprep.subr.mxu0 0.0
        %2194 = vmatpush2.msra.mxu0 0.0
        %2195 = vmatprep.subr.mxu0 0.0
        %2196 = vmatpush2.msra.mxu0 0.0
        %2197 = vmatprep.subr.mxu0 0.0
        %2198 = vmatpush2.msra.mxu0 0.0
        %2199 = vmatprep.subr.mxu0 0.0
        %2200 = vmatpush2.msra.mxu0 0.0
        %2201 = vmatprep.subr.mxu0 0.0
        %2202 = vmatpush2.msra.mxu0 0.0
        %2203 = vmatprep.subr.mxu0 0.0
        %2204 = vmatpush2.msra.mxu0 0.0
        %2205 = vmatprep.subr.mxu0 0.0
        %2206 = vmatpush2.msra.mxu0 0.0
        %2207 = vmatprep.subr.mxu0 0.0
        %2208 = vmatpush2.msra.mxu0 0.0
        %2209 = vmatprep.subr.mxu0 0.0
        %2210 = vmatpush2.msra.mxu0 0.0
        %2211 = vmatprep.subr.mxu0 0.0
        %2212 = vmatpush2.msra.mxu0 0.0
        %2213 = vmatprep.subr.mxu0 0.0
        %2214 = vmatpush2.msra.mxu0 0.0
        %2215 = vmatprep.subr.mxu0 0.0
        %2216 = vmatpush2.msra.mxu0 0.0
        %2217 = vmatprep.subr.mxu0 0.0
        %2218 = vmatpush2.msra.mxu0 0.0
        %2219 = vmatprep.subr.mxu0 0.0
        %2220 = vmatpush2.msra.mxu0 0.0
        %2221 = vmatprep.mubr.f32.mxu0 0.0
        %v2222 = vand.u32 %v233, 4294901760
        %v2223 = vsub.f32 %v233, %v2222
        %v2224 = vand.u32 %v2223, 4294901760
        %2225 = vmatmul.mubr.f32.gmra.mxu0 %v2224
        %v2226 = vpop.f32.mrf.mxu0
        %v2227 = vadd.f32 %v2145, %v2226
        %v2228 = vpop.f32.mrf.mxu0
        %v2229 = vadd.f32 %v2147, %v2228
        %2230 = vdwg.mxu0
        %2231 = vmatprep.subr.mxu0 0.0
        %2232 = vmatpush1.msra.mxu0 0.0
        %2233 = vmatprep.subr.mxu0 0.0
        %2234 = vmatpush1.msra.mxu0 0.0
        %2235 = vmatprep.subr.mxu0 0.0
        %2236 = vmatpush1.msra.mxu0 0.0
        %2237 = vmatprep.subr.mxu0 0.0
        %2238 = vmatpush1.msra.mxu0 0.0
        %2239 = vmatprep.subr.mxu0 0.0
        %2240 = vmatpush1.msra.mxu0 0.0
        %2241 = vmatprep.subr.mxu0 0.0
        %2242 = vmatpush1.msra.mxu0 0.0
        %2243 = vmatprep.subr.mxu0 0.0
        %2244 = vmatpush1.msra.mxu0 0.0
        %2245 = vmatprep.subr.mxu0 0.0
        %2246 = vmatpush1.msra.mxu0 0.0
        %2247 = vmatprep.subr.mxu0 0.0
        %2248 = vmatpush1.msra.mxu0 0.0
        %2249 = vmatprep.subr.mxu0 0.0
        %2250 = vmatpush1.msra.mxu0 0.0
        %2251 = vmatprep.subr.mxu0 0.0
        %2252 = vmatpush1.msra.mxu0 0.0
        %2253 = vmatprep.subr.mxu0 0.0
        %2254 = vmatpush1.msra.mxu0 0.0
        %v2255 = vand.u32 %v221, 4294901760
        %v2256 = vsub.f32 %v221, %v2255
        %v2257 = vand.u32 %v2256, 4294901760
        %2258 = vmatprep.subr.mxu0 %v2257
        %v2259 = vand.u32 %v220, 4294901760
        %v2260 = vsub.f32 %v220, %v2259
        %v2261 = vand.u32 %v2260, 4294901760
        %2262 = vmatpush1.msra.mxu0 %v2261
        %v2263 = vand.u32 %v205, 4294901760
        %v2264 = vsub.f32 %v205, %v2263
        %v2265 = vand.u32 %v2264, 4294901760
        %2266 = vmatprep.subr.mxu0 %v2265
        %v2267 = vand.u32 %v204, 4294901760
        %v2268 = vsub.f32 %v204, %v2267
        %v2269 = vand.u32 %v2268, 4294901760
        %2270 = vmatpush1.msra.mxu0 %v2269
        %v2271 = vand.u32 %v189, 4294901760
        %v2272 = vsub.f32 %v189, %v2271
        %v2273 = vand.u32 %v2272, 4294901760
        %2274 = vmatprep.subr.mxu0 %v2273
        %v2275 = vand.u32 %v188, 4294901760
        %v2276 = vsub.f32 %v188, %v2275
        %v2277 = vand.u32 %v2276, 4294901760
        %2278 = vmatpush1.msra.mxu0 %v2277
        %v2279 = vand.u32 %v173, 4294901760
        %v2280 = vsub.f32 %v173, %v2279
        %v2281 = vand.u32 %v2280, 4294901760
        %2282 = vmatprep.subr.mxu0 %v2281
        %v2283 = vand.u32 %v172, 4294901760
        %v2284 = vsub.f32 %v172, %v2283
        %v2285 = vand.u32 %v2284, 4294901760
        %2286 = vmatpush1.msra.mxu0 %v2285
        %2287 = vmatprep.subr.mxu0 0.0
        %2288 = vmatpush2.msra.mxu0 0.0
        %2289 = vmatprep.subr.mxu0 0.0
        %2290 = vmatpush2.msra.mxu0 0.0
        %2291 = vmatprep.subr.mxu0 0.0
        %2292 = vmatpush2.msra.mxu0 0.0
        %2293 = vmatprep.subr.mxu0 0.0
        %2294 = vmatpush2.msra.mxu0 0.0
        %2295 = vmatprep.subr.mxu0 0.0
        %2296 = vmatpush2.msra.mxu0 0.0
        %2297 = vmatprep.subr.mxu0 0.0
        %2298 = vmatpush2.msra.mxu0 0.0
        %2299 = vmatprep.subr.mxu0 0.0
        %2300 = vmatpush2.msra.mxu0 0.0
        %2301 = vmatprep.subr.mxu0 0.0
        %2302 = vmatpush2.msra.mxu0 0.0
        %2303 = vmatprep.subr.mxu0 0.0
        %2304 = vmatpush2.msra.mxu0 0.0
        %2305 = vmatprep.subr.mxu0 0.0
        %2306 = vmatpush2.msra.mxu0 0.0
        %2307 = vmatprep.subr.mxu0 0.0
        %2308 = vmatpush2.msra.mxu0 0.0
        %2309 = vmatprep.subr.mxu0 0.0
        %2310 = vmatpush2.msra.mxu0 0.0
        %2311 = vmatprep.subr.mxu0 0.0
        %2312 = vmatpush2.msra.mxu0 0.0
        %2313 = vmatprep.subr.mxu0 0.0
        %2314 = vmatpush2.msra.mxu0 0.0
        %2315 = vmatprep.subr.mxu0 0.0
        %2316 = vmatpush2.msra.mxu0 0.0
        %2317 = vmatprep.subr.mxu0 0.0
        %2318 = vmatpush2.msra.mxu0 0.0
        %2319 = vmatprep.mubr.f32.mxu0 0.0
        %v2320 = vand.u32 %v233, 4294901760
        %2321 = vmatmul.mubr.f32.gmra.mxu0 %v2320
        %v2322 = vpop.f32.mrf.mxu0
        %v2323 = vadd.f32 %v2227, %v2322
        %v2324 = vpop.f32.mrf.mxu0
        %v2325 = vadd.f32 %v2229, %v2324
        %2326 = vdwg.mxu0
        %2327 = vmatprep.subr.mxu0 0.0
        %2328 = vmatpush1.msra.mxu0 0.0
        %2329 = vmatprep.subr.mxu0 0.0
        %2330 = vmatpush1.msra.mxu0 0.0
        %2331 = vmatprep.subr.mxu0 0.0
        %2332 = vmatpush1.msra.mxu0 0.0
        %2333 = vmatprep.subr.mxu0 0.0
        %2334 = vmatpush1.msra.mxu0 0.0
        %2335 = vmatprep.subr.mxu0 0.0
        %2336 = vmatpush1.msra.mxu0 0.0
        %2337 = vmatprep.subr.mxu0 0.0
        %2338 = vmatpush1.msra.mxu0 0.0
        %2339 = vmatprep.subr.mxu0 0.0
        %2340 = vmatpush1.msra.mxu0 0.0
        %2341 = vmatprep.subr.mxu0 0.0
        %2342 = vmatpush1.msra.mxu0 0.0
        %2343 = vmatprep.subr.mxu0 0.0
        %2344 = vmatpush1.msra.mxu0 0.0
        %2345 = vmatprep.subr.mxu0 0.0
        %2346 = vmatpush1.msra.mxu0 0.0
        %2347 = vmatprep.subr.mxu0 0.0
        %2348 = vmatpush1.msra.mxu0 0.0
        %2349 = vmatprep.subr.mxu0 0.0
        %2350 = vmatpush1.msra.mxu0 0.0
        %v2351 = vand.u32 %v221, 4294901760
        %2352 = vmatprep.subr.mxu0 %v2351
        %v2353 = vand.u32 %v220, 4294901760
        %2354 = vmatpush1.msra.mxu0 %v2353
        %v2355 = vand.u32 %v205, 4294901760
        %2356 = vmatprep.subr.mxu0 %v2355
        %v2357 = vand.u32 %v204, 4294901760
        %2358 = vmatpush1.msra.mxu0 %v2357
        %v2359 = vand.u32 %v189, 4294901760
        %2360 = vmatprep.subr.mxu0 %v2359
        %v2361 = vand.u32 %v188, 4294901760
        %2362 = vmatpush1.msra.mxu0 %v2361
        %v2363 = vand.u32 %v173, 4294901760
        %2364 = vmatprep.subr.mxu0 %v2363
        %v2365 = vand.u32 %v172, 4294901760
        %2366 = vmatpush1.msra.mxu0 %v2365
        %2367 = vmatprep.subr.mxu0 0.0
        %2368 = vmatpush2.msra.mxu0 0.0
        %2369 = vmatprep.subr.mxu0 0.0
        %2370 = vmatpush2.msra.mxu0 0.0
        %2371 = vmatprep.subr.mxu0 0.0
        %2372 = vmatpush2.msra.mxu0 0.0
        %2373 = vmatprep.subr.mxu0 0.0
        %2374 = vmatpush2.msra.mxu0 0.0
        %2375 = vmatprep.subr.mxu0 0.0
        %2376 = vmatpush2.msra.mxu0 0.0
        %2377 = vmatprep.subr.mxu0 0.0
        %2378 = vmatpush2.msra.mxu0 0.0
        %2379 = vmatprep.subr.mxu0 0.0
        %2380 = vmatpush2.msra.mxu0 0.0
        %2381 = vmatprep.subr.mxu0 0.0
        %2382 = vmatpush2.msra.mxu0 0.0
        %2383 = vmatprep.subr.mxu0 0.0
        %2384 = vmatpush2.msra.mxu0 0.0
        %2385 = vmatprep.subr.mxu0 0.0
        %2386 = vmatpush2.msra.mxu0 0.0
        %2387 = vmatprep.subr.mxu0 0.0
        %2388 = vmatpush2.msra.mxu0 0.0
        %2389 = vmatprep.subr.mxu0 0.0
        %2390 = vmatpush2.msra.mxu0 0.0
        %2391 = vmatprep.subr.mxu0 0.0
        %2392 = vmatpush2.msra.mxu0 0.0
        %2393 = vmatprep.subr.mxu0 0.0
        %2394 = vmatpush2.msra.mxu0 0.0
        %2395 = vmatprep.subr.mxu0 0.0
        %2396 = vmatpush2.msra.mxu0 0.0
        %2397 = vmatprep.subr.mxu0 0.0
        %2398 = vmatpush2.msra.mxu0 0.0
        %2399 = vmatprep.mubr.f32.mxu0 0.0
        %v2400 = vand.u32 %v233, 4294901760
        %2401 = vmatmul.mubr.f32.gmra.mxu0 %v2400
        %v2402 = vpop.f32.mrf.mxu0
        %v2403 = vadd.f32 %v2323, %v2402
        %v2404 = vpop.f32.mrf.mxu0
        %v2405 = vadd.f32 %v2325, %v2404
        %2406 = vdwg.mxu0
        %2407 = vmatprep.subr.mxu0 0.0
        %2408 = vmatpush1.msra.mxu0 0.0
        %2409 = vmatprep.subr.mxu0 0.0
        %2410 = vmatpush1.msra.mxu0 0.0
        %2411 = vmatprep.subr.mxu0 0.0
        %2412 = vmatpush1.msra.mxu0 0.0
        %2413 = vmatprep.subr.mxu0 0.0
        %2414 = vmatpush1.msra.mxu0 0.0
        %2415 = vmatprep.subr.mxu0 0.0
        %2416 = vmatpush1.msra.mxu0 0.0
        %2417 = vmatprep.subr.mxu0 0.0
        %2418 = vmatpush1.msra.mxu0 0.0
        %2419 = vmatprep.subr.mxu0 0.0
        %2420 = vmatpush1.msra.mxu0 0.0
        %2421 = vmatprep.subr.mxu0 0.0
        %2422 = vmatpush1.msra.mxu0 0.0
        %2423 = vmatprep.subr.mxu0 0.0
        %2424 = vmatpush1.msra.mxu0 0.0
        %2425 = vmatprep.subr.mxu0 0.0
        %2426 = vmatpush1.msra.mxu0 0.0
        %2427 = vmatprep.subr.mxu0 0.0
        %2428 = vmatpush1.msra.mxu0 0.0
        %2429 = vmatprep.subr.mxu0 0.0
        %2430 = vmatpush1.msra.mxu0 0.0
        %v2431 = vand.u32 %v223, 4294901760
        %2432 = vmatprep.subr.mxu0 %v2431
        %v2433 = vand.u32 %v222, 4294901760
        %2434 = vmatpush1.msra.mxu0 %v2433
        %v2435 = vand.u32 %v207, 4294901760
        %2436 = vmatprep.subr.mxu0 %v2435
        %v2437 = vand.u32 %v206, 4294901760
        %2438 = vmatpush1.msra.mxu0 %v2437
        %v2439 = vand.u32 %v191, 4294901760
        %2440 = vmatprep.subr.mxu0 %v2439
        %v2441 = vand.u32 %v190, 4294901760
        %2442 = vmatpush1.msra.mxu0 %v2441
        %v2443 = vand.u32 %v175, 4294901760
        %2444 = vmatprep.subr.mxu0 %v2443
        %v2445 = vand.u32 %v174, 4294901760
        %2446 = vmatpush1.msra.mxu0 %v2445
        %2447 = vmatprep.subr.mxu0 0.0
        %2448 = vmatpush2.msra.mxu0 0.0
        %2449 = vmatprep.subr.mxu0 0.0
        %2450 = vmatpush2.msra.mxu0 0.0
        %2451 = vmatprep.subr.mxu0 0.0
        %2452 = vmatpush2.msra.mxu0 0.0
        %2453 = vmatprep.subr.mxu0 0.0
        %2454 = vmatpush2.msra.mxu0 0.0
        %2455 = vmatprep.subr.mxu0 0.0
        %2456 = vmatpush2.msra.mxu0 0.0
        %2457 = vmatprep.subr.mxu0 0.0
        %2458 = vmatpush2.msra.mxu0 0.0
        %2459 = vmatprep.subr.mxu0 0.0
        %2460 = vmatpush2.msra.mxu0 0.0
        %2461 = vmatprep.subr.mxu0 0.0
        %2462 = vmatpush2.msra.mxu0 0.0
        %2463 = vmatprep.subr.mxu0 0.0
        %2464 = vmatpush2.msra.mxu0 0.0
        %2465 = vmatprep.subr.mxu0 0.0
        %2466 = vmatpush2.msra.mxu0 0.0
        %2467 = vmatprep.subr.mxu0 0.0
        %2468 = vmatpush2.msra.mxu0 0.0
        %2469 = vmatprep.subr.mxu0 0.0
        %2470 = vmatpush2.msra.mxu0 0.0
        %2471 = vmatprep.subr.mxu0 0.0
        %2472 = vmatpush2.msra.mxu0 0.0
        %2473 = vmatprep.subr.mxu0 0.0
        %2474 = vmatpush2.msra.mxu0 0.0
        %2475 = vmatprep.subr.mxu0 0.0
        %2476 = vmatpush2.msra.mxu0 0.0
        %2477 = vmatprep.subr.mxu0 0.0
        %2478 = vmatpush2.msra.mxu0 0.0
        %2479 = vmatprep.mubr.f32.mxu0 0.0
        %v2480 = vand.u32 %v233, 4294901760
        %v2481 = vsub.f32 %v233, %v2480
        %v2482 = vand.u32 %v2481, 4294901760
        %v2483 = vsub.f32 %v2481, %v2482
        %v2484 = vand.u32 %v2483, 4294901760
        %2485 = vmatmul.mubr.f32.gmra.mxu0 %v2484
        %v2486 = vpop.f32.mrf.mxu0
        %v2487 = vadd.f32 0.0, %v2486
        %v2488 = vpop.f32.mrf.mxu0
        %v2489 = vadd.f32 0.0, %v2488
        %2490 = vdwg.mxu0
        %2491 = vmatprep.subr.mxu0 0.0
        %2492 = vmatpush1.msra.mxu0 0.0
        %2493 = vmatprep.subr.mxu0 0.0
        %2494 = vmatpush1.msra.mxu0 0.0
        %2495 = vmatprep.subr.mxu0 0.0
        %2496 = vmatpush1.msra.mxu0 0.0
        %2497 = vmatprep.subr.mxu0 0.0
        %2498 = vmatpush1.msra.mxu0 0.0
        %2499 = vmatprep.subr.mxu0 0.0
        %2500 = vmatpush1.msra.mxu0 0.0
        %2501 = vmatprep.subr.mxu0 0.0
        %2502 = vmatpush1.msra.mxu0 0.0
        %2503 = vmatprep.subr.mxu0 0.0
        %2504 = vmatpush1.msra.mxu0 0.0
        %2505 = vmatprep.subr.mxu0 0.0
        %2506 = vmatpush1.msra.mxu0 0.0
        %2507 = vmatprep.subr.mxu0 0.0
        %2508 = vmatpush1.msra.mxu0 0.0
        %2509 = vmatprep.subr.mxu0 0.0
        %2510 = vmatpush1.msra.mxu0 0.0
        %2511 = vmatprep.subr.mxu0 0.0
        %2512 = vmatpush1.msra.mxu0 0.0
        %2513 = vmatprep.subr.mxu0 0.0
        %2514 = vmatpush1.msra.mxu0 0.0
        %v2515 = vand.u32 %v223, 4294901760
        %v2516 = vsub.f32 %v223, %v2515
        %v2517 = vand.u32 %v2516, 4294901760
        %v2518 = vsub.f32 %v2516, %v2517
        %v2519 = vand.u32 %v2518, 4294901760
        %2520 = vmatprep.subr.mxu0 %v2519
        %v2521 = vand.u32 %v222, 4294901760
        %v2522 = vsub.f32 %v222, %v2521
        %v2523 = vand.u32 %v2522, 4294901760
        %v2524 = vsub.f32 %v2522, %v2523
        %v2525 = vand.u32 %v2524, 4294901760
        %2526 = vmatpush1.msra.mxu0 %v2525
        %v2527 = vand.u32 %v207, 4294901760
        %v2528 = vsub.f32 %v207, %v2527
        %v2529 = vand.u32 %v2528, 4294901760
        %v2530 = vsub.f32 %v2528, %v2529
        %v2531 = vand.u32 %v2530, 4294901760
        %2532 = vmatprep.subr.mxu0 %v2531
        %v2533 = vand.u32 %v206, 4294901760
        %v2534 = vsub.f32 %v206, %v2533
        %v2535 = vand.u32 %v2534, 4294901760
        %v2536 = vsub.f32 %v2534, %v2535
        %v2537 = vand.u32 %v2536, 4294901760
        %2538 = vmatpush1.msra.mxu0 %v2537
        %v2539 = vand.u32 %v191, 4294901760
        %v2540 = vsub.f32 %v191, %v2539
        %v2541 = vand.u32 %v2540, 4294901760
        %v2542 = vsub.f32 %v2540, %v2541
        %v2543 = vand.u32 %v2542, 4294901760
        %2544 = vmatprep.subr.mxu0 %v2543
        %v2545 = vand.u32 %v190, 4294901760
        %v2546 = vsub.f32 %v190, %v2545
        %v2547 = vand.u32 %v2546, 4294901760
        %v2548 = vsub.f32 %v2546, %v2547
        %v2549 = vand.u32 %v2548, 4294901760
        %2550 = vmatpush1.msra.mxu0 %v2549
        %v2551 = vand.u32 %v175, 4294901760
        %v2552 = vsub.f32 %v175, %v2551
        %v2553 = vand.u32 %v2552, 4294901760
        %v2554 = vsub.f32 %v2552, %v2553
        %v2555 = vand.u32 %v2554, 4294901760
        %2556 = vmatprep.subr.mxu0 %v2555
        %v2557 = vand.u32 %v174, 4294901760
        %v2558 = vsub.f32 %v174, %v2557
        %v2559 = vand.u32 %v2558, 4294901760
        %v2560 = vsub.f32 %v2558, %v2559
        %v2561 = vand.u32 %v2560, 4294901760
        %2562 = vmatpush1.msra.mxu0 %v2561
        %2563 = vmatprep.subr.mxu0 0.0
        %2564 = vmatpush2.msra.mxu0 0.0
        %2565 = vmatprep.subr.mxu0 0.0
        %2566 = vmatpush2.msra.mxu0 0.0
        %2567 = vmatprep.subr.mxu0 0.0
        %2568 = vmatpush2.msra.mxu0 0.0
        %2569 = vmatprep.subr.mxu0 0.0
        %2570 = vmatpush2.msra.mxu0 0.0
        %2571 = vmatprep.subr.mxu0 0.0
        %2572 = vmatpush2.msra.mxu0 0.0
        %2573 = vmatprep.subr.mxu0 0.0
        %2574 = vmatpush2.msra.mxu0 0.0
        %2575 = vmatprep.subr.mxu0 0.0
        %2576 = vmatpush2.msra.mxu0 0.0
        %2577 = vmatprep.subr.mxu0 0.0
        %2578 = vmatpush2.msra.mxu0 0.0
        %2579 = vmatprep.subr.mxu0 0.0
        %2580 = vmatpush2.msra.mxu0 0.0
        %2581 = vmatprep.subr.mxu0 0.0
        %2582 = vmatpush2.msra.mxu0 0.0
        %2583 = vmatprep.subr.mxu0 0.0
        %2584 = vmatpush2.msra.mxu0 0.0
        %2585 = vmatprep.subr.mxu0 0.0
        %2586 = vmatpush2.msra.mxu0 0.0
        %2587 = vmatprep.subr.mxu0 0.0
        %2588 = vmatpush2.msra.mxu0 0.0
        %2589 = vmatprep.subr.mxu0 0.0
        %2590 = vmatpush2.msra.mxu0 0.0
        %2591 = vmatprep.subr.mxu0 0.0
        %2592 = vmatpush2.msra.mxu0 0.0
        %2593 = vmatprep.subr.mxu0 0.0
        %2594 = vmatpush2.msra.mxu0 0.0
        %2595 = vmatprep.mubr.f32.mxu0 0.0
        %v2596 = vand.u32 %v233, 4294901760
        %2597 = vmatmul.mubr.f32.gmra.mxu0 %v2596
        %v2598 = vpop.f32.mrf.mxu0
        %v2599 = vadd.f32 %v2487, %v2598
        %v2600 = vpop.f32.mrf.mxu0
        %v2601 = vadd.f32 %v2489, %v2600
        %2602 = vdwg.mxu0
        %2603 = vmatprep.subr.mxu0 0.0
        %2604 = vmatpush1.msra.mxu0 0.0
        %2605 = vmatprep.subr.mxu0 0.0
        %2606 = vmatpush1.msra.mxu0 0.0
        %2607 = vmatprep.subr.mxu0 0.0
        %2608 = vmatpush1.msra.mxu0 0.0
        %2609 = vmatprep.subr.mxu0 0.0
        %2610 = vmatpush1.msra.mxu0 0.0
        %2611 = vmatprep.subr.mxu0 0.0
        %2612 = vmatpush1.msra.mxu0 0.0
        %2613 = vmatprep.subr.mxu0 0.0
        %2614 = vmatpush1.msra.mxu0 0.0
        %2615 = vmatprep.subr.mxu0 0.0
        %2616 = vmatpush1.msra.mxu0 0.0
        %2617 = vmatprep.subr.mxu0 0.0
        %2618 = vmatpush1.msra.mxu0 0.0
        %2619 = vmatprep.subr.mxu0 0.0
        %2620 = vmatpush1.msra.mxu0 0.0
        %2621 = vmatprep.subr.mxu0 0.0
        %2622 = vmatpush1.msra.mxu0 0.0
        %2623 = vmatprep.subr.mxu0 0.0
        %2624 = vmatpush1.msra.mxu0 0.0
        %2625 = vmatprep.subr.mxu0 0.0
        %2626 = vmatpush1.msra.mxu0 0.0
        %v2627 = vand.u32 %v223, 4294901760
        %v2628 = vsub.f32 %v223, %v2627
        %2629 = vmatprep.subr.mxu0 %v2628
        %v2630 = vand.u32 %v222, 4294901760
        %v2631 = vsub.f32 %v222, %v2630
        %2632 = vmatpush1.msra.mxu0 %v2631
        %v2633 = vand.u32 %v207, 4294901760
        %v2634 = vsub.f32 %v207, %v2633
        %2635 = vmatprep.subr.mxu0 %v2634
        %v2636 = vand.u32 %v206, 4294901760
        %v2637 = vsub.f32 %v206, %v2636
        %2638 = vmatpush1.msra.mxu0 %v2637
        %v2639 = vand.u32 %v191, 4294901760
        %v2640 = vsub.f32 %v191, %v2639
        %2641 = vmatprep.subr.mxu0 %v2640
        %v2642 = vand.u32 %v190, 4294901760
        %v2643 = vsub.f32 %v190, %v2642
        %2644 = vmatpush1.msra.mxu0 %v2643
        %v2645 = vand.u32 %v175, 4294901760
        %v2646 = vsub.f32 %v175, %v2645
        %2647 = vmatprep.subr.mxu0 %v2646
        %v2648 = vand.u32 %v174, 4294901760
        %v2649 = vsub.f32 %v174, %v2648
        %2650 = vmatpush1.msra.mxu0 %v2649
        %2651 = vmatprep.subr.mxu0 0.0
        %2652 = vmatpush2.msra.mxu0 0.0
        %2653 = vmatprep.subr.mxu0 0.0
        %2654 = vmatpush2.msra.mxu0 0.0
        %2655 = vmatprep.subr.mxu0 0.0
        %2656 = vmatpush2.msra.mxu0 0.0
        %2657 = vmatprep.subr.mxu0 0.0
        %2658 = vmatpush2.msra.mxu0 0.0
        %2659 = vmatprep.subr.mxu0 0.0
        %2660 = vmatpush2.msra.mxu0 0.0
        %2661 = vmatprep.subr.mxu0 0.0
        %2662 = vmatpush2.msra.mxu0 0.0
        %2663 = vmatprep.subr.mxu0 0.0
        %2664 = vmatpush2.msra.mxu0 0.0
        %2665 = vmatprep.subr.mxu0 0.0
        %2666 = vmatpush2.msra.mxu0 0.0
        %2667 = vmatprep.subr.mxu0 0.0
        %2668 = vmatpush2.msra.mxu0 0.0
        %2669 = vmatprep.subr.mxu0 0.0
        %2670 = vmatpush2.msra.mxu0 0.0
        %2671 = vmatprep.subr.mxu0 0.0
        %2672 = vmatpush2.msra.mxu0 0.0
        %2673 = vmatprep.subr.mxu0 0.0
        %2674 = vmatpush2.msra.mxu0 0.0
        %2675 = vmatprep.subr.mxu0 0.0
        %2676 = vmatpush2.msra.mxu0 0.0
        %2677 = vmatprep.subr.mxu0 0.0
        %2678 = vmatpush2.msra.mxu0 0.0
        %2679 = vmatprep.subr.mxu0 0.0
        %2680 = vmatpush2.msra.mxu0 0.0
        %2681 = vmatprep.subr.mxu0 0.0
        %2682 = vmatpush2.msra.mxu0 0.0
        %2683 = vmatprep.mubr.f32.mxu0 0.0
        %v2684 = vand.u32 %v233, 4294901760
        %v2685 = vsub.f32 %v233, %v2684
        %2686 = vmatmul.mubr.f32.gmra.mxu0 %v2685
        %v2687 = vpop.f32.mrf.mxu0
        %v2688 = vadd.f32 %v2599, %v2687
        %v2689 = vpop.f32.mrf.mxu0
        %v2690 = vadd.f32 %v2601, %v2689
        %2691 = vdwg.mxu0
        %2692 = vmatprep.subr.mxu0 0.0
        %2693 = vmatpush1.msra.mxu0 0.0
        %2694 = vmatprep.subr.mxu0 0.0
        %2695 = vmatpush1.msra.mxu0 0.0
        %2696 = vmatprep.subr.mxu0 0.0
        %2697 = vmatpush1.msra.mxu0 0.0
        %2698 = vmatprep.subr.mxu0 0.0
        %2699 = vmatpush1.msra.mxu0 0.0
        %2700 = vmatprep.subr.mxu0 0.0
        %2701 = vmatpush1.msra.mxu0 0.0
        %2702 = vmatprep.subr.mxu0 0.0
        %2703 = vmatpush1.msra.mxu0 0.0
        %2704 = vmatprep.subr.mxu0 0.0
        %2705 = vmatpush1.msra.mxu0 0.0
        %2706 = vmatprep.subr.mxu0 0.0
        %2707 = vmatpush1.msra.mxu0 0.0
        %2708 = vmatprep.subr.mxu0 0.0
        %2709 = vmatpush1.msra.mxu0 0.0
        %2710 = vmatprep.subr.mxu0 0.0
        %2711 = vmatpush1.msra.mxu0 0.0
        %2712 = vmatprep.subr.mxu0 0.0
        %2713 = vmatpush1.msra.mxu0 0.0
        %2714 = vmatprep.subr.mxu0 0.0
        %2715 = vmatpush1.msra.mxu0 0.0
        %v2716 = vand.u32 %v223, 4294901760
        %2717 = vmatprep.subr.mxu0 %v2716
        %v2718 = vand.u32 %v222, 4294901760
        %2719 = vmatpush1.msra.mxu0 %v2718
        %v2720 = vand.u32 %v207, 4294901760
        %2721 = vmatprep.subr.mxu0 %v2720
        %v2722 = vand.u32 %v206, 4294901760
        %2723 = vmatpush1.msra.mxu0 %v2722
        %v2724 = vand.u32 %v191, 4294901760
        %2725 = vmatprep.subr.mxu0 %v2724
        %v2726 = vand.u32 %v190, 4294901760
        %2727 = vmatpush1.msra.mxu0 %v2726
        %v2728 = vand.u32 %v175, 4294901760
        %2729 = vmatprep.subr.mxu0 %v2728
        %v2730 = vand.u32 %v174, 4294901760
        %2731 = vmatpush1.msra.mxu0 %v2730
        %2732 = vmatprep.subr.mxu0 0.0
        %2733 = vmatpush2.msra.mxu0 0.0
        %2734 = vmatprep.subr.mxu0 0.0
        %2735 = vmatpush2.msra.mxu0 0.0
        %2736 = vmatprep.subr.mxu0 0.0
        %2737 = vmatpush2.msra.mxu0 0.0
        %2738 = vmatprep.subr.mxu0 0.0
        %2739 = vmatpush2.msra.mxu0 0.0
        %2740 = vmatprep.subr.mxu0 0.0
        %2741 = vmatpush2.msra.mxu0 0.0
        %2742 = vmatprep.subr.mxu0 0.0
        %2743 = vmatpush2.msra.mxu0 0.0
        %2744 = vmatprep.subr.mxu0 0.0
        %2745 = vmatpush2.msra.mxu0 0.0
        %2746 = vmatprep.subr.mxu0 0.0
        %2747 = vmatpush2.msra.mxu0 0.0
        %2748 = vmatprep.subr.mxu0 0.0
        %2749 = vmatpush2.msra.mxu0 0.0
        %2750 = vmatprep.subr.mxu0 0.0
        %2751 = vmatpush2.msra.mxu0 0.0
        %2752 = vmatprep.subr.mxu0 0.0
        %2753 = vmatpush2.msra.mxu0 0.0
        %2754 = vmatprep.subr.mxu0 0.0
        %2755 = vmatpush2.msra.mxu0 0.0
        %2756 = vmatprep.subr.mxu0 0.0
        %2757 = vmatpush2.msra.mxu0 0.0
        %2758 = vmatprep.subr.mxu0 0.0
        %2759 = vmatpush2.msra.mxu0 0.0
        %2760 = vmatprep.subr.mxu0 0.0
        %2761 = vmatpush2.msra.mxu0 0.0
        %2762 = vmatprep.subr.mxu0 0.0
        %2763 = vmatpush2.msra.mxu0 0.0
        %2764 = vmatprep.mubr.f32.mxu0 0.0
        %v2765 = vand.u32 %v233, 4294901760
        %v2766 = vsub.f32 %v233, %v2765
        %v2767 = vand.u32 %v2766, 4294901760
        %2768 = vmatmul.mubr.f32.gmra.mxu0 %v2767
        %v2769 = vpop.f32.mrf.mxu0
        %v2770 = vadd.f32 %v2688, %v2769
        %v2771 = vpop.f32.mrf.mxu0
        %v2772 = vadd.f32 %v2690, %v2771
        %2773 = vdwg.mxu0
        %2774 = vmatprep.subr.mxu0 0.0
        %2775 = vmatpush1.msra.mxu0 0.0
        %2776 = vmatprep.subr.mxu0 0.0
        %2777 = vmatpush1.msra.mxu0 0.0
        %2778 = vmatprep.subr.mxu0 0.0
        %2779 = vmatpush1.msra.mxu0 0.0
        %2780 = vmatprep.subr.mxu0 0.0
        %2781 = vmatpush1.msra.mxu0 0.0
        %2782 = vmatprep.subr.mxu0 0.0
        %2783 = vmatpush1.msra.mxu0 0.0
        %2784 = vmatprep.subr.mxu0 0.0
        %2785 = vmatpush1.msra.mxu0 0.0
        %2786 = vmatprep.subr.mxu0 0.0
        %2787 = vmatpush1.msra.mxu0 0.0
        %2788 = vmatprep.subr.mxu0 0.0
        %2789 = vmatpush1.msra.mxu0 0.0
        %2790 = vmatprep.subr.mxu0 0.0
        %2791 = vmatpush1.msra.mxu0 0.0
        %2792 = vmatprep.subr.mxu0 0.0
        %2793 = vmatpush1.msra.mxu0 0.0
        %2794 = vmatprep.subr.mxu0 0.0
        %2795 = vmatpush1.msra.mxu0 0.0
        %2796 = vmatprep.subr.mxu0 0.0
        %2797 = vmatpush1.msra.mxu0 0.0
        %v2798 = vand.u32 %v223, 4294901760
        %v2799 = vsub.f32 %v223, %v2798
        %v2800 = vand.u32 %v2799, 4294901760
        %2801 = vmatprep.subr.mxu0 %v2800
        %v2802 = vand.u32 %v222, 4294901760
        %v2803 = vsub.f32 %v222, %v2802
        %v2804 = vand.u32 %v2803, 4294901760
        %2805 = vmatpush1.msra.mxu0 %v2804
        %v2806 = vand.u32 %v207, 4294901760
        %v2807 = vsub.f32 %v207, %v2806
        %v2808 = vand.u32 %v2807, 4294901760
        %2809 = vmatprep.subr.mxu0 %v2808
        %v2810 = vand.u32 %v206, 4294901760
        %v2811 = vsub.f32 %v206, %v2810
        %v2812 = vand.u32 %v2811, 4294901760
        %2813 = vmatpush1.msra.mxu0 %v2812
        %v2814 = vand.u32 %v191, 4294901760
        %v2815 = vsub.f32 %v191, %v2814
        %v2816 = vand.u32 %v2815, 4294901760
        %2817 = vmatprep.subr.mxu0 %v2816
        %v2818 = vand.u32 %v190, 4294901760
        %v2819 = vsub.f32 %v190, %v2818
        %v2820 = vand.u32 %v2819, 4294901760
        %2821 = vmatpush1.msra.mxu0 %v2820
        %v2822 = vand.u32 %v175, 4294901760
        %v2823 = vsub.f32 %v175, %v2822
        %v2824 = vand.u32 %v2823, 4294901760
        %2825 = vmatprep.subr.mxu0 %v2824
        %v2826 = vand.u32 %v174, 4294901760
        %v2827 = vsub.f32 %v174, %v2826
        %v2828 = vand.u32 %v2827, 4294901760
        %2829 = vmatpush1.msra.mxu0 %v2828
        %2830 = vmatprep.subr.mxu0 0.0
        %2831 = vmatpush2.msra.mxu0 0.0
        %2832 = vmatprep.subr.mxu0 0.0
        %2833 = vmatpush2.msra.mxu0 0.0
        %2834 = vmatprep.subr.mxu0 0.0
        %2835 = vmatpush2.msra.mxu0 0.0
        %2836 = vmatprep.subr.mxu0 0.0
        %2837 = vmatpush2.msra.mxu0 0.0
        %2838 = vmatprep.subr.mxu0 0.0
        %2839 = vmatpush2.msra.mxu0 0.0
        %2840 = vmatprep.subr.mxu0 0.0
        %2841 = vmatpush2.msra.mxu0 0.0
        %2842 = vmatprep.subr.mxu0 0.0
        %2843 = vmatpush2.msra.mxu0 0.0
        %2844 = vmatprep.subr.mxu0 0.0
        %2845 = vmatpush2.msra.mxu0 0.0
        %2846 = vmatprep.subr.mxu0 0.0
        %2847 = vmatpush2.msra.mxu0 0.0
        %2848 = vmatprep.subr.mxu0 0.0
        %2849 = vmatpush2.msra.mxu0 0.0
        %2850 = vmatprep.subr.mxu0 0.0
        %2851 = vmatpush2.msra.mxu0 0.0
        %2852 = vmatprep.subr.mxu0 0.0
        %2853 = vmatpush2.msra.mxu0 0.0
        %2854 = vmatprep.subr.mxu0 0.0
        %2855 = vmatpush2.msra.mxu0 0.0
        %2856 = vmatprep.subr.mxu0 0.0
        %2857 = vmatpush2.msra.mxu0 0.0
        %2858 = vmatprep.subr.mxu0 0.0
        %2859 = vmatpush2.msra.mxu0 0.0
        %2860 = vmatprep.subr.mxu0 0.0
        %2861 = vmatpush2.msra.mxu0 0.0
        %2862 = vmatprep.mubr.f32.mxu0 0.0
        %v2863 = vand.u32 %v233, 4294901760
        %2864 = vmatmul.mubr.f32.gmra.mxu0 %v2863
        %v2865 = vpop.f32.mrf.mxu0
        %v2866 = vadd.f32 %v2770, %v2865
        %v2867 = vpop.f32.mrf.mxu0
        %v2868 = vadd.f32 %v2772, %v2867
        %2869 = vdwg.mxu0
        %2870 = vmatprep.subr.mxu0 0.0
        %2871 = vmatpush1.msra.mxu0 0.0
        %2872 = vmatprep.subr.mxu0 0.0
        %2873 = vmatpush1.msra.mxu0 0.0
        %2874 = vmatprep.subr.mxu0 0.0
        %2875 = vmatpush1.msra.mxu0 0.0
        %2876 = vmatprep.subr.mxu0 0.0
        %2877 = vmatpush1.msra.mxu0 0.0
        %2878 = vmatprep.subr.mxu0 0.0
        %2879 = vmatpush1.msra.mxu0 0.0
        %2880 = vmatprep.subr.mxu0 0.0
        %2881 = vmatpush1.msra.mxu0 0.0
        %2882 = vmatprep.subr.mxu0 0.0
        %2883 = vmatpush1.msra.mxu0 0.0
        %2884 = vmatprep.subr.mxu0 0.0
        %2885 = vmatpush1.msra.mxu0 0.0
        %2886 = vmatprep.subr.mxu0 0.0
        %2887 = vmatpush1.msra.mxu0 0.0
        %2888 = vmatprep.subr.mxu0 0.0
        %2889 = vmatpush1.msra.mxu0 0.0
        %2890 = vmatprep.subr.mxu0 0.0
        %2891 = vmatpush1.msra.mxu0 0.0
        %2892 = vmatprep.subr.mxu0 0.0
        %2893 = vmatpush1.msra.mxu0 0.0
        %v2894 = vand.u32 %v223, 4294901760
        %2895 = vmatprep.subr.mxu0 %v2894
        %v2896 = vand.u32 %v222, 4294901760
        %2897 = vmatpush1.msra.mxu0 %v2896
        %v2898 = vand.u32 %v207, 4294901760
        %2899 = vmatprep.subr.mxu0 %v2898
        %v2900 = vand.u32 %v206, 4294901760
        %2901 = vmatpush1.msra.mxu0 %v2900
        %v2902 = vand.u32 %v191, 4294901760
        %2903 = vmatprep.subr.mxu0 %v2902
        %v2904 = vand.u32 %v190, 4294901760
        %2905 = vmatpush1.msra.mxu0 %v2904
        %v2906 = vand.u32 %v175, 4294901760
        %2907 = vmatprep.subr.mxu0 %v2906
        %v2908 = vand.u32 %v174, 4294901760
        %2909 = vmatpush1.msra.mxu0 %v2908
        %2910 = vmatprep.subr.mxu0 0.0
        %2911 = vmatpush2.msra.mxu0 0.0
        %2912 = vmatprep.subr.mxu0 0.0
        %2913 = vmatpush2.msra.mxu0 0.0
        %2914 = vmatprep.subr.mxu0 0.0
        %2915 = vmatpush2.msra.mxu0 0.0
        %2916 = vmatprep.subr.mxu0 0.0
        %2917 = vmatpush2.msra.mxu0 0.0
        %2918 = vmatprep.subr.mxu0 0.0
        %2919 = vmatpush2.msra.mxu0 0.0
        %2920 = vmatprep.subr.mxu0 0.0
        %2921 = vmatpush2.msra.mxu0 0.0
        %2922 = vmatprep.subr.mxu0 0.0
        %2923 = vmatpush2.msra.mxu0 0.0
        %2924 = vmatprep.subr.mxu0 0.0
        %2925 = vmatpush2.msra.mxu0 0.0
        %2926 = vmatprep.subr.mxu0 0.0
        %2927 = vmatpush2.msra.mxu0 0.0
        %2928 = vmatprep.subr.mxu0 0.0
        %2929 = vmatpush2.msra.mxu0 0.0
        %2930 = vmatprep.subr.mxu0 0.0
        %2931 = vmatpush2.msra.mxu0 0.0
        %2932 = vmatprep.subr.mxu0 0.0
        %2933 = vmatpush2.msra.mxu0 0.0
        %2934 = vmatprep.subr.mxu0 0.0
        %2935 = vmatpush2.msra.mxu0 0.0
        %2936 = vmatprep.subr.mxu0 0.0
        %2937 = vmatpush2.msra.mxu0 0.0
        %2938 = vmatprep.subr.mxu0 0.0
        %2939 = vmatpush2.msra.mxu0 0.0
        %2940 = vmatprep.subr.mxu0 0.0
        %2941 = vmatpush2.msra.mxu0 0.0
        %2942 = vmatprep.mubr.f32.mxu0 0.0
        %v2943 = vand.u32 %v233, 4294901760
        %2944 = vmatmul.mubr.f32.gmra.mxu0 %v2943
        %v2945 = vpop.f32.mrf.mxu0
        %v2946 = vadd.f32 %v2866, %v2945
        %v2947 = vpop.f32.mrf.mxu0
        %v2948 = vadd.f32 %v2868, %v2947
        %2949 = vdwg.mxu0
        %2950 = vmatprep.subr.mxu0 0.0
        %2951 = vmatpush1.msra.mxu0 0.0
        %2952 = vmatprep.subr.mxu0 0.0
        %2953 = vmatpush1.msra.mxu0 0.0
        %2954 = vmatprep.subr.mxu0 0.0
        %2955 = vmatpush1.msra.mxu0 0.0
        %2956 = vmatprep.subr.mxu0 0.0
        %2957 = vmatpush1.msra.mxu0 0.0
        %2958 = vmatprep.subr.mxu0 0.0
        %2959 = vmatpush1.msra.mxu0 0.0
        %2960 = vmatprep.subr.mxu0 0.0
        %2961 = vmatpush1.msra.mxu0 0.0
        %2962 = vmatprep.subr.mxu0 0.0
        %2963 = vmatpush1.msra.mxu0 0.0
        %2964 = vmatprep.subr.mxu0 0.0
        %2965 = vmatpush1.msra.mxu0 0.0
        %2966 = vmatprep.subr.mxu0 0.0
        %2967 = vmatpush1.msra.mxu0 0.0
        %2968 = vmatprep.subr.mxu0 0.0
        %2969 = vmatpush1.msra.mxu0 0.0
        %2970 = vmatprep.subr.mxu0 0.0
        %2971 = vmatpush1.msra.mxu0 0.0
        %2972 = vmatprep.subr.mxu0 0.0
        %2973 = vmatpush1.msra.mxu0 0.0
        %v2974 = vand.u32 %v225, 4294901760
        %2975 = vmatprep.subr.mxu0 %v2974
        %v2976 = vand.u32 %v224, 4294901760
        %2977 = vmatpush1.msra.mxu0 %v2976
        %v2978 = vand.u32 %v209, 4294901760
        %2979 = vmatprep.subr.mxu0 %v2978
        %v2980 = vand.u32 %v208, 4294901760
        %2981 = vmatpush1.msra.mxu0 %v2980
        %v2982 = vand.u32 %v193, 4294901760
        %2983 = vmatprep.subr.mxu0 %v2982
        %v2984 = vand.u32 %v192, 4294901760
        %2985 = vmatpush1.msra.mxu0 %v2984
        %v2986 = vand.u32 %v177, 4294901760
        %2987 = vmatprep.subr.mxu0 %v2986
        %v2988 = vand.u32 %v176, 4294901760
        %2989 = vmatpush1.msra.mxu0 %v2988
        %2990 = vmatprep.subr.mxu0 0.0
        %2991 = vmatpush2.msra.mxu0 0.0
        %2992 = vmatprep.subr.mxu0 0.0
        %2993 = vmatpush2.msra.mxu0 0.0
        %2994 = vmatprep.subr.mxu0 0.0
        %2995 = vmatpush2.msra.mxu0 0.0
        %2996 = vmatprep.subr.mxu0 0.0
        %2997 = vmatpush2.msra.mxu0 0.0
        %2998 = vmatprep.subr.mxu0 0.0
        %2999 = vmatpush2.msra.mxu0 0.0
        %3000 = vmatprep.subr.mxu0 0.0
        %3001 = vmatpush2.msra.mxu0 0.0
        %3002 = vmatprep.subr.mxu0 0.0
        %3003 = vmatpush2.msra.mxu0 0.0
        %3004 = vmatprep.subr.mxu0 0.0
        %3005 = vmatpush2.msra.mxu0 0.0
        %3006 = vmatprep.subr.mxu0 0.0
        %3007 = vmatpush2.msra.mxu0 0.0
        %3008 = vmatprep.subr.mxu0 0.0
        %3009 = vmatpush2.msra.mxu0 0.0
        %3010 = vmatprep.subr.mxu0 0.0
        %3011 = vmatpush2.msra.mxu0 0.0
        %3012 = vmatprep.subr.mxu0 0.0
        %3013 = vmatpush2.msra.mxu0 0.0
        %3014 = vmatprep.subr.mxu0 0.0
        %3015 = vmatpush2.msra.mxu0 0.0
        %3016 = vmatprep.subr.mxu0 0.0
        %3017 = vmatpush2.msra.mxu0 0.0
        %3018 = vmatprep.subr.mxu0 0.0
        %3019 = vmatpush2.msra.mxu0 0.0
        %3020 = vmatprep.subr.mxu0 0.0
        %3021 = vmatpush2.msra.mxu0 0.0
        %3022 = vmatprep.mubr.f32.mxu0 0.0
        %v3023 = vand.u32 %v233, 4294901760
        %v3024 = vsub.f32 %v233, %v3023
        %v3025 = vand.u32 %v3024, 4294901760
        %v3026 = vsub.f32 %v3024, %v3025
        %v3027 = vand.u32 %v3026, 4294901760
        %3028 = vmatmul.mubr.f32.gmra.mxu0 %v3027
        %v3029 = vpop.f32.mrf.mxu0
        %v3030 = vadd.f32 0.0, %v3029
        %v3031 = vpop.f32.mrf.mxu0
        %v3032 = vadd.f32 0.0, %v3031
        %3033 = vdwg.mxu0
        %3034 = vmatprep.subr.mxu0 0.0
        %3035 = vmatpush1.msra.mxu0 0.0
        %3036 = vmatprep.subr.mxu0 0.0
        %3037 = vmatpush1.msra.mxu0 0.0
        %3038 = vmatprep.subr.mxu0 0.0
        %3039 = vmatpush1.msra.mxu0 0.0
        %3040 = vmatprep.subr.mxu0 0.0
        %3041 = vmatpush1.msra.mxu0 0.0
        %3042 = vmatprep.subr.mxu0 0.0
        %3043 = vmatpush1.msra.mxu0 0.0
        %3044 = vmatprep.subr.mxu0 0.0
        %3045 = vmatpush1.msra.mxu0 0.0
        %3046 = vmatprep.subr.mxu0 0.0
        %3047 = vmatpush1.msra.mxu0 0.0
        %3048 = vmatprep.subr.mxu0 0.0
        %3049 = vmatpush1.msra.mxu0 0.0
        %3050 = vmatprep.subr.mxu0 0.0
        %3051 = vmatpush1.msra.mxu0 0.0
        %3052 = vmatprep.subr.mxu0 0.0
        %3053 = vmatpush1.msra.mxu0 0.0
        %3054 = vmatprep.subr.mxu0 0.0
        %3055 = vmatpush1.msra.mxu0 0.0
        %3056 = vmatprep.subr.mxu0 0.0
        %3057 = vmatpush1.msra.mxu0 0.0
        %v3058 = vand.u32 %v225, 4294901760
        %v3059 = vsub.f32 %v225, %v3058
        %v3060 = vand.u32 %v3059, 4294901760
        %v3061 = vsub.f32 %v3059, %v3060
        %v3062 = vand.u32 %v3061, 4294901760
        %3063 = vmatprep.subr.mxu0 %v3062
        %v3064 = vand.u32 %v224, 4294901760
        %v3065 = vsub.f32 %v224, %v3064
        %v3066 = vand.u32 %v3065, 4294901760
        %v3067 = vsub.f32 %v3065, %v3066
        %v3068 = vand.u32 %v3067, 4294901760
        %3069 = vmatpush1.msra.mxu0 %v3068
        %v3070 = vand.u32 %v209, 4294901760
        %v3071 = vsub.f32 %v209, %v3070
        %v3072 = vand.u32 %v3071, 4294901760
        %v3073 = vsub.f32 %v3071, %v3072
        %v3074 = vand.u32 %v3073, 4294901760
        %3075 = vmatprep.subr.mxu0 %v3074
        %v3076 = vand.u32 %v208, 4294901760
        %v3077 = vsub.f32 %v208, %v3076
        %v3078 = vand.u32 %v3077, 4294901760
        %v3079 = vsub.f32 %v3077, %v3078
        %v3080 = vand.u32 %v3079, 4294901760
        %3081 = vmatpush1.msra.mxu0 %v3080
        %v3082 = vand.u32 %v193, 4294901760
        %v3083 = vsub.f32 %v193, %v3082
        %v3084 = vand.u32 %v3083, 4294901760
        %v3085 = vsub.f32 %v3083, %v3084
        %v3086 = vand.u32 %v3085, 4294901760
        %3087 = vmatprep.subr.mxu0 %v3086
        %v3088 = vand.u32 %v192, 4294901760
        %v3089 = vsub.f32 %v192, %v3088
        %v3090 = vand.u32 %v3089, 4294901760
        %v3091 = vsub.f32 %v3089, %v3090
        %v3092 = vand.u32 %v3091, 4294901760
        %3093 = vmatpush1.msra.mxu0 %v3092
        %v3094 = vand.u32 %v177, 4294901760
        %v3095 = vsub.f32 %v177, %v3094
        %v3096 = vand.u32 %v3095, 4294901760
        %v3097 = vsub.f32 %v3095, %v3096
        %v3098 = vand.u32 %v3097, 4294901760
        %3099 = vmatprep.subr.mxu0 %v3098
        %v3100 = vand.u32 %v176, 4294901760
        %v3101 = vsub.f32 %v176, %v3100
        %v3102 = vand.u32 %v3101, 4294901760
        %v3103 = vsub.f32 %v3101, %v3102
        %v3104 = vand.u32 %v3103, 4294901760
        %3105 = vmatpush1.msra.mxu0 %v3104
        %3106 = vmatprep.subr.mxu0 0.0
        %3107 = vmatpush2.msra.mxu0 0.0
        %3108 = vmatprep.subr.mxu0 0.0
        %3109 = vmatpush2.msra.mxu0 0.0
        %3110 = vmatprep.subr.mxu0 0.0
        %3111 = vmatpush2.msra.mxu0 0.0
        %3112 = vmatprep.subr.mxu0 0.0
        %3113 = vmatpush2.msra.mxu0 0.0
        %3114 = vmatprep.subr.mxu0 0.0
        %3115 = vmatpush2.msra.mxu0 0.0
        %3116 = vmatprep.subr.mxu0 0.0
        %3117 = vmatpush2.msra.mxu0 0.0
        %3118 = vmatprep.subr.mxu0 0.0
        %3119 = vmatpush2.msra.mxu0 0.0
        %3120 = vmatprep.subr.mxu0 0.0
        %3121 = vmatpush2.msra.mxu0 0.0
        %3122 = vmatprep.subr.mxu0 0.0
        %3123 = vmatpush2.msra.mxu0 0.0
        %3124 = vmatprep.subr.mxu0 0.0
        %3125 = vmatpush2.msra.mxu0 0.0
        %3126 = vmatprep.subr.mxu0 0.0
        %3127 = vmatpush2.msra.mxu0 0.0
        %3128 = vmatprep.subr.mxu0 0.0
        %3129 = vmatpush2.msra.mxu0 0.0
        %3130 = vmatprep.subr.mxu0 0.0
        %3131 = vmatpush2.msra.mxu0 0.0
        %3132 = vmatprep.subr.mxu0 0.0
        %3133 = vmatpush2.msra.mxu0 0.0
        %3134 = vmatprep.subr.mxu0 0.0
        %3135 = vmatpush2.msra.mxu0 0.0
        %3136 = vmatprep.subr.mxu0 0.0
        %3137 = vmatpush2.msra.mxu0 0.0
        %3138 = vmatprep.mubr.f32.mxu0 0.0
        %v3139 = vand.u32 %v233, 4294901760
        %3140 = vmatmul.mubr.f32.gmra.mxu0 %v3139
        %v3141 = vpop.f32.mrf.mxu0
        %v3142 = vadd.f32 %v3030, %v3141
        %v3143 = vpop.f32.mrf.mxu0
        %v3144 = vadd.f32 %v3032, %v3143
        %3145 = vdwg.mxu0
        %3146 = vmatprep.subr.mxu0 0.0
        %3147 = vmatpush1.msra.mxu0 0.0
        %3148 = vmatprep.subr.mxu0 0.0
        %3149 = vmatpush1.msra.mxu0 0.0
        %3150 = vmatprep.subr.mxu0 0.0
        %3151 = vmatpush1.msra.mxu0 0.0
        %3152 = vmatprep.subr.mxu0 0.0
        %3153 = vmatpush1.msra.mxu0 0.0
        %3154 = vmatprep.subr.mxu0 0.0
        %3155 = vmatpush1.msra.mxu0 0.0
        %3156 = vmatprep.subr.mxu0 0.0
        %3157 = vmatpush1.msra.mxu0 0.0
        %3158 = vmatprep.subr.mxu0 0.0
        %3159 = vmatpush1.msra.mxu0 0.0
        %3160 = vmatprep.subr.mxu0 0.0
        %3161 = vmatpush1.msra.mxu0 0.0
        %3162 = vmatprep.subr.mxu0 0.0
        %3163 = vmatpush1.msra.mxu0 0.0
        %3164 = vmatprep.subr.mxu0 0.0
        %3165 = vmatpush1.msra.mxu0 0.0
        %3166 = vmatprep.subr.mxu0 0.0
        %3167 = vmatpush1.msra.mxu0 0.0
        %3168 = vmatprep.subr.mxu0 0.0
        %3169 = vmatpush1.msra.mxu0 0.0
        %v3170 = vand.u32 %v225, 4294901760
        %v3171 = vsub.f32 %v225, %v3170
        %3172 = vmatprep.subr.mxu0 %v3171
        %v3173 = vand.u32 %v224, 4294901760
        %v3174 = vsub.f32 %v224, %v3173
        %3175 = vmatpush1.msra.mxu0 %v3174
        %v3176 = vand.u32 %v209, 4294901760
        %v3177 = vsub.f32 %v209, %v3176
        %3178 = vmatprep.subr.mxu0 %v3177
        %v3179 = vand.u32 %v208, 4294901760
        %v3180 = vsub.f32 %v208, %v3179
        %3181 = vmatpush1.msra.mxu0 %v3180
        %v3182 = vand.u32 %v193, 4294901760
        %v3183 = vsub.f32 %v193, %v3182
        %3184 = vmatprep.subr.mxu0 %v3183
        %v3185 = vand.u32 %v192, 4294901760
        %v3186 = vsub.f32 %v192, %v3185
        %3187 = vmatpush1.msra.mxu0 %v3186
        %v3188 = vand.u32 %v177, 4294901760
        %v3189 = vsub.f32 %v177, %v3188
        %3190 = vmatprep.subr.mxu0 %v3189
        %v3191 = vand.u32 %v176, 4294901760
        %v3192 = vsub.f32 %v176, %v3191
        %3193 = vmatpush1.msra.mxu0 %v3192
        %3194 = vmatprep.subr.mxu0 0.0
        %3195 = vmatpush2.msra.mxu0 0.0
        %3196 = vmatprep.subr.mxu0 0.0
        %3197 = vmatpush2.msra.mxu0 0.0
        %3198 = vmatprep.subr.mxu0 0.0
        %3199 = vmatpush2.msra.mxu0 0.0
        %3200 = vmatprep.subr.mxu0 0.0
        %3201 = vmatpush2.msra.mxu0 0.0
        %3202 = vmatprep.subr.mxu0 0.0
        %3203 = vmatpush2.msra.mxu0 0.0
        %3204 = vmatprep.subr.mxu0 0.0
        %3205 = vmatpush2.msra.mxu0 0.0
        %3206 = vmatprep.subr.mxu0 0.0
        %3207 = vmatpush2.msra.mxu0 0.0
        %3208 = vmatprep.subr.mxu0 0.0
        %3209 = vmatpush2.msra.mxu0 0.0
        %3210 = vmatprep.subr.mxu0 0.0
        %3211 = vmatpush2.msra.mxu0 0.0
        %3212 = vmatprep.subr.mxu0 0.0
        %3213 = vmatpush2.msra.mxu0 0.0
        %3214 = vmatprep.subr.mxu0 0.0
        %3215 = vmatpush2.msra.mxu0 0.0
        %3216 = vmatprep.subr.mxu0 0.0
        %3217 = vmatpush2.msra.mxu0 0.0
        %3218 = vmatprep.subr.mxu0 0.0
        %3219 = vmatpush2.msra.mxu0 0.0
        %3220 = vmatprep.subr.mxu0 0.0
        %3221 = vmatpush2.msra.mxu0 0.0
        %3222 = vmatprep.subr.mxu0 0.0
        %3223 = vmatpush2.msra.mxu0 0.0
        %3224 = vmatprep.subr.mxu0 0.0
        %3225 = vmatpush2.msra.mxu0 0.0
        %3226 = vmatprep.mubr.f32.mxu0 0.0
        %v3227 = vand.u32 %v233, 4294901760
        %v3228 = vsub.f32 %v233, %v3227
        %3229 = vmatmul.mubr.f32.gmra.mxu0 %v3228
        %v3230 = vpop.f32.mrf.mxu0
        %v3231 = vadd.f32 %v3142, %v3230
        %v3232 = vpop.f32.mrf.mxu0
        %v3233 = vadd.f32 %v3144, %v3232
        %3234 = vdwg.mxu0
        %3235 = vmatprep.subr.mxu0 0.0
        %3236 = vmatpush1.msra.mxu0 0.0
        %3237 = vmatprep.subr.mxu0 0.0
        %3238 = vmatpush1.msra.mxu0 0.0
        %3239 = vmatprep.subr.mxu0 0.0
        %3240 = vmatpush1.msra.mxu0 0.0
        %3241 = vmatprep.subr.mxu0 0.0
        %3242 = vmatpush1.msra.mxu0 0.0
        %3243 = vmatprep.subr.mxu0 0.0
        %3244 = vmatpush1.msra.mxu0 0.0
        %3245 = vmatprep.subr.mxu0 0.0
        %3246 = vmatpush1.msra.mxu0 0.0
        %3247 = vmatprep.subr.mxu0 0.0
        %3248 = vmatpush1.msra.mxu0 0.0
        %3249 = vmatprep.subr.mxu0 0.0
        %3250 = vmatpush1.msra.mxu0 0.0
        %3251 = vmatprep.subr.mxu0 0.0
        %3252 = vmatpush1.msra.mxu0 0.0
        %3253 = vmatprep.subr.mxu0 0.0
        %3254 = vmatpush1.msra.mxu0 0.0
        %3255 = vmatprep.subr.mxu0 0.0
        %3256 = vmatpush1.msra.mxu0 0.0
        %3257 = vmatprep.subr.mxu0 0.0
        %3258 = vmatpush1.msra.mxu0 0.0
        %v3259 = vand.u32 %v225, 4294901760
        %3260 = vmatprep.subr.mxu0 %v3259
        %v3261 = vand.u32 %v224, 4294901760
        %3262 = vmatpush1.msra.mxu0 %v3261
        %v3263 = vand.u32 %v209, 4294901760
        %3264 = vmatprep.subr.mxu0 %v3263
        %v3265 = vand.u32 %v208, 4294901760
        %3266 = vmatpush1.msra.mxu0 %v3265
        %v3267 = vand.u32 %v193, 4294901760
        %3268 = vmatprep.subr.mxu0 %v3267
        %v3269 = vand.u32 %v192, 4294901760
        %3270 = vmatpush1.msra.mxu0 %v3269
        %v3271 = vand.u32 %v177, 4294901760
        %3272 = vmatprep.subr.mxu0 %v3271
        %v3273 = vand.u32 %v176, 4294901760
        %3274 = vmatpush1.msra.mxu0 %v3273
        %3275 = vmatprep.subr.mxu0 0.0
        %3276 = vmatpush2.msra.mxu0 0.0
        %3277 = vmatprep.subr.mxu0 0.0
        %3278 = vmatpush2.msra.mxu0 0.0
        %3279 = vmatprep.subr.mxu0 0.0
        %3280 = vmatpush2.msra.mxu0 0.0
        %3281 = vmatprep.subr.mxu0 0.0
        %3282 = vmatpush2.msra.mxu0 0.0
        %3283 = vmatprep.subr.mxu0 0.0
        %3284 = vmatpush2.msra.mxu0 0.0
        %3285 = vmatprep.subr.mxu0 0.0
        %3286 = vmatpush2.msra.mxu0 0.0
        %3287 = vmatprep.subr.mxu0 0.0
        %3288 = vmatpush2.msra.mxu0 0.0
        %3289 = vmatprep.subr.mxu0 0.0
        %3290 = vmatpush2.msra.mxu0 0.0
        %3291 = vmatprep.subr.mxu0 0.0
        %3292 = vmatpush2.msra.mxu0 0.0
        %3293 = vmatprep.subr.mxu0 0.0
        %3294 = vmatpush2.msra.mxu0 0.0
        %3295 = vmatprep.subr.mxu0 0.0
        %3296 = vmatpush2.msra.mxu0 0.0
        %3297 = vmatprep.subr.mxu0 0.0
        %3298 = vmatpush2.msra.mxu0 0.0
        %3299 = vmatprep.subr.mxu0 0.0
        %3300 = vmatpush2.msra.mxu0 0.0
        %3301 = vmatprep.subr.mxu0 0.0
        %3302 = vmatpush2.msra.mxu0 0.0
        %3303 = vmatprep.subr.mxu0 0.0
        %3304 = vmatpush2.msra.mxu0 0.0
        %3305 = vmatprep.subr.mxu0 0.0
        %3306 = vmatpush2.msra.mxu0 0.0
        %3307 = vmatprep.mubr.f32.mxu0 0.0
        %v3308 = vand.u32 %v233, 4294901760
        %v3309 = vsub.f32 %v233, %v3308
        %v3310 = vand.u32 %v3309, 4294901760
        %3311 = vmatmul.mubr.f32.gmra.mxu0 %v3310
        %v3312 = vpop.f32.mrf.mxu0
        %v3313 = vadd.f32 %v3231, %v3312
        %v3314 = vpop.f32.mrf.mxu0
        %v3315 = vadd.f32 %v3233, %v3314
        %3316 = vdwg.mxu0
        %3317 = vmatprep.subr.mxu0 0.0
        %3318 = vmatpush1.msra.mxu0 0.0
        %3319 = vmatprep.subr.mxu0 0.0
        %3320 = vmatpush1.msra.mxu0 0.0
        %3321 = vmatprep.subr.mxu0 0.0
        %3322 = vmatpush1.msra.mxu0 0.0
        %3323 = vmatprep.subr.mxu0 0.0
        %3324 = vmatpush1.msra.mxu0 0.0
        %3325 = vmatprep.subr.mxu0 0.0
        %3326 = vmatpush1.msra.mxu0 0.0
        %3327 = vmatprep.subr.mxu0 0.0
        %3328 = vmatpush1.msra.mxu0 0.0
        %3329 = vmatprep.subr.mxu0 0.0
        %3330 = vmatpush1.msra.mxu0 0.0
        %3331 = vmatprep.subr.mxu0 0.0
        %3332 = vmatpush1.msra.mxu0 0.0
        %3333 = vmatprep.subr.mxu0 0.0
        %3334 = vmatpush1.msra.mxu0 0.0
        %3335 = vmatprep.subr.mxu0 0.0
        %3336 = vmatpush1.msra.mxu0 0.0
        %3337 = vmatprep.subr.mxu0 0.0
        %3338 = vmatpush1.msra.mxu0 0.0
        %3339 = vmatprep.subr.mxu0 0.0
        %3340 = vmatpush1.msra.mxu0 0.0
        %v3341 = vand.u32 %v225, 4294901760
        %v3342 = vsub.f32 %v225, %v3341
        %v3343 = vand.u32 %v3342, 4294901760
        %3344 = vmatprep.subr.mxu0 %v3343
        %v3345 = vand.u32 %v224, 4294901760
        %v3346 = vsub.f32 %v224, %v3345
        %v3347 = vand.u32 %v3346, 4294901760
        %3348 = vmatpush1.msra.mxu0 %v3347
        %v3349 = vand.u32 %v209, 4294901760
        %v3350 = vsub.f32 %v209, %v3349
        %v3351 = vand.u32 %v3350, 4294901760
        %3352 = vmatprep.subr.mxu0 %v3351
        %v3353 = vand.u32 %v208, 4294901760
        %v3354 = vsub.f32 %v208, %v3353
        %v3355 = vand.u32 %v3354, 4294901760
        %3356 = vmatpush1.msra.mxu0 %v3355
        %v3357 = vand.u32 %v193, 4294901760
        %v3358 = vsub.f32 %v193, %v3357
        %v3359 = vand.u32 %v3358, 4294901760
        %3360 = vmatprep.subr.mxu0 %v3359
        %v3361 = vand.u32 %v192, 4294901760
        %v3362 = vsub.f32 %v192, %v3361
        %v3363 = vand.u32 %v3362, 4294901760
        %3364 = vmatpush1.msra.mxu0 %v3363
        %v3365 = vand.u32 %v177, 4294901760
        %v3366 = vsub.f32 %v177, %v3365
        %v3367 = vand.u32 %v3366, 4294901760
        %3368 = vmatprep.subr.mxu0 %v3367
        %v3369 = vand.u32 %v176, 4294901760
        %v3370 = vsub.f32 %v176, %v3369
        %v3371 = vand.u32 %v3370, 4294901760
        %3372 = vmatpush1.msra.mxu0 %v3371
        %3373 = vmatprep.subr.mxu0 0.0
        %3374 = vmatpush2.msra.mxu0 0.0
        %3375 = vmatprep.subr.mxu0 0.0
        %3376 = vmatpush2.msra.mxu0 0.0
        %3377 = vmatprep.subr.mxu0 0.0
        %3378 = vmatpush2.msra.mxu0 0.0
        %3379 = vmatprep.subr.mxu0 0.0
        %3380 = vmatpush2.msra.mxu0 0.0
        %3381 = vmatprep.subr.mxu0 0.0
        %3382 = vmatpush2.msra.mxu0 0.0
        %3383 = vmatprep.subr.mxu0 0.0
        %3384 = vmatpush2.msra.mxu0 0.0
        %3385 = vmatprep.subr.mxu0 0.0
        %3386 = vmatpush2.msra.mxu0 0.0
        %3387 = vmatprep.subr.mxu0 0.0
        %3388 = vmatpush2.msra.mxu0 0.0
        %3389 = vmatprep.subr.mxu0 0.0
        %3390 = vmatpush2.msra.mxu0 0.0
        %3391 = vmatprep.subr.mxu0 0.0
        %3392 = vmatpush2.msra.mxu0 0.0
        %3393 = vmatprep.subr.mxu0 0.0
        %3394 = vmatpush2.msra.mxu0 0.0
        %3395 = vmatprep.subr.mxu0 0.0
        %3396 = vmatpush2.msra.mxu0 0.0
        %3397 = vmatprep.subr.mxu0 0.0
        %3398 = vmatpush2.msra.mxu0 0.0
        %3399 = vmatprep.subr.mxu0 0.0
        %3400 = vmatpush2.msra.mxu0 0.0
        %3401 = vmatprep.subr.mxu0 0.0
        %3402 = vmatpush2.msra.mxu0 0.0
        %3403 = vmatprep.subr.mxu0 0.0
        %3404 = vmatpush2.msra.mxu0 0.0
        %3405 = vmatprep.mubr.f32.mxu0 0.0
        %v3406 = vand.u32 %v233, 4294901760
        %3407 = vmatmul.mubr.f32.gmra.mxu0 %v3406
        %v3408 = vpop.f32.mrf.mxu0
        %v3409 = vadd.f32 %v3313, %v3408
        %v3410 = vpop.f32.mrf.mxu0
        %v3411 = vadd.f32 %v3315, %v3410
        %3412 = vdwg.mxu0
        %3413 = vmatprep.subr.mxu0 0.0
        %3414 = vmatpush1.msra.mxu0 0.0
        %3415 = vmatprep.subr.mxu0 0.0
        %3416 = vmatpush1.msra.mxu0 0.0
        %3417 = vmatprep.subr.mxu0 0.0
        %3418 = vmatpush1.msra.mxu0 0.0
        %3419 = vmatprep.subr.mxu0 0.0
        %3420 = vmatpush1.msra.mxu0 0.0
        %3421 = vmatprep.subr.mxu0 0.0
        %3422 = vmatpush1.msra.mxu0 0.0
        %3423 = vmatprep.subr.mxu0 0.0
        %3424 = vmatpush1.msra.mxu0 0.0
        %3425 = vmatprep.subr.mxu0 0.0
        %3426 = vmatpush1.msra.mxu0 0.0
        %3427 = vmatprep.subr.mxu0 0.0
        %3428 = vmatpush1.msra.mxu0 0.0
        %3429 = vmatprep.subr.mxu0 0.0
        %3430 = vmatpush1.msra.mxu0 0.0
        %3431 = vmatprep.subr.mxu0 0.0
        %3432 = vmatpush1.msra.mxu0 0.0
        %3433 = vmatprep.subr.mxu0 0.0
        %3434 = vmatpush1.msra.mxu0 0.0
        %3435 = vmatprep.subr.mxu0 0.0
        %3436 = vmatpush1.msra.mxu0 0.0
        %v3437 = vand.u32 %v225, 4294901760
        %3438 = vmatprep.subr.mxu0 %v3437
        %v3439 = vand.u32 %v224, 4294901760
        %3440 = vmatpush1.msra.mxu0 %v3439
        %v3441 = vand.u32 %v209, 4294901760
        %3442 = vmatprep.subr.mxu0 %v3441
        %v3443 = vand.u32 %v208, 4294901760
        %3444 = vmatpush1.msra.mxu0 %v3443
        %v3445 = vand.u32 %v193, 4294901760
        %3446 = vmatprep.subr.mxu0 %v3445
        %v3447 = vand.u32 %v192, 4294901760
        %3448 = vmatpush1.msra.mxu0 %v3447
        %v3449 = vand.u32 %v177, 4294901760
        %3450 = vmatprep.subr.mxu0 %v3449
        %v3451 = vand.u32 %v176, 4294901760
        %3452 = vmatpush1.msra.mxu0 %v3451
        %3453 = vmatprep.subr.mxu0 0.0
        %3454 = vmatpush2.msra.mxu0 0.0
        %3455 = vmatprep.subr.mxu0 0.0
        %3456 = vmatpush2.msra.mxu0 0.0
        %3457 = vmatprep.subr.mxu0 0.0
        %3458 = vmatpush2.msra.mxu0 0.0
        %3459 = vmatprep.subr.mxu0 0.0
        %3460 = vmatpush2.msra.mxu0 0.0
        %3461 = vmatprep.subr.mxu0 0.0
        %3462 = vmatpush2.msra.mxu0 0.0
        %3463 = vmatprep.subr.mxu0 0.0
        %3464 = vmatpush2.msra.mxu0 0.0
        %3465 = vmatprep.subr.mxu0 0.0
        %3466 = vmatpush2.msra.mxu0 0.0
        %3467 = vmatprep.subr.mxu0 0.0
        %3468 = vmatpush2.msra.mxu0 0.0
        %3469 = vmatprep.subr.mxu0 0.0
        %3470 = vmatpush2.msra.mxu0 0.0
        %3471 = vmatprep.subr.mxu0 0.0
        %3472 = vmatpush2.msra.mxu0 0.0
        %3473 = vmatprep.subr.mxu0 0.0
        %3474 = vmatpush2.msra.mxu0 0.0
        %3475 = vmatprep.subr.mxu0 0.0
        %3476 = vmatpush2.msra.mxu0 0.0
        %3477 = vmatprep.subr.mxu0 0.0
        %3478 = vmatpush2.msra.mxu0 0.0
        %3479 = vmatprep.subr.mxu0 0.0
        %3480 = vmatpush2.msra.mxu0 0.0
        %3481 = vmatprep.subr.mxu0 0.0
        %3482 = vmatpush2.msra.mxu0 0.0
        %3483 = vmatprep.subr.mxu0 0.0
        %3484 = vmatpush2.msra.mxu0 0.0
        %3485 = vmatprep.mubr.f32.mxu0 0.0
        %v3486 = vand.u32 %v233, 4294901760
        %3487 = vmatmul.mubr.f32.gmra.mxu0 %v3486
        %v3488 = vpop.f32.mrf.mxu0
        %v3489 = vadd.f32 %v3409, %v3488
        %v3490 = vpop.f32.mrf.mxu0
        %v3491 = vadd.f32 %v3411, %v3490
        %3492 = vdwg.mxu0
        %3493 = vmatprep.subr.mxu0 0.0
        %3494 = vmatpush1.msra.mxu0 0.0
        %3495 = vmatprep.subr.mxu0 0.0
        %3496 = vmatpush1.msra.mxu0 0.0
        %3497 = vmatprep.subr.mxu0 0.0
        %3498 = vmatpush1.msra.mxu0 0.0
        %3499 = vmatprep.subr.mxu0 0.0
        %3500 = vmatpush1.msra.mxu0 0.0
        %3501 = vmatprep.subr.mxu0 0.0
        %3502 = vmatpush1.msra.mxu0 0.0
        %3503 = vmatprep.subr.mxu0 0.0
        %3504 = vmatpush1.msra.mxu0 0.0
        %3505 = vmatprep.subr.mxu0 0.0
        %3506 = vmatpush1.msra.mxu0 0.0
        %3507 = vmatprep.subr.mxu0 0.0
        %3508 = vmatpush1.msra.mxu0 0.0
        %3509 = vmatprep.subr.mxu0 0.0
        %3510 = vmatpush1.msra.mxu0 0.0
        %3511 = vmatprep.subr.mxu0 0.0
        %3512 = vmatpush1.msra.mxu0 0.0
        %3513 = vmatprep.subr.mxu0 0.0
        %3514 = vmatpush1.msra.mxu0 0.0
        %3515 = vmatprep.subr.mxu0 0.0
        %3516 = vmatpush1.msra.mxu0 0.0
        %v3517 = vand.u32 %v227, 4294901760
        %3518 = vmatprep.subr.mxu0 %v3517
        %v3519 = vand.u32 %v226, 4294901760
        %3520 = vmatpush1.msra.mxu0 %v3519
        %v3521 = vand.u32 %v211, 4294901760
        %3522 = vmatprep.subr.mxu0 %v3521
        %v3523 = vand.u32 %v210, 4294901760
        %3524 = vmatpush1.msra.mxu0 %v3523
        %v3525 = vand.u32 %v195, 4294901760
        %3526 = vmatprep.subr.mxu0 %v3525
        %v3527 = vand.u32 %v194, 4294901760
        %3528 = vmatpush1.msra.mxu0 %v3527
        %v3529 = vand.u32 %v179, 4294901760
        %3530 = vmatprep.subr.mxu0 %v3529
        %v3531 = vand.u32 %v178, 4294901760
        %3532 = vmatpush1.msra.mxu0 %v3531
        %3533 = vmatprep.subr.mxu0 0.0
        %3534 = vmatpush2.msra.mxu0 0.0
        %3535 = vmatprep.subr.mxu0 0.0
        %3536 = vmatpush2.msra.mxu0 0.0
        %3537 = vmatprep.subr.mxu0 0.0
        %3538 = vmatpush2.msra.mxu0 0.0
        %3539 = vmatprep.subr.mxu0 0.0
        %3540 = vmatpush2.msra.mxu0 0.0
        %3541 = vmatprep.subr.mxu0 0.0
        %3542 = vmatpush2.msra.mxu0 0.0
        %3543 = vmatprep.subr.mxu0 0.0
        %3544 = vmatpush2.msra.mxu0 0.0
        %3545 = vmatprep.subr.mxu0 0.0
        %3546 = vmatpush2.msra.mxu0 0.0
        %3547 = vmatprep.subr.mxu0 0.0
        %3548 = vmatpush2.msra.mxu0 0.0
        %3549 = vmatprep.subr.mxu0 0.0
        %3550 = vmatpush2.msra.mxu0 0.0
        %3551 = vmatprep.subr.mxu0 0.0
        %3552 = vmatpush2.msra.mxu0 0.0
        %3553 = vmatprep.subr.mxu0 0.0
        %3554 = vmatpush2.msra.mxu0 0.0
        %3555 = vmatprep.subr.mxu0 0.0
        %3556 = vmatpush2.msra.mxu0 0.0
        %3557 = vmatprep.subr.mxu0 0.0
        %3558 = vmatpush2.msra.mxu0 0.0
        %3559 = vmatprep.subr.mxu0 0.0
        %3560 = vmatpush2.msra.mxu0 0.0
        %3561 = vmatprep.subr.mxu0 0.0
        %3562 = vmatpush2.msra.mxu0 0.0
        %3563 = vmatprep.subr.mxu0 0.0
        %3564 = vmatpush2.msra.mxu0 0.0
        %3565 = vmatprep.mubr.f32.mxu0 0.0
        %v3566 = vand.u32 %v233, 4294901760
        %v3567 = vsub.f32 %v233, %v3566
        %v3568 = vand.u32 %v3567, 4294901760
        %v3569 = vsub.f32 %v3567, %v3568
        %v3570 = vand.u32 %v3569, 4294901760
        %3571 = vmatmul.mubr.f32.gmra.mxu0 %v3570
        %v3572 = vpop.f32.mrf.mxu0
        %v3573 = vadd.f32 0.0, %v3572
        %v3574 = vpop.f32.mrf.mxu0
        %v3575 = vadd.f32 0.0, %v3574
        %3576 = vdwg.mxu0
        %3577 = vmatprep.subr.mxu0 0.0
        %3578 = vmatpush1.msra.mxu0 0.0
        %3579 = vmatprep.subr.mxu0 0.0
        %3580 = vmatpush1.msra.mxu0 0.0
        %3581 = vmatprep.subr.mxu0 0.0
        %3582 = vmatpush1.msra.mxu0 0.0
        %3583 = vmatprep.subr.mxu0 0.0
        %3584 = vmatpush1.msra.mxu0 0.0
        %3585 = vmatprep.subr.mxu0 0.0
        %3586 = vmatpush1.msra.mxu0 0.0
        %3587 = vmatprep.subr.mxu0 0.0
        %3588 = vmatpush1.msra.mxu0 0.0
        %3589 = vmatprep.subr.mxu0 0.0
        %3590 = vmatpush1.msra.mxu0 0.0
        %3591 = vmatprep.subr.mxu0 0.0
        %3592 = vmatpush1.msra.mxu0 0.0
        %3593 = vmatprep.subr.mxu0 0.0
        %3594 = vmatpush1.msra.mxu0 0.0
        %3595 = vmatprep.subr.mxu0 0.0
        %3596 = vmatpush1.msra.mxu0 0.0
        %3597 = vmatprep.subr.mxu0 0.0
        %3598 = vmatpush1.msra.mxu0 0.0
        %3599 = vmatprep.subr.mxu0 0.0
        %3600 = vmatpush1.msra.mxu0 0.0
        %v3601 = vand.u32 %v227, 4294901760
        %v3602 = vsub.f32 %v227, %v3601
        %v3603 = vand.u32 %v3602, 4294901760
        %v3604 = vsub.f32 %v3602, %v3603
        %v3605 = vand.u32 %v3604, 4294901760
        %3606 = vmatprep.subr.mxu0 %v3605
        %v3607 = vand.u32 %v226, 4294901760
        %v3608 = vsub.f32 %v226, %v3607
        %v3609 = vand.u32 %v3608, 4294901760
        %v3610 = vsub.f32 %v3608, %v3609
        %v3611 = vand.u32 %v3610, 4294901760
        %3612 = vmatpush1.msra.mxu0 %v3611
        %v3613 = vand.u32 %v211, 4294901760
        %v3614 = vsub.f32 %v211, %v3613
        %v3615 = vand.u32 %v3614, 4294901760
        %v3616 = vsub.f32 %v3614, %v3615
        %v3617 = vand.u32 %v3616, 4294901760
        %3618 = vmatprep.subr.mxu0 %v3617
        %v3619 = vand.u32 %v210, 4294901760
        %v3620 = vsub.f32 %v210, %v3619
        %v3621 = vand.u32 %v3620, 4294901760
        %v3622 = vsub.f32 %v3620, %v3621
        %v3623 = vand.u32 %v3622, 4294901760
        %3624 = vmatpush1.msra.mxu0 %v3623
        %v3625 = vand.u32 %v195, 4294901760
        %v3626 = vsub.f32 %v195, %v3625
        %v3627 = vand.u32 %v3626, 4294901760
        %v3628 = vsub.f32 %v3626, %v3627
        %v3629 = vand.u32 %v3628, 4294901760
        %3630 = vmatprep.subr.mxu0 %v3629
        %v3631 = vand.u32 %v194, 4294901760
        %v3632 = vsub.f32 %v194, %v3631
        %v3633 = vand.u32 %v3632, 4294901760
        %v3634 = vsub.f32 %v3632, %v3633
        %v3635 = vand.u32 %v3634, 4294901760
        %3636 = vmatpush1.msra.mxu0 %v3635
        %v3637 = vand.u32 %v179, 4294901760
        %v3638 = vsub.f32 %v179, %v3637
        %v3639 = vand.u32 %v3638, 4294901760
        %v3640 = vsub.f32 %v3638, %v3639
        %v3641 = vand.u32 %v3640, 4294901760
        %3642 = vmatprep.subr.mxu0 %v3641
        %v3643 = vand.u32 %v178, 4294901760
        %v3644 = vsub.f32 %v178, %v3643
        %v3645 = vand.u32 %v3644, 4294901760
        %v3646 = vsub.f32 %v3644, %v3645
        %v3647 = vand.u32 %v3646, 4294901760
        %3648 = vmatpush1.msra.mxu0 %v3647
        %3649 = vmatprep.subr.mxu0 0.0
        %3650 = vmatpush2.msra.mxu0 0.0
        %3651 = vmatprep.subr.mxu0 0.0
        %3652 = vmatpush2.msra.mxu0 0.0
        %3653 = vmatprep.subr.mxu0 0.0
        %3654 = vmatpush2.msra.mxu0 0.0
        %3655 = vmatprep.subr.mxu0 0.0
        %3656 = vmatpush2.msra.mxu0 0.0
        %3657 = vmatprep.subr.mxu0 0.0
        %3658 = vmatpush2.msra.mxu0 0.0
        %3659 = vmatprep.subr.mxu0 0.0
        %3660 = vmatpush2.msra.mxu0 0.0
        %3661 = vmatprep.subr.mxu0 0.0
        %3662 = vmatpush2.msra.mxu0 0.0
        %3663 = vmatprep.subr.mxu0 0.0
        %3664 = vmatpush2.msra.mxu0 0.0
        %3665 = vmatprep.subr.mxu0 0.0
        %3666 = vmatpush2.msra.mxu0 0.0
        %3667 = vmatprep.subr.mxu0 0.0
        %3668 = vmatpush2.msra.mxu0 0.0
        %3669 = vmatprep.subr.mxu0 0.0
        %3670 = vmatpush2.msra.mxu0 0.0
        %3671 = vmatprep.subr.mxu0 0.0
        %3672 = vmatpush2.msra.mxu0 0.0
        %3673 = vmatprep.subr.mxu0 0.0
        %3674 = vmatpush2.msra.mxu0 0.0
        %3675 = vmatprep.subr.mxu0 0.0
        %3676 = vmatpush2.msra.mxu0 0.0
        %3677 = vmatprep.subr.mxu0 0.0
        %3678 = vmatpush2.msra.mxu0 0.0
        %3679 = vmatprep.subr.mxu0 0.0
        %3680 = vmatpush2.msra.mxu0 0.0
        %3681 = vmatprep.mubr.f32.mxu0 0.0
        %v3682 = vand.u32 %v233, 4294901760
        %3683 = vmatmul.mubr.f32.gmra.mxu0 %v3682
        %v3684 = vpop.f32.mrf.mxu0
        %v3685 = vadd.f32 %v3573, %v3684
        %v3686 = vpop.f32.mrf.mxu0
        %v3687 = vadd.f32 %v3575, %v3686
        %3688 = vdwg.mxu0
        %3689 = vmatprep.subr.mxu0 0.0
        %3690 = vmatpush1.msra.mxu0 0.0
        %3691 = vmatprep.subr.mxu0 0.0
        %3692 = vmatpush1.msra.mxu0 0.0
        %3693 = vmatprep.subr.mxu0 0.0
        %3694 = vmatpush1.msra.mxu0 0.0
        %3695 = vmatprep.subr.mxu0 0.0
        %3696 = vmatpush1.msra.mxu0 0.0
        %3697 = vmatprep.subr.mxu0 0.0
        %3698 = vmatpush1.msra.mxu0 0.0
        %3699 = vmatprep.subr.mxu0 0.0
        %3700 = vmatpush1.msra.mxu0 0.0
        %3701 = vmatprep.subr.mxu0 0.0
        %3702 = vmatpush1.msra.mxu0 0.0
        %3703 = vmatprep.subr.mxu0 0.0
        %3704 = vmatpush1.msra.mxu0 0.0
        %3705 = vmatprep.subr.mxu0 0.0
        %3706 = vmatpush1.msra.mxu0 0.0
        %3707 = vmatprep.subr.mxu0 0.0
        %3708 = vmatpush1.msra.mxu0 0.0
        %3709 = vmatprep.subr.mxu0 0.0
        %3710 = vmatpush1.msra.mxu0 0.0
        %3711 = vmatprep.subr.mxu0 0.0
        %3712 = vmatpush1.msra.mxu0 0.0
        %v3713 = vand.u32 %v227, 4294901760
        %v3714 = vsub.f32 %v227, %v3713
        %3715 = vmatprep.subr.mxu0 %v3714
        %v3716 = vand.u32 %v226, 4294901760
        %v3717 = vsub.f32 %v226, %v3716
        %3718 = vmatpush1.msra.mxu0 %v3717
        %v3719 = vand.u32 %v211, 4294901760
        %v3720 = vsub.f32 %v211, %v3719
        %3721 = vmatprep.subr.mxu0 %v3720
        %v3722 = vand.u32 %v210, 4294901760
        %v3723 = vsub.f32 %v210, %v3722
        %3724 = vmatpush1.msra.mxu0 %v3723
        %v3725 = vand.u32 %v195, 4294901760
        %v3726 = vsub.f32 %v195, %v3725
        %3727 = vmatprep.subr.mxu0 %v3726
        %v3728 = vand.u32 %v194, 4294901760
        %v3729 = vsub.f32 %v194, %v3728
        %3730 = vmatpush1.msra.mxu0 %v3729
        %v3731 = vand.u32 %v179, 4294901760
        %v3732 = vsub.f32 %v179, %v3731
        %3733 = vmatprep.subr.mxu0 %v3732
        %v3734 = vand.u32 %v178, 4294901760
        %v3735 = vsub.f32 %v178, %v3734
        %3736 = vmatpush1.msra.mxu0 %v3735
        %3737 = vmatprep.subr.mxu0 0.0
        %3738 = vmatpush2.msra.mxu0 0.0
        %3739 = vmatprep.subr.mxu0 0.0
        %3740 = vmatpush2.msra.mxu0 0.0
        %3741 = vmatprep.subr.mxu0 0.0
        %3742 = vmatpush2.msra.mxu0 0.0
        %3743 = vmatprep.subr.mxu0 0.0
        %3744 = vmatpush2.msra.mxu0 0.0
        %3745 = vmatprep.subr.mxu0 0.0
        %3746 = vmatpush2.msra.mxu0 0.0
        %3747 = vmatprep.subr.mxu0 0.0
        %3748 = vmatpush2.msra.mxu0 0.0
        %3749 = vmatprep.subr.mxu0 0.0
        %3750 = vmatpush2.msra.mxu0 0.0
        %3751 = vmatprep.subr.mxu0 0.0
        %3752 = vmatpush2.msra.mxu0 0.0
        %3753 = vmatprep.subr.mxu0 0.0
        %3754 = vmatpush2.msra.mxu0 0.0
        %3755 = vmatprep.subr.mxu0 0.0
        %3756 = vmatpush2.msra.mxu0 0.0
        %3757 = vmatprep.subr.mxu0 0.0
        %3758 = vmatpush2.msra.mxu0 0.0
        %3759 = vmatprep.subr.mxu0 0.0
        %3760 = vmatpush2.msra.mxu0 0.0
        %3761 = vmatprep.subr.mxu0 0.0
        %3762 = vmatpush2.msra.mxu0 0.0
        %3763 = vmatprep.subr.mxu0 0.0
        %3764 = vmatpush2.msra.mxu0 0.0
        %3765 = vmatprep.subr.mxu0 0.0
        %3766 = vmatpush2.msra.mxu0 0.0
        %3767 = vmatprep.subr.mxu0 0.0
        %3768 = vmatpush2.msra.mxu0 0.0
        %3769 = vmatprep.mubr.f32.mxu0 0.0
        %v3770 = vand.u32 %v233, 4294901760
        %v3771 = vsub.f32 %v233, %v3770
        %3772 = vmatmul.mubr.f32.gmra.mxu0 %v3771
        %v3773 = vpop.f32.mrf.mxu0
        %v3774 = vadd.f32 %v3685, %v3773
        %v3775 = vpop.f32.mrf.mxu0
        %v3776 = vadd.f32 %v3687, %v3775
        %3777 = vdwg.mxu0
        %3778 = vmatprep.subr.mxu0 0.0
        %3779 = vmatpush1.msra.mxu0 0.0
        %3780 = vmatprep.subr.mxu0 0.0
        %3781 = vmatpush1.msra.mxu0 0.0
        %3782 = vmatprep.subr.mxu0 0.0
        %3783 = vmatpush1.msra.mxu0 0.0
        %3784 = vmatprep.subr.mxu0 0.0
        %3785 = vmatpush1.msra.mxu0 0.0
        %3786 = vmatprep.subr.mxu0 0.0
        %3787 = vmatpush1.msra.mxu0 0.0
        %3788 = vmatprep.subr.mxu0 0.0
        %3789 = vmatpush1.msra.mxu0 0.0
        %3790 = vmatprep.subr.mxu0 0.0
        %3791 = vmatpush1.msra.mxu0 0.0
        %3792 = vmatprep.subr.mxu0 0.0
        %3793 = vmatpush1.msra.mxu0 0.0
        %3794 = vmatprep.subr.mxu0 0.0
        %3795 = vmatpush1.msra.mxu0 0.0
        %3796 = vmatprep.subr.mxu0 0.0
        %3797 = vmatpush1.msra.mxu0 0.0
        %3798 = vmatprep.subr.mxu0 0.0
        %3799 = vmatpush1.msra.mxu0 0.0
        %3800 = vmatprep.subr.mxu0 0.0
        %3801 = vmatpush1.msra.mxu0 0.0
        %v3802 = vand.u32 %v227, 4294901760
        %3803 = vmatprep.subr.mxu0 %v3802
        %v3804 = vand.u32 %v226, 4294901760
        %3805 = vmatpush1.msra.mxu0 %v3804
        %v3806 = vand.u32 %v211, 4294901760
        %3807 = vmatprep.subr.mxu0 %v3806
        %v3808 = vand.u32 %v210, 4294901760
        %3809 = vmatpush1.msra.mxu0 %v3808
        %v3810 = vand.u32 %v195, 4294901760
        %3811 = vmatprep.subr.mxu0 %v3810
        %v3812 = vand.u32 %v194, 4294901760
        %3813 = vmatpush1.msra.mxu0 %v3812
        %v3814 = vand.u32 %v179, 4294901760
        %3815 = vmatprep.subr.mxu0 %v3814
        %v3816 = vand.u32 %v178, 4294901760
        %3817 = vmatpush1.msra.mxu0 %v3816
        %3818 = vmatprep.subr.mxu0 0.0
        %3819 = vmatpush2.msra.mxu0 0.0
        %3820 = vmatprep.subr.mxu0 0.0
        %3821 = vmatpush2.msra.mxu0 0.0
        %3822 = vmatprep.subr.mxu0 0.0
        %3823 = vmatpush2.msra.mxu0 0.0
        %3824 = vmatprep.subr.mxu0 0.0
        %3825 = vmatpush2.msra.mxu0 0.0
        %3826 = vmatprep.subr.mxu0 0.0
        %3827 = vmatpush2.msra.mxu0 0.0
        %3828 = vmatprep.subr.mxu0 0.0
        %3829 = vmatpush2.msra.mxu0 0.0
        %3830 = vmatprep.subr.mxu0 0.0
        %3831 = vmatpush2.msra.mxu0 0.0
        %3832 = vmatprep.subr.mxu0 0.0
        %3833 = vmatpush2.msra.mxu0 0.0
        %3834 = vmatprep.subr.mxu0 0.0
        %3835 = vmatpush2.msra.mxu0 0.0
        %3836 = vmatprep.subr.mxu0 0.0
        %3837 = vmatpush2.msra.mxu0 0.0
        %3838 = vmatprep.subr.mxu0 0.0
        %3839 = vmatpush2.msra.mxu0 0.0
        %3840 = vmatprep.subr.mxu0 0.0
        %3841 = vmatpush2.msra.mxu0 0.0
        %3842 = vmatprep.subr.mxu0 0.0
        %3843 = vmatpush2.msra.mxu0 0.0
        %3844 = vmatprep.subr.mxu0 0.0
        %3845 = vmatpush2.msra.mxu0 0.0
        %3846 = vmatprep.subr.mxu0 0.0
        %3847 = vmatpush2.msra.mxu0 0.0
        %3848 = vmatprep.subr.mxu0 0.0
        %3849 = vmatpush2.msra.mxu0 0.0
        %3850 = vmatprep.mubr.f32.mxu0 0.0
        %v3851 = vand.u32 %v233, 4294901760
        %v3852 = vsub.f32 %v233, %v3851
        %v3853 = vand.u32 %v3852, 4294901760
        %3854 = vmatmul.mubr.f32.gmra.mxu0 %v3853
        %v3855 = vpop.f32.mrf.mxu0
        %v3856 = vadd.f32 %v3774, %v3855
        %v3857 = vpop.f32.mrf.mxu0
        %v3858 = vadd.f32 %v3776, %v3857
        %3859 = vdwg.mxu0
        %3860 = vmatprep.subr.mxu0 0.0
        %3861 = vmatpush1.msra.mxu0 0.0
        %3862 = vmatprep.subr.mxu0 0.0
        %3863 = vmatpush1.msra.mxu0 0.0
        %3864 = vmatprep.subr.mxu0 0.0
        %3865 = vmatpush1.msra.mxu0 0.0
        %3866 = vmatprep.subr.mxu0 0.0
        %3867 = vmatpush1.msra.mxu0 0.0
        %3868 = vmatprep.subr.mxu0 0.0
        %3869 = vmatpush1.msra.mxu0 0.0
        %3870 = vmatprep.subr.mxu0 0.0
        %3871 = vmatpush1.msra.mxu0 0.0
        %3872 = vmatprep.subr.mxu0 0.0
        %3873 = vmatpush1.msra.mxu0 0.0
        %3874 = vmatprep.subr.mxu0 0.0
        %3875 = vmatpush1.msra.mxu0 0.0
        %3876 = vmatprep.subr.mxu0 0.0
        %3877 = vmatpush1.msra.mxu0 0.0
        %3878 = vmatprep.subr.mxu0 0.0
        %3879 = vmatpush1.msra.mxu0 0.0
        %3880 = vmatprep.subr.mxu0 0.0
        %3881 = vmatpush1.msra.mxu0 0.0
        %3882 = vmatprep.subr.mxu0 0.0
        %3883 = vmatpush1.msra.mxu0 0.0
        %v3884 = vand.u32 %v227, 4294901760
        %v3885 = vsub.f32 %v227, %v3884
        %v3886 = vand.u32 %v3885, 4294901760
        %3887 = vmatprep.subr.mxu0 %v3886
        %v3888 = vand.u32 %v226, 4294901760
        %v3889 = vsub.f32 %v226, %v3888
        %v3890 = vand.u32 %v3889, 4294901760
        %3891 = vmatpush1.msra.mxu0 %v3890
        %v3892 = vand.u32 %v211, 4294901760
        %v3893 = vsub.f32 %v211, %v3892
        %v3894 = vand.u32 %v3893, 4294901760
        %3895 = vmatprep.subr.mxu0 %v3894
        %v3896 = vand.u32 %v210, 4294901760
        %v3897 = vsub.f32 %v210, %v3896
        %v3898 = vand.u32 %v3897, 4294901760
        %3899 = vmatpush1.msra.mxu0 %v3898
        %v3900 = vand.u32 %v195, 4294901760
        %v3901 = vsub.f32 %v195, %v3900
        %v3902 = vand.u32 %v3901, 4294901760
        %3903 = vmatprep.subr.mxu0 %v3902
        %v3904 = vand.u32 %v194, 4294901760
        %v3905 = vsub.f32 %v194, %v3904
        %v3906 = vand.u32 %v3905, 4294901760
        %3907 = vmatpush1.msra.mxu0 %v3906
        %v3908 = vand.u32 %v179, 4294901760
        %v3909 = vsub.f32 %v179, %v3908
        %v3910 = vand.u32 %v3909, 4294901760
        %3911 = vmatprep.subr.mxu0 %v3910
        %v3912 = vand.u32 %v178, 4294901760
        %v3913 = vsub.f32 %v178, %v3912
        %v3914 = vand.u32 %v3913, 4294901760
        %3915 = vmatpush1.msra.mxu0 %v3914
        %3916 = vmatprep.subr.mxu0 0.0
        %3917 = vmatpush2.msra.mxu0 0.0
        %3918 = vmatprep.subr.mxu0 0.0
        %3919 = vmatpush2.msra.mxu0 0.0
        %3920 = vmatprep.subr.mxu0 0.0
        %3921 = vmatpush2.msra.mxu0 0.0
        %3922 = vmatprep.subr.mxu0 0.0
        %3923 = vmatpush2.msra.mxu0 0.0
        %3924 = vmatprep.subr.mxu0 0.0
        %3925 = vmatpush2.msra.mxu0 0.0
        %3926 = vmatprep.subr.mxu0 0.0
        %3927 = vmatpush2.msra.mxu0 0.0
        %3928 = vmatprep.subr.mxu0 0.0
        %3929 = vmatpush2.msra.mxu0 0.0
        %3930 = vmatprep.subr.mxu0 0.0
        %3931 = vmatpush2.msra.mxu0 0.0
        %3932 = vmatprep.subr.mxu0 0.0
        %3933 = vmatpush2.msra.mxu0 0.0
        %3934 = vmatprep.subr.mxu0 0.0
        %3935 = vmatpush2.msra.mxu0 0.0
        %3936 = vmatprep.subr.mxu0 0.0
        %3937 = vmatpush2.msra.mxu0 0.0
        %3938 = vmatprep.subr.mxu0 0.0
        %3939 = vmatpush2.msra.mxu0 0.0
        %3940 = vmatprep.subr.mxu0 0.0
        %3941 = vmatpush2.msra.mxu0 0.0
        %3942 = vmatprep.subr.mxu0 0.0
        %3943 = vmatpush2.msra.mxu0 0.0
        %3944 = vmatprep.subr.mxu0 0.0
        %3945 = vmatpush2.msra.mxu0 0.0
        %3946 = vmatprep.subr.mxu0 0.0
        %3947 = vmatpush2.msra.mxu0 0.0
        %3948 = vmatprep.mubr.f32.mxu0 0.0
        %v3949 = vand.u32 %v233, 4294901760
        %3950 = vmatmul.mubr.f32.gmra.mxu0 %v3949
        %v3951 = vpop.f32.mrf.mxu0
        %v3952 = vadd.f32 %v3856, %v3951
        %v3953 = vpop.f32.mrf.mxu0
        %v3954 = vadd.f32 %v3858, %v3953
        %3955 = vdwg.mxu0
        %3956 = vmatprep.subr.mxu0 0.0
        %3957 = vmatpush1.msra.mxu0 0.0
        %3958 = vmatprep.subr.mxu0 0.0
        %3959 = vmatpush1.msra.mxu0 0.0
        %3960 = vmatprep.subr.mxu0 0.0
        %3961 = vmatpush1.msra.mxu0 0.0
        %3962 = vmatprep.subr.mxu0 0.0
        %3963 = vmatpush1.msra.mxu0 0.0
        %3964 = vmatprep.subr.mxu0 0.0
        %3965 = vmatpush1.msra.mxu0 0.0
        %3966 = vmatprep.subr.mxu0 0.0
        %3967 = vmatpush1.msra.mxu0 0.0
        %3968 = vmatprep.subr.mxu0 0.0
        %3969 = vmatpush1.msra.mxu0 0.0
        %3970 = vmatprep.subr.mxu0 0.0
        %3971 = vmatpush1.msra.mxu0 0.0
        %3972 = vmatprep.subr.mxu0 0.0
        %3973 = vmatpush1.msra.mxu0 0.0
        %3974 = vmatprep.subr.mxu0 0.0
        %3975 = vmatpush1.msra.mxu0 0.0
        %3976 = vmatprep.subr.mxu0 0.0
        %3977 = vmatpush1.msra.mxu0 0.0
        %3978 = vmatprep.subr.mxu0 0.0
        %3979 = vmatpush1.msra.mxu0 0.0
        %v3980 = vand.u32 %v227, 4294901760
        %3981 = vmatprep.subr.mxu0 %v3980
        %v3982 = vand.u32 %v226, 4294901760
        %3983 = vmatpush1.msra.mxu0 %v3982
        %v3984 = vand.u32 %v211, 4294901760
        %3985 = vmatprep.subr.mxu0 %v3984
        %v3986 = vand.u32 %v210, 4294901760
        %3987 = vmatpush1.msra.mxu0 %v3986
        %v3988 = vand.u32 %v195, 4294901760
        %3989 = vmatprep.subr.mxu0 %v3988
        %v3990 = vand.u32 %v194, 4294901760
        %3991 = vmatpush1.msra.mxu0 %v3990
        %v3992 = vand.u32 %v179, 4294901760
        %3993 = vmatprep.subr.mxu0 %v3992
        %v3994 = vand.u32 %v178, 4294901760
        %3995 = vmatpush1.msra.mxu0 %v3994
        %3996 = vmatprep.subr.mxu0 0.0
        %3997 = vmatpush2.msra.mxu0 0.0
        %3998 = vmatprep.subr.mxu0 0.0
        %3999 = vmatpush2.msra.mxu0 0.0
        %4000 = vmatprep.subr.mxu0 0.0
        %4001 = vmatpush2.msra.mxu0 0.0
        %4002 = vmatprep.subr.mxu0 0.0
        %4003 = vmatpush2.msra.mxu0 0.0
        %4004 = vmatprep.subr.mxu0 0.0
        %4005 = vmatpush2.msra.mxu0 0.0
        %4006 = vmatprep.subr.mxu0 0.0
        %4007 = vmatpush2.msra.mxu0 0.0
        %4008 = vmatprep.subr.mxu0 0.0
        %4009 = vmatpush2.msra.mxu0 0.0
        %4010 = vmatprep.subr.mxu0 0.0
        %4011 = vmatpush2.msra.mxu0 0.0
        %4012 = vmatprep.subr.mxu0 0.0
        %4013 = vmatpush2.msra.mxu0 0.0
        %4014 = vmatprep.subr.mxu0 0.0
        %4015 = vmatpush2.msra.mxu0 0.0
        %4016 = vmatprep.subr.mxu0 0.0
        %4017 = vmatpush2.msra.mxu0 0.0
        %4018 = vmatprep.subr.mxu0 0.0
        %4019 = vmatpush2.msra.mxu0 0.0
        %4020 = vmatprep.subr.mxu0 0.0
        %4021 = vmatpush2.msra.mxu0 0.0
        %4022 = vmatprep.subr.mxu0 0.0
        %4023 = vmatpush2.msra.mxu0 0.0
        %4024 = vmatprep.subr.mxu0 0.0
        %4025 = vmatpush2.msra.mxu0 0.0
        %4026 = vmatprep.subr.mxu0 0.0
        %4027 = vmatpush2.msra.mxu0 0.0
        %4028 = vmatprep.mubr.f32.mxu0 0.0
        %v4029 = vand.u32 %v233, 4294901760
        %4030 = vmatmul.mubr.f32.gmra.mxu0 %v4029
        %v4031 = vpop.f32.mrf.mxu0
        %v4032 = vadd.f32 %v3952, %v4031
        %v4033 = vpop.f32.mrf.mxu0
        %v4034 = vadd.f32 %v3954, %v4033
        %4035 = vdwg.mxu0
        %4036 = vmatprep.subr.mxu0 0.0
        %4037 = vmatpush1.msra.mxu0 0.0
        %4038 = vmatprep.subr.mxu0 0.0
        %4039 = vmatpush1.msra.mxu0 0.0
        %4040 = vmatprep.subr.mxu0 0.0
        %4041 = vmatpush1.msra.mxu0 0.0
        %4042 = vmatprep.subr.mxu0 0.0
        %4043 = vmatpush1.msra.mxu0 0.0
        %4044 = vmatprep.subr.mxu0 0.0
        %4045 = vmatpush1.msra.mxu0 0.0
        %4046 = vmatprep.subr.mxu0 0.0
        %4047 = vmatpush1.msra.mxu0 0.0
        %4048 = vmatprep.subr.mxu0 0.0
        %4049 = vmatpush1.msra.mxu0 0.0
        %4050 = vmatprep.subr.mxu0 0.0
        %4051 = vmatpush1.msra.mxu0 0.0
        %4052 = vmatprep.subr.mxu0 0.0
        %4053 = vmatpush1.msra.mxu0 0.0
        %4054 = vmatprep.subr.mxu0 0.0
        %4055 = vmatpush1.msra.mxu0 0.0
        %4056 = vmatprep.subr.mxu0 0.0
        %4057 = vmatpush1.msra.mxu0 0.0
        %4058 = vmatprep.subr.mxu0 0.0
        %4059 = vmatpush1.msra.mxu0 0.0
        %v4060 = vand.u32 %v229, 4294901760
        %4061 = vmatprep.subr.mxu0 %v4060
        %v4062 = vand.u32 %v228, 4294901760
        %4063 = vmatpush1.msra.mxu0 %v4062
        %v4064 = vand.u32 %v213, 4294901760
        %4065 = vmatprep.subr.mxu0 %v4064
        %v4066 = vand.u32 %v212, 4294901760
        %4067 = vmatpush1.msra.mxu0 %v4066
        %v4068 = vand.u32 %v197, 4294901760
        %4069 = vmatprep.subr.mxu0 %v4068
        %v4070 = vand.u32 %v196, 4294901760
        %4071 = vmatpush1.msra.mxu0 %v4070
        %v4072 = vand.u32 %v181, 4294901760
        %4073 = vmatprep.subr.mxu0 %v4072
        %v4074 = vand.u32 %v180, 4294901760
        %4075 = vmatpush1.msra.mxu0 %v4074
        %4076 = vmatprep.subr.mxu0 0.0
        %4077 = vmatpush2.msra.mxu0 0.0
        %4078 = vmatprep.subr.mxu0 0.0
        %4079 = vmatpush2.msra.mxu0 0.0
        %4080 = vmatprep.subr.mxu0 0.0
        %4081 = vmatpush2.msra.mxu0 0.0
        %4082 = vmatprep.subr.mxu0 0.0
        %4083 = vmatpush2.msra.mxu0 0.0
        %4084 = vmatprep.subr.mxu0 0.0
        %4085 = vmatpush2.msra.mxu0 0.0
        %4086 = vmatprep.subr.mxu0 0.0
        %4087 = vmatpush2.msra.mxu0 0.0
        %4088 = vmatprep.subr.mxu0 0.0
        %4089 = vmatpush2.msra.mxu0 0.0
        %4090 = vmatprep.subr.mxu0 0.0
        %4091 = vmatpush2.msra.mxu0 0.0
        %4092 = vmatprep.subr.mxu0 0.0
        %4093 = vmatpush2.msra.mxu0 0.0
        %4094 = vmatprep.subr.mxu0 0.0
        %4095 = vmatpush2.msra.mxu0 0.0
        %4096 = vmatprep.subr.mxu0 0.0
        %4097 = vmatpush2.msra.mxu0 0.0
        %4098 = vmatprep.subr.mxu0 0.0
        %4099 = vmatpush2.msra.mxu0 0.0
        %4100 = vmatprep.subr.mxu0 0.0
        %4101 = vmatpush2.msra.mxu0 0.0
        %4102 = vmatprep.subr.mxu0 0.0
        %4103 = vmatpush2.msra.mxu0 0.0
        %4104 = vmatprep.subr.mxu0 0.0
        %4105 = vmatpush2.msra.mxu0 0.0
        %4106 = vmatprep.subr.mxu0 0.0
        %4107 = vmatpush2.msra.mxu0 0.0
        %4108 = vmatprep.mubr.f32.mxu0 0.0
        %v4109 = vand.u32 %v233, 4294901760
        %v4110 = vsub.f32 %v233, %v4109
        %v4111 = vand.u32 %v4110, 4294901760
        %v4112 = vsub.f32 %v4110, %v4111
        %v4113 = vand.u32 %v4112, 4294901760
        %4114 = vmatmul.mubr.f32.gmra.mxu0 %v4113
        %v4115 = vpop.f32.mrf.mxu0
        %v4116 = vadd.f32 0.0, %v4115
        %v4117 = vpop.f32.mrf.mxu0
        %v4118 = vadd.f32 0.0, %v4117
        %4119 = vdwg.mxu0
        %4120 = vmatprep.subr.mxu0 0.0
        %4121 = vmatpush1.msra.mxu0 0.0
        %4122 = vmatprep.subr.mxu0 0.0
        %4123 = vmatpush1.msra.mxu0 0.0
        %4124 = vmatprep.subr.mxu0 0.0
        %4125 = vmatpush1.msra.mxu0 0.0
        %4126 = vmatprep.subr.mxu0 0.0
        %4127 = vmatpush1.msra.mxu0 0.0
        %4128 = vmatprep.subr.mxu0 0.0
        %4129 = vmatpush1.msra.mxu0 0.0
        %4130 = vmatprep.subr.mxu0 0.0
        %4131 = vmatpush1.msra.mxu0 0.0
        %4132 = vmatprep.subr.mxu0 0.0
        %4133 = vmatpush1.msra.mxu0 0.0
        %4134 = vmatprep.subr.mxu0 0.0
        %4135 = vmatpush1.msra.mxu0 0.0
        %4136 = vmatprep.subr.mxu0 0.0
        %4137 = vmatpush1.msra.mxu0 0.0
        %4138 = vmatprep.subr.mxu0 0.0
        %4139 = vmatpush1.msra.mxu0 0.0
        %4140 = vmatprep.subr.mxu0 0.0
        %4141 = vmatpush1.msra.mxu0 0.0
        %4142 = vmatprep.subr.mxu0 0.0
        %4143 = vmatpush1.msra.mxu0 0.0
        %v4144 = vand.u32 %v229, 4294901760
        %v4145 = vsub.f32 %v229, %v4144
        %v4146 = vand.u32 %v4145, 4294901760
        %v4147 = vsub.f32 %v4145, %v4146
        %v4148 = vand.u32 %v4147, 4294901760
        %4149 = vmatprep.subr.mxu0 %v4148
        %v4150 = vand.u32 %v228, 4294901760
        %v4151 = vsub.f32 %v228, %v4150
        %v4152 = vand.u32 %v4151, 4294901760
        %v4153 = vsub.f32 %v4151, %v4152
        %v4154 = vand.u32 %v4153, 4294901760
        %4155 = vmatpush1.msra.mxu0 %v4154
        %v4156 = vand.u32 %v213, 4294901760
        %v4157 = vsub.f32 %v213, %v4156
        %v4158 = vand.u32 %v4157, 4294901760
        %v4159 = vsub.f32 %v4157, %v4158
        %v4160 = vand.u32 %v4159, 4294901760
        %4161 = vmatprep.subr.mxu0 %v4160
        %v4162 = vand.u32 %v212, 4294901760
        %v4163 = vsub.f32 %v212, %v4162
        %v4164 = vand.u32 %v4163, 4294901760
        %v4165 = vsub.f32 %v4163, %v4164
        %v4166 = vand.u32 %v4165, 4294901760
        %4167 = vmatpush1.msra.mxu0 %v4166
        %v4168 = vand.u32 %v197, 4294901760
        %v4169 = vsub.f32 %v197, %v4168
        %v4170 = vand.u32 %v4169, 4294901760
        %v4171 = vsub.f32 %v4169, %v4170
        %v4172 = vand.u32 %v4171, 4294901760
        %4173 = vmatprep.subr.mxu0 %v4172
        %v4174 = vand.u32 %v196, 4294901760
        %v4175 = vsub.f32 %v196, %v4174
        %v4176 = vand.u32 %v4175, 4294901760
        %v4177 = vsub.f32 %v4175, %v4176
        %v4178 = vand.u32 %v4177, 4294901760
        %4179 = vmatpush1.msra.mxu0 %v4178
        %v4180 = vand.u32 %v181, 4294901760
        %v4181 = vsub.f32 %v181, %v4180
        %v4182 = vand.u32 %v4181, 4294901760
        %v4183 = vsub.f32 %v4181, %v4182
        %v4184 = vand.u32 %v4183, 4294901760
        %4185 = vmatprep.subr.mxu0 %v4184
        %v4186 = vand.u32 %v180, 4294901760
        %v4187 = vsub.f32 %v180, %v4186
        %v4188 = vand.u32 %v4187, 4294901760
        %v4189 = vsub.f32 %v4187, %v4188
        %v4190 = vand.u32 %v4189, 4294901760
        %4191 = vmatpush1.msra.mxu0 %v4190
        %4192 = vmatprep.subr.mxu0 0.0
        %4193 = vmatpush2.msra.mxu0 0.0
        %4194 = vmatprep.subr.mxu0 0.0
        %4195 = vmatpush2.msra.mxu0 0.0
        %4196 = vmatprep.subr.mxu0 0.0
        %4197 = vmatpush2.msra.mxu0 0.0
        %4198 = vmatprep.subr.mxu0 0.0
        %4199 = vmatpush2.msra.mxu0 0.0
        %4200 = vmatprep.subr.mxu0 0.0
        %4201 = vmatpush2.msra.mxu0 0.0
        %4202 = vmatprep.subr.mxu0 0.0
        %4203 = vmatpush2.msra.mxu0 0.0
        %4204 = vmatprep.subr.mxu0 0.0
        %4205 = vmatpush2.msra.mxu0 0.0
        %4206 = vmatprep.subr.mxu0 0.0
        %4207 = vmatpush2.msra.mxu0 0.0
        %4208 = vmatprep.subr.mxu0 0.0
        %4209 = vmatpush2.msra.mxu0 0.0
        %4210 = vmatprep.subr.mxu0 0.0
        %4211 = vmatpush2.msra.mxu0 0.0
        %4212 = vmatprep.subr.mxu0 0.0
        %4213 = vmatpush2.msra.mxu0 0.0
        %4214 = vmatprep.subr.mxu0 0.0
        %4215 = vmatpush2.msra.mxu0 0.0
        %4216 = vmatprep.subr.mxu0 0.0
        %4217 = vmatpush2.msra.mxu0 0.0
        %4218 = vmatprep.subr.mxu0 0.0
        %4219 = vmatpush2.msra.mxu0 0.0
        %4220 = vmatprep.subr.mxu0 0.0
        %4221 = vmatpush2.msra.mxu0 0.0
        %4222 = vmatprep.subr.mxu0 0.0
        %4223 = vmatpush2.msra.mxu0 0.0
        %4224 = vmatprep.mubr.f32.mxu0 0.0
        %v4225 = vand.u32 %v233, 4294901760
        %4226 = vmatmul.mubr.f32.gmra.mxu0 %v4225
        %v4227 = vpop.f32.mrf.mxu0
        %v4228 = vadd.f32 %v4116, %v4227
        %v4229 = vpop.f32.mrf.mxu0
        %v4230 = vadd.f32 %v4118, %v4229
        %4231 = vdwg.mxu0
        %4232 = vmatprep.subr.mxu0 0.0
        %4233 = vmatpush1.msra.mxu0 0.0
        %4234 = vmatprep.subr.mxu0 0.0
        %4235 = vmatpush1.msra.mxu0 0.0
        %4236 = vmatprep.subr.mxu0 0.0
        %4237 = vmatpush1.msra.mxu0 0.0
        %4238 = vmatprep.subr.mxu0 0.0
        %4239 = vmatpush1.msra.mxu0 0.0
        %4240 = vmatprep.subr.mxu0 0.0
        %4241 = vmatpush1.msra.mxu0 0.0
        %4242 = vmatprep.subr.mxu0 0.0
        %4243 = vmatpush1.msra.mxu0 0.0
        %4244 = vmatprep.subr.mxu0 0.0
        %4245 = vmatpush1.msra.mxu0 0.0
        %4246 = vmatprep.subr.mxu0 0.0
        %4247 = vmatpush1.msra.mxu0 0.0
        %4248 = vmatprep.subr.mxu0 0.0
        %4249 = vmatpush1.msra.mxu0 0.0
        %4250 = vmatprep.subr.mxu0 0.0
        %4251 = vmatpush1.msra.mxu0 0.0
        %4252 = vmatprep.subr.mxu0 0.0
        %4253 = vmatpush1.msra.mxu0 0.0
        %4254 = vmatprep.subr.mxu0 0.0
        %4255 = vmatpush1.msra.mxu0 0.0
        %v4256 = vand.u32 %v229, 4294901760
        %v4257 = vsub.f32 %v229, %v4256
        %4258 = vmatprep.subr.mxu0 %v4257
        %v4259 = vand.u32 %v228, 4294901760
        %v4260 = vsub.f32 %v228, %v4259
        %4261 = vmatpush1.msra.mxu0 %v4260
        %v4262 = vand.u32 %v213, 4294901760
        %v4263 = vsub.f32 %v213, %v4262
        %4264 = vmatprep.subr.mxu0 %v4263
        %v4265 = vand.u32 %v212, 4294901760
        %v4266 = vsub.f32 %v212, %v4265
        %4267 = vmatpush1.msra.mxu0 %v4266
        %v4268 = vand.u32 %v197, 4294901760
        %v4269 = vsub.f32 %v197, %v4268
        %4270 = vmatprep.subr.mxu0 %v4269
        %v4271 = vand.u32 %v196, 4294901760
        %v4272 = vsub.f32 %v196, %v4271
        %4273 = vmatpush1.msra.mxu0 %v4272
        %v4274 = vand.u32 %v181, 4294901760
        %v4275 = vsub.f32 %v181, %v4274
        %4276 = vmatprep.subr.mxu0 %v4275
        %v4277 = vand.u32 %v180, 4294901760
        %v4278 = vsub.f32 %v180, %v4277
        %4279 = vmatpush1.msra.mxu0 %v4278
        %4280 = vmatprep.subr.mxu0 0.0
        %4281 = vmatpush2.msra.mxu0 0.0
        %4282 = vmatprep.subr.mxu0 0.0
        %4283 = vmatpush2.msra.mxu0 0.0
        %4284 = vmatprep.subr.mxu0 0.0
        %4285 = vmatpush2.msra.mxu0 0.0
        %4286 = vmatprep.subr.mxu0 0.0
        %4287 = vmatpush2.msra.mxu0 0.0
        %4288 = vmatprep.subr.mxu0 0.0
        %4289 = vmatpush2.msra.mxu0 0.0
        %4290 = vmatprep.subr.mxu0 0.0
        %4291 = vmatpush2.msra.mxu0 0.0
        %4292 = vmatprep.subr.mxu0 0.0
        %4293 = vmatpush2.msra.mxu0 0.0
        %4294 = vmatprep.subr.mxu0 0.0
        %4295 = vmatpush2.msra.mxu0 0.0
        %4296 = vmatprep.subr.mxu0 0.0
        %4297 = vmatpush2.msra.mxu0 0.0
        %4298 = vmatprep.subr.mxu0 0.0
        %4299 = vmatpush2.msra.mxu0 0.0
        %4300 = vmatprep.subr.mxu0 0.0
        %4301 = vmatpush2.msra.mxu0 0.0
        %4302 = vmatprep.subr.mxu0 0.0
        %4303 = vmatpush2.msra.mxu0 0.0
        %4304 = vmatprep.subr.mxu0 0.0
        %4305 = vmatpush2.msra.mxu0 0.0
        %4306 = vmatprep.subr.mxu0 0.0
        %4307 = vmatpush2.msra.mxu0 0.0
        %4308 = vmatprep.subr.mxu0 0.0
        %4309 = vmatpush2.msra.mxu0 0.0
        %4310 = vmatprep.subr.mxu0 0.0
        %4311 = vmatpush2.msra.mxu0 0.0
        %4312 = vmatprep.mubr.f32.mxu0 0.0
        %v4313 = vand.u32 %v233, 4294901760
        %v4314 = vsub.f32 %v233, %v4313
        %4315 = vmatmul.mubr.f32.gmra.mxu0 %v4314
        %v4316 = vpop.f32.mrf.mxu0
        %v4317 = vadd.f32 %v4228, %v4316
        %v4318 = vpop.f32.mrf.mxu0
        %v4319 = vadd.f32 %v4230, %v4318
        %4320 = vdwg.mxu0
        %4321 = vmatprep.subr.mxu0 0.0
        %4322 = vmatpush1.msra.mxu0 0.0
        %4323 = vmatprep.subr.mxu0 0.0
        %4324 = vmatpush1.msra.mxu0 0.0
        %4325 = vmatprep.subr.mxu0 0.0
        %4326 = vmatpush1.msra.mxu0 0.0
        %4327 = vmatprep.subr.mxu0 0.0
        %4328 = vmatpush1.msra.mxu0 0.0
        %4329 = vmatprep.subr.mxu0 0.0
        %4330 = vmatpush1.msra.mxu0 0.0
        %4331 = vmatprep.subr.mxu0 0.0
        %4332 = vmatpush1.msra.mxu0 0.0
        %4333 = vmatprep.subr.mxu0 0.0
        %4334 = vmatpush1.msra.mxu0 0.0
        %4335 = vmatprep.subr.mxu0 0.0
        %4336 = vmatpush1.msra.mxu0 0.0
        %4337 = vmatprep.subr.mxu0 0.0
        %4338 = vmatpush1.msra.mxu0 0.0
        %4339 = vmatprep.subr.mxu0 0.0
        %4340 = vmatpush1.msra.mxu0 0.0
        %4341 = vmatprep.subr.mxu0 0.0
        %4342 = vmatpush1.msra.mxu0 0.0
        %4343 = vmatprep.subr.mxu0 0.0
        %4344 = vmatpush1.msra.mxu0 0.0
        %v4345 = vand.u32 %v229, 4294901760
        %4346 = vmatprep.subr.mxu0 %v4345
        %v4347 = vand.u32 %v228, 4294901760
        %4348 = vmatpush1.msra.mxu0 %v4347
        %v4349 = vand.u32 %v213, 4294901760
        %4350 = vmatprep.subr.mxu0 %v4349
        %v4351 = vand.u32 %v212, 4294901760
        %4352 = vmatpush1.msra.mxu0 %v4351
        %v4353 = vand.u32 %v197, 4294901760
        %4354 = vmatprep.subr.mxu0 %v4353
        %v4355 = vand.u32 %v196, 4294901760
        %4356 = vmatpush1.msra.mxu0 %v4355
        %v4357 = vand.u32 %v181, 4294901760
        %4358 = vmatprep.subr.mxu0 %v4357
        %v4359 = vand.u32 %v180, 4294901760
        %4360 = vmatpush1.msra.mxu0 %v4359
        %4361 = vmatprep.subr.mxu0 0.0
        %4362 = vmatpush2.msra.mxu0 0.0
        %4363 = vmatprep.subr.mxu0 0.0
        %4364 = vmatpush2.msra.mxu0 0.0
        %4365 = vmatprep.subr.mxu0 0.0
        %4366 = vmatpush2.msra.mxu0 0.0
        %4367 = vmatprep.subr.mxu0 0.0
        %4368 = vmatpush2.msra.mxu0 0.0
        %4369 = vmatprep.subr.mxu0 0.0
        %4370 = vmatpush2.msra.mxu0 0.0
        %4371 = vmatprep.subr.mxu0 0.0
        %4372 = vmatpush2.msra.mxu0 0.0
        %4373 = vmatprep.subr.mxu0 0.0
        %4374 = vmatpush2.msra.mxu0 0.0
        %4375 = vmatprep.subr.mxu0 0.0
        %4376 = vmatpush2.msra.mxu0 0.0
        %4377 = vmatprep.subr.mxu0 0.0
        %4378 = vmatpush2.msra.mxu0 0.0
        %4379 = vmatprep.subr.mxu0 0.0
        %4380 = vmatpush2.msra.mxu0 0.0
        %4381 = vmatprep.subr.mxu0 0.0
        %4382 = vmatpush2.msra.mxu0 0.0
        %4383 = vmatprep.subr.mxu0 0.0
        %4384 = vmatpush2.msra.mxu0 0.0
        %4385 = vmatprep.subr.mxu0 0.0
        %4386 = vmatpush2.msra.mxu0 0.0
        %4387 = vmatprep.subr.mxu0 0.0
        %4388 = vmatpush2.msra.mxu0 0.0
        %4389 = vmatprep.subr.mxu0 0.0
        %4390 = vmatpush2.msra.mxu0 0.0
        %4391 = vmatprep.subr.mxu0 0.0
        %4392 = vmatpush2.msra.mxu0 0.0
        %4393 = vmatprep.mubr.f32.mxu0 0.0
        %v4394 = vand.u32 %v233, 4294901760
        %v4395 = vsub.f32 %v233, %v4394
        %v4396 = vand.u32 %v4395, 4294901760
        %4397 = vmatmul.mubr.f32.gmra.mxu0 %v4396
        %v4398 = vpop.f32.mrf.mxu0
        %v4399 = vadd.f32 %v4317, %v4398
        %v4400 = vpop.f32.mrf.mxu0
        %v4401 = vadd.f32 %v4319, %v4400
        %4402 = vdwg.mxu0
        %4403 = vmatprep.subr.mxu0 0.0
        %4404 = vmatpush1.msra.mxu0 0.0
        %4405 = vmatprep.subr.mxu0 0.0
        %4406 = vmatpush1.msra.mxu0 0.0
        %4407 = vmatprep.subr.mxu0 0.0
        %4408 = vmatpush1.msra.mxu0 0.0
        %4409 = vmatprep.subr.mxu0 0.0
        %4410 = vmatpush1.msra.mxu0 0.0
        %4411 = vmatprep.subr.mxu0 0.0
        %4412 = vmatpush1.msra.mxu0 0.0
        %4413 = vmatprep.subr.mxu0 0.0
        %4414 = vmatpush1.msra.mxu0 0.0
        %4415 = vmatprep.subr.mxu0 0.0
        %4416 = vmatpush1.msra.mxu0 0.0
        %4417 = vmatprep.subr.mxu0 0.0
        %4418 = vmatpush1.msra.mxu0 0.0
        %4419 = vmatprep.subr.mxu0 0.0
        %4420 = vmatpush1.msra.mxu0 0.0
        %4421 = vmatprep.subr.mxu0 0.0
        %4422 = vmatpush1.msra.mxu0 0.0
        %4423 = vmatprep.subr.mxu0 0.0
        %4424 = vmatpush1.msra.mxu0 0.0
        %4425 = vmatprep.subr.mxu0 0.0
        %4426 = vmatpush1.msra.mxu0 0.0
        %v4427 = vand.u32 %v229, 4294901760
        %v4428 = vsub.f32 %v229, %v4427
        %v4429 = vand.u32 %v4428, 4294901760
        %4430 = vmatprep.subr.mxu0 %v4429
        %v4431 = vand.u32 %v228, 4294901760
        %v4432 = vsub.f32 %v228, %v4431
        %v4433 = vand.u32 %v4432, 4294901760
        %4434 = vmatpush1.msra.mxu0 %v4433
        %v4435 = vand.u32 %v213, 4294901760
        %v4436 = vsub.f32 %v213, %v4435
        %v4437 = vand.u32 %v4436, 4294901760
        %4438 = vmatprep.subr.mxu0 %v4437
        %v4439 = vand.u32 %v212, 4294901760
        %v4440 = vsub.f32 %v212, %v4439
        %v4441 = vand.u32 %v4440, 4294901760
        %4442 = vmatpush1.msra.mxu0 %v4441
        %v4443 = vand.u32 %v197, 4294901760
        %v4444 = vsub.f32 %v197, %v4443
        %v4445 = vand.u32 %v4444, 4294901760
        %4446 = vmatprep.subr.mxu0 %v4445
        %v4447 = vand.u32 %v196, 4294901760
        %v4448 = vsub.f32 %v196, %v4447
        %v4449 = vand.u32 %v4448, 4294901760
        %4450 = vmatpush1.msra.mxu0 %v4449
        %v4451 = vand.u32 %v181, 4294901760
        %v4452 = vsub.f32 %v181, %v4451
        %v4453 = vand.u32 %v4452, 4294901760
        %4454 = vmatprep.subr.mxu0 %v4453
        %v4455 = vand.u32 %v180, 4294901760
        %v4456 = vsub.f32 %v180, %v4455
        %v4457 = vand.u32 %v4456, 4294901760
        %4458 = vmatpush1.msra.mxu0 %v4457
        %4459 = vmatprep.subr.mxu0 0.0
        %4460 = vmatpush2.msra.mxu0 0.0
        %4461 = vmatprep.subr.mxu0 0.0
        %4462 = vmatpush2.msra.mxu0 0.0
        %4463 = vmatprep.subr.mxu0 0.0
        %4464 = vmatpush2.msra.mxu0 0.0
        %4465 = vmatprep.subr.mxu0 0.0
        %4466 = vmatpush2.msra.mxu0 0.0
        %4467 = vmatprep.subr.mxu0 0.0
        %4468 = vmatpush2.msra.mxu0 0.0
        %4469 = vmatprep.subr.mxu0 0.0
        %4470 = vmatpush2.msra.mxu0 0.0
        %4471 = vmatprep.subr.mxu0 0.0
        %4472 = vmatpush2.msra.mxu0 0.0
        %4473 = vmatprep.subr.mxu0 0.0
        %4474 = vmatpush2.msra.mxu0 0.0
        %4475 = vmatprep.subr.mxu0 0.0
        %4476 = vmatpush2.msra.mxu0 0.0
        %4477 = vmatprep.subr.mxu0 0.0
        %4478 = vmatpush2.msra.mxu0 0.0
        %4479 = vmatprep.subr.mxu0 0.0
        %4480 = vmatpush2.msra.mxu0 0.0
        %4481 = vmatprep.subr.mxu0 0.0
        %4482 = vmatpush2.msra.mxu0 0.0
        %4483 = vmatprep.subr.mxu0 0.0
        %4484 = vmatpush2.msra.mxu0 0.0
        %4485 = vmatprep.subr.mxu0 0.0
        %4486 = vmatpush2.msra.mxu0 0.0
        %4487 = vmatprep.subr.mxu0 0.0
        %4488 = vmatpush2.msra.mxu0 0.0
        %4489 = vmatprep.subr.mxu0 0.0
        %4490 = vmatpush2.msra.mxu0 0.0
        %4491 = vmatprep.mubr.f32.mxu0 0.0
        %v4492 = vand.u32 %v233, 4294901760
        %4493 = vmatmul.mubr.f32.gmra.mxu0 %v4492
        %v4494 = vpop.f32.mrf.mxu0
        %v4495 = vadd.f32 %v4399, %v4494
        %v4496 = vpop.f32.mrf.mxu0
        %v4497 = vadd.f32 %v4401, %v4496
        %4498 = vdwg.mxu0
        %4499 = vmatprep.subr.mxu0 0.0
        %4500 = vmatpush1.msra.mxu0 0.0
        %4501 = vmatprep.subr.mxu0 0.0
        %4502 = vmatpush1.msra.mxu0 0.0
        %4503 = vmatprep.subr.mxu0 0.0
        %4504 = vmatpush1.msra.mxu0 0.0
        %4505 = vmatprep.subr.mxu0 0.0
        %4506 = vmatpush1.msra.mxu0 0.0
        %4507 = vmatprep.subr.mxu0 0.0
        %4508 = vmatpush1.msra.mxu0 0.0
        %4509 = vmatprep.subr.mxu0 0.0
        %4510 = vmatpush1.msra.mxu0 0.0
        %4511 = vmatprep.subr.mxu0 0.0
        %4512 = vmatpush1.msra.mxu0 0.0
        %4513 = vmatprep.subr.mxu0 0.0
        %4514 = vmatpush1.msra.mxu0 0.0
        %4515 = vmatprep.subr.mxu0 0.0
        %4516 = vmatpush1.msra.mxu0 0.0
        %4517 = vmatprep.subr.mxu0 0.0
        %4518 = vmatpush1.msra.mxu0 0.0
        %4519 = vmatprep.subr.mxu0 0.0
        %4520 = vmatpush1.msra.mxu0 0.0
        %4521 = vmatprep.subr.mxu0 0.0
        %4522 = vmatpush1.msra.mxu0 0.0
        %v4523 = vand.u32 %v229, 4294901760
        %4524 = vmatprep.subr.mxu0 %v4523
        %v4525 = vand.u32 %v228, 4294901760
        %4526 = vmatpush1.msra.mxu0 %v4525
        %v4527 = vand.u32 %v213, 4294901760
        %4528 = vmatprep.subr.mxu0 %v4527
        %v4529 = vand.u32 %v212, 4294901760
        %4530 = vmatpush1.msra.mxu0 %v4529
        %v4531 = vand.u32 %v197, 4294901760
        %4532 = vmatprep.subr.mxu0 %v4531
        %v4533 = vand.u32 %v196, 4294901760
        %4534 = vmatpush1.msra.mxu0 %v4533
        %v4535 = vand.u32 %v181, 4294901760
        %4536 = vmatprep.subr.mxu0 %v4535
        %v4537 = vand.u32 %v180, 4294901760
        %4538 = vmatpush1.msra.mxu0 %v4537
        %4539 = vmatprep.subr.mxu0 0.0
        %4540 = vmatpush2.msra.mxu0 0.0
        %4541 = vmatprep.subr.mxu0 0.0
        %4542 = vmatpush2.msra.mxu0 0.0
        %4543 = vmatprep.subr.mxu0 0.0
        %4544 = vmatpush2.msra.mxu0 0.0
        %4545 = vmatprep.subr.mxu0 0.0
        %4546 = vmatpush2.msra.mxu0 0.0
        %4547 = vmatprep.subr.mxu0 0.0
        %4548 = vmatpush2.msra.mxu0 0.0
        %4549 = vmatprep.subr.mxu0 0.0
        %4550 = vmatpush2.msra.mxu0 0.0
        %4551 = vmatprep.subr.mxu0 0.0
        %4552 = vmatpush2.msra.mxu0 0.0
        %4553 = vmatprep.subr.mxu0 0.0
        %4554 = vmatpush2.msra.mxu0 0.0
        %4555 = vmatprep.subr.mxu0 0.0
        %4556 = vmatpush2.msra.mxu0 0.0
        %4557 = vmatprep.subr.mxu0 0.0
        %4558 = vmatpush2.msra.mxu0 0.0
        %4559 = vmatprep.subr.mxu0 0.0
        %4560 = vmatpush2.msra.mxu0 0.0
        %4561 = vmatprep.subr.mxu0 0.0
        %4562 = vmatpush2.msra.mxu0 0.0
        %4563 = vmatprep.subr.mxu0 0.0
        %4564 = vmatpush2.msra.mxu0 0.0
        %4565 = vmatprep.subr.mxu0 0.0
        %4566 = vmatpush2.msra.mxu0 0.0
        %4567 = vmatprep.subr.mxu0 0.0
        %4568 = vmatpush2.msra.mxu0 0.0
        %4569 = vmatprep.subr.mxu0 0.0
        %4570 = vmatpush2.msra.mxu0 0.0
        %4571 = vmatprep.mubr.f32.mxu0 0.0
        %v4572 = vand.u32 %v233, 4294901760
        %4573 = vmatmul.mubr.f32.gmra.mxu0 %v4572
        %v4574 = vpop.f32.mrf.mxu0
        %v4575 = vadd.f32 %v4495, %v4574
        %v4576 = vpop.f32.mrf.mxu0
        %v4577 = vadd.f32 %v4497, %v4576
        %4578 = vdwg.mxu0
        %4579 = vst [vmem:[%s164] sm:$0xff] %v774
        %4580 = vst [vmem:[%s164 + $0x8] sm:$0xff] %v776
        %4581 = vst [vmem:[%s164 + $0x10] sm:$0xff] %v1317
        %4582 = vst [vmem:[%s164 + $0x18] sm:$0xff] %v1319
        %4583 = vst [vmem:[%s164 + $0x20] sm:$0xff] %v1860
        %4584 = vst [vmem:[%s164 + $0x28] sm:$0xff] %v1862
        %4585 = vst [vmem:[%s164 + $0x30] sm:$0xff] %v2403
        %4586 = vst [vmem:[%s164 + $0x38] sm:$0xff] %v2405
        %4587 = vst [vmem:[%s164 + $0x40] sm:$0xff] %v2946
        %4588 = vst [vmem:[%s164 + $0x48] sm:$0xff] %v2948
        %4589 = vst [vmem:[%s164 + $0x50] sm:$0xff] %v3489
        %4590 = vst [vmem:[%s164 + $0x58] sm:$0xff] %v3491
        %4591 = vst [vmem:[%s164 + $0x60] sm:$0xff] %v4032
        %4592 = vst [vmem:[%s164 + $0x68] sm:$0xff] %v4034
        %4593 = vst [vmem:[%s164 + $0x70] sm:$0xff] %v4575
        %4594 = vst [vmem:[%s164 + $0x78] sm:$0xff] %v4577
        %s4595 = smul.u32 16, %s16
        %p4596 = scmp.lt.s32.totalorder %s4595, 31
        %s4597 = scalar_select %p4596, %s4595, 31
        %s4598 = smul.addr %s4597, 8
        %s4599 = scalar_lea.vmem %s2, %s4598
        // Predicated region
        $region33: #{tps_grid_gen_forward.1} parent=27 // pred_check
          %p4600 = pneg %p81
        $region34: #{tps_grid_gen_forward.1} parent=27 // pred_check_branch
          %4602 = sbr.rel (%p4600) target = $region36
        $region35: #{tps_grid_gen_forward.1} parent=27 // pred_region
          %s4603 = smul.u32 16, %s16
        $region36: #{tps_grid_gen_forward.1} parent=27 // pred_fallthru
          _
      $region28: #{tps_grid_gen_forward.1} parent=5 // pred_fallthru
        _
      %p4604 = scmp.le.s32.totalorder 2, %s11
      // Predicated region
      $region37: #{tps_grid_gen_forward.1} parent=5 // pred_check
        %p4605 = pneg %p4604
      $region38: #{tps_grid_gen_forward.1} parent=5 // pred_check_branch
        %4607 = sbr.rel (%p4605) target = $region40
      $region39: #{tps_grid_gen_forward.1} parent=5 // pred_region
        %s4608 = ssub.s32 %s11, 2
        // Predicated region
        $region41: #{tps_grid_gen_forward.1} parent=39 // pred_check
          %p4609 = pneg %p87
        $region42: #{tps_grid_gen_forward.1} parent=39 // pred_check_branch
          %4611 = sbr.rel (%p4609) target = $region44
        $region43: #{tps_grid_gen_forward.1} parent=39 // pred_region
          %s4612 = smul.u32 16, %s17
          %p4613 = scmp.lt.s32.totalorder %s4612, 31
          %s4614 = scalar_select %p4613, %s4612, 31
          %s4615 = smul.addr %s4614, 8
          %s4616 = scalar_lea.vmem %s2, %s4615
        $region44: #{tps_grid_gen_forward.1} parent=39 // pred_fallthru
          _
      $region40: #{tps_grid_gen_forward.1} parent=5 // pred_fallthru
        _
    $region6: #{tps_grid_gen_forward.1} parent=1 // loop_footer
      %s15 = sadd.s32 1, %s11
    $region7: #{tps_grid_gen_forward.1} parent=1 // loop_footer_branch
      %10 = sbr.rel target = $region3
    $region8: #{tps_grid_gen_forward.1} parent=1 // loop_exit
      _
    %4617 = vsyncpa [#allocation3], 1
    %s4618 = scalar_lea.sflag [#allocation3], 1
    %4619 = vsyncpa %s4618, 1

</llo_original>
